<compile_context>
chip_gen: v7x
topology: tpu7x:2x2x1
jax: 0.10.0
libtpu: 0.0.40
codegen_flags: <defaults>
</compile_context>

<pallas_src>
import jax
import jax.numpy as jnp
import numpy as np
from jax.experimental import pallas as pl
from jax.experimental.pallas import tpu as pltpu

LANE = 128


def _round_up(n, m):
    return ((n + m - 1) // m) * m


def gru_adaptation_kernel(
    x_ref,        # (bm*T, D)   row = b*T + t (natural row-major layout)
    wi_ref,       # (D, 3*Gp)   fused [W_ir | W_iz | W_in]^T, lane-padded
    bi_ref,       # (1, 3*Gp)   fused [b_ir+b_hr | b_iz+b_hz | b_in]
    whh_ref,      # (Gp, 3*Gp)  fused [W_hr | W_hz | W_hn]^T, padded
    bhn_ref,      # (1, Gp)     b_hn (must stay inside the r-gated term)
    wp_ref,       # (Gp, Hp)    post_gru weight^T, padded
    bp_ref,       # (1, Hp)
    out_ref,      # (bm, Hp)
    xp_ref,       # VMEM scratch (bm, T, 3*Gp)
):
    bm = out_ref.shape[0]
    t_len = xp_ref.shape[1]
    gp = whh_ref.shape[0]

    # ---- hoisted input projection: one big MXU matmul covers every timestep ----
    xp = jnp.dot(x_ref[...], wi_ref[...], preferred_element_type=jnp.float32) + bi_ref[...]
    xp_ref[...] = xp.reshape(bm, t_len, 3 * gp)          # row b*T+t -> [b, t, :]

    whh = whh_ref[...]                                   # load fused W_hh once
    bhn = jnp.broadcast_to(bhn_ref[...], (bm, gp))       # broadcast once, outside the loop

    # ---- serial recurrence: h carried in vregs, fully unrolled static loop ----
    h = jnp.zeros((bm, gp), jnp.float32)
    for t in range(t_len):
        gx = xp_ref[:, t, :]                                              # (bm, 3Gp) static slice
        gh = jnp.dot(h, whh, preferred_element_type=jnp.float32)          # one fused MXU push/step
        rz = jax.nn.sigmoid(gx[:, : 2 * gp] + gh[:, : 2 * gp])            # r and z in one EUP slab
        r = rz[:, :gp]
        z = rz[:, gp:]
        n = jnp.tanh(gx[:, 2 * gp:] + r * (gh[:, 2 * gp:] + bhn))
        h = (1.0 - z) * n + z * h

    # ---- post_gru Linear + act_fn (ReLU) on the last hidden state ----
    y = jnp.dot(h, wp_ref[...], preferred_element_type=jnp.float32) + bp_ref[...]
    out_ref[...] = jnp.maximum(y, 0.0).astype(out_ref.dtype)


def prepare_params(params):
    """Fuse gates, fold biases and zero-pad to lane-dense shapes (exact)."""
    G = params["wir"].shape[1]          # 2 * hidden_size
    H = params["wp"].shape[1]
    Gp = _round_up(G, LANE)
    Hp = _round_up(H, LANE)

    def pad_cols(a, n):
        return jnp.pad(a, ((0, 0), (0, n - a.shape[1])))

    def pad_rows(a, n):
        return jnp.pad(a, ((0, n - a.shape[0]), (0, 0)))

    wi = jnp.concatenate(
        [pad_cols(params["wir"], Gp), pad_cols(params["wiz"], Gp), pad_cols(params["win"], Gp)],
        axis=1)                                                     # (D, 3Gp)
    # b_ir+b_hr and b_iz+b_hz may be pre-summed; b_in folded too; b_hn stays separate.
    bi = jnp.concatenate(
        [pad_cols(params["bir"] + params["bhr"], Gp),
         pad_cols(params["biz"] + params["bhz"], Gp),
         pad_cols(params["bin"], Gp)],
        axis=1)                                                     # (1, 3Gp)
    whh = pad_rows(
        jnp.concatenate(
            [pad_cols(params["whr"], Gp), pad_cols(params["whz"], Gp), pad_cols(params["whn"], Gp)],
            axis=1),
        Gp)                                                         # (Gp, 3Gp)
    bhn = pad_cols(params["bhn"], Gp)                               # (1, Gp)
    wp = pad_rows(pad_cols(params["wp"], Hp), Gp)                   # (Gp, Hp)
    bp = pad_cols(params["bp"], Hp)                                 # (1, Hp)
    return {"wi": wi, "bi": bi, "whh": whh, "bhn": bhn, "wp": wp, "bp": bp,
            "Gp": Gp, "Hp": Hp, "H": H}


def gru_adaptation_forward(x, params, seq_len, dim):
    """x: any shape reshapeable to (-1, seq_len, dim). Returns (B, hidden_size)."""
    f = prepare_params(params)
    Gp, Hp, H = f["Gp"], f["Hp"], f["H"]

    x1 = x.reshape(-1, seq_len, dim)            # == torch .view(-1, seq_len, dim)
    B = x1.shape[0]
    x2d = x1.reshape(B * seq_len, dim)          # flat row-major; no HBM transpose needed

    # Batch-parallel grid: one "parallel" axis so v7x's 2 TensorCores split the batch.
    bm = min(256, 8 * pl.cdiv(B, 8))            # sublane-aligned batch block
    grid = (pl.cdiv(B, bm),)

    kernel = pl.pallas_call(
        gru_adaptation_kernel,
        out_shape=jax.ShapeDtypeStruct((B, Hp), jnp.float32),
        grid=grid,
        in_specs=[
            pl.BlockSpec((bm * seq_len, dim), lambda i: (i, 0)),
            pl.BlockSpec(f["wi"].shape, lambda i: (0, 0)),
            pl.BlockSpec(f["bi"].shape, lambda i: (0, 0)),
            pl.BlockSpec(f["whh"].shape, lambda i: (0, 0)),
            pl.BlockSpec(f["bhn"].shape, lambda i: (0, 0)),
            pl.BlockSpec(f["wp"].shape, lambda i: (0, 0)),
            pl.BlockSpec(f["bp"].shape, lambda i: (0, 0)),
        ],
        out_specs=pl.BlockSpec((bm, Hp), lambda i: (i, 0)),
        scratch_shapes=[pltpu.VMEM((bm, seq_len, 3 * Gp), jnp.float32)],
        compiler_params=pltpu.CompilerParams(dimension_semantics=("parallel",)),
    )
    out_padded = kernel(x2d, f["wi"], f["bi"], f["whh"], f["bhn"], f["wp"], f["bp"])
    return out_padded[:, :H]                    # drop output lane padding


def reference_forward(x, params, seq_len, dim):
    """Pure-JAX reference implementing the same math (for validation)."""
    x1 = x.reshape(-1, seq_len, dim)
    B = x1.shape[0]
    G = params["wir"].shape[1]
    h = jnp.zeros((B, G), jnp.float32)
    for t in range(seq_len):
        xt = x1[:, t, :]
        r = jax.nn.sigmoid(xt @ params["wir"] + params["bir"]
                           + h @ params["whr"] + params["bhr"])
        z = jax.nn.sigmoid(xt @ params["wiz"] + params["biz"]
                           + h @ params["whz"] + params["bhz"])
        n = jnp.tanh(xt @ params["win"] + params["bin"]
                     + r * (h @ params["whn"] + params["bhn"]))
        h = (1.0 - z) * n + z * h
    return jnp.maximum(h @ params["wp"] + params["bp"], 0.0)


def init_params(key, dim, hidden_size):
    """Deterministic synthetic parameters matching nn.GRU / nn.Linear shapes."""
    G = hidden_size * 2
    H = hidden_size
    k_gru = 1.0 / np.sqrt(G)
    k_lin = 1.0 / np.sqrt(G)
    keys = jax.random.split(key, 14)

    def u(k, shape, scale):
        return jax.random.uniform(k, shape, jnp.float32, -scale, scale)

    return {
        # input->hidden weights, stored transposed as (D, G)
        "wir": u(keys[0], (dim, G), k_gru),
        "wiz": u(keys[1], (dim, G), k_gru),
        "win": u(keys[2], (dim, G), k_gru),
        # hidden->hidden weights, stored transposed as (G, G)
        "whr": u(keys[3], (G, G), k_gru),
        "whz": u(keys[4], (G, G), k_gru),
        "whn": u(keys[5], (G, G), k_gru),
        # biases
        "bir": u(keys[6], (1, G), k_gru),
        "biz": u(keys[7], (1, G), k_gru),
        "bin": u(keys[8], (1, G), k_gru),
        "bhr": u(keys[9], (1, G), k_gru),
        "bhz": u(keys[10], (1, G), k_gru),
        "bhn": u(keys[11], (1, G), k_gru),
        # post_gru Linear(G, H), stored transposed as (G, H)
        "wp": u(keys[12], (G, H), k_lin),
        "bp": u(keys[13], (1, H), k_lin),
    }


if __name__ == "__main__":
    B, seq_len, dim, hidden_size = 2, 8, 16, 32

    key = jax.random.PRNGKey(0)
    k_x, k_p = jax.random.split(key)
    params = init_params(k_p, dim, hidden_size)

    # Input given flattened, exercising the .view(-1, seq_len, dim) path.
    x = jax.random.normal(k_x, (B, seq_len * dim), jnp.float32)

    out = gru_adaptation_forward(x, params, seq_len, dim)
    out = jax.block_until_ready(out)

    ref = reference_forward(x, params, seq_len, dim)
    np.testing.assert_allclose(np.asarray(out), np.asarray(ref), rtol=1e-4, atol=1e-5)

    print("KERNEL_OK")
</pallas_src>

<mosaic_0001>
module attributes {stable_mosaic.version = 11 : i64} {
  func.func @gru_adaptation_kernel(%arg0: i32, %arg1: memref<64x16xf32, #tpu.memory_space<vmem>>, %arg2: memref<16x384xf32, #tpu.memory_space<vmem>>, %arg3: memref<1x384xf32, #tpu.memory_space<vmem>>, %arg4: memref<128x384xf32, #tpu.memory_space<vmem>>, %arg5: memref<1x128xf32, #tpu.memory_space<vmem>>, %arg6: memref<128x128xf32, #tpu.memory_space<vmem>>, %arg7: memref<1x128xf32, #tpu.memory_space<vmem>>, %arg8: memref<8x128xf32, #tpu.memory_space<vmem>>, %arg9: memref<8x8x384xf32, #tpu.memory_space<vmem>>) attributes {dimension_semantics = [#tpu.dimension_semantics<parallel>], iteration_bounds = array<i64: 1>, scalar_prefetch = 0 : i64, scratch_operands = 1 : i64, tpu.core_type = #tpu.core_type<tc>, window_params = [{transform_indices = @transform_0, window_bounds = array<i64: 64, 16>}, {pipeline_mode = #tpu.pipeline_mode<synchronous>, transform_indices = @transform_1, window_bounds = array<i64: 16, 384>}, {pipeline_mode = #tpu.pipeline_mode<synchronous>, transform_indices = @transform_2, window_bounds = array<i64: 1, 384>}, {pipeline_mode = #tpu.pipeline_mode<synchronous>, transform_indices = @transform_3, window_bounds = array<i64: 128, 384>}, {pipeline_mode = #tpu.pipeline_mode<synchronous>, transform_indices = @transform_4, window_bounds = array<i64: 1, 128>}, {pipeline_mode = #tpu.pipeline_mode<synchronous>, transform_indices = @transform_5, window_bounds = array<i64: 128, 128>}, {pipeline_mode = #tpu.pipeline_mode<synchronous>, transform_indices = @transform_6, window_bounds = array<i64: 1, 128>}, {transform_indices = @transform_7, window_bounds = array<i64: 8, 128>}]} {
    %c0 = arith.constant 0 : index
    %c0_0 = arith.constant 0 : index
    %0 = vector.load %arg1[%c0, %c0_0] : memref<64x16xf32, #tpu.memory_space<vmem>>, vector<64x16xf32>
    %c0_1 = arith.constant 0 : index
    %c0_2 = arith.constant 0 : index
    %1 = vector.load %arg2[%c0_1, %c0_2] : memref<16x384xf32, #tpu.memory_space<vmem>>, vector<16x384xf32>
    %cst = arith.constant dense<0.000000e+00> : vector<64x384xf32>
    %2 = tpu.matmul %0, %1, %cst {dimension_numbers = #tpu.dot_dimension_numbers<[1], [0], [0], [1], [0, 0, 1, 1], [], []>} : vector<64x16xf32>, vector<16x384xf32>, vector<64x384xf32> -> vector<64x384xf32>
    %c0_3 = arith.constant 0 : index
    %c0_4 = arith.constant 0 : index
    %3 = vector.load %arg3[%c0_3, %c0_4] : memref<1x384xf32, #tpu.memory_space<vmem>>, vector<1x384xf32>
    %4 = vector.broadcast %3 : vector<1x384xf32> to vector<64x384xf32>
    %5 = arith.addf %2, %4 : vector<64x384xf32>
    %6 = vector.shape_cast %5 : vector<64x384xf32> to vector<8x8x384xf32>
    %c0_5 = arith.constant 0 : index
    %c0_6 = arith.constant 0 : index
    %c0_7 = arith.constant 0 : index
    %7 = vector.load %arg9[%c0_5, %c0_6, %c0_7] : memref<8x8x384xf32, #tpu.memory_space<vmem>>, vector<8x8x384xf32>
    tpu.vector_store %arg9[%c0_5, %c0_6, %c0_7], %6 {strides = array<i32>} : memref<8x8x384xf32, #tpu.memory_space<vmem>>, vector<8x8x384xf32>,
    %c0_8 = arith.constant 0 : index
    %c0_9 = arith.constant 0 : index
    %8 = vector.load %arg4[%c0_8, %c0_9] : memref<128x384xf32, #tpu.memory_space<vmem>>, vector<128x384xf32>
    %c0_10 = arith.constant 0 : index
    %c0_11 = arith.constant 0 : index
    %9 = vector.load %arg5[%c0_10, %c0_11] : memref<1x128xf32, #tpu.memory_space<vmem>>, vector<1x128xf32>
    %10 = vector.shape_cast %9 : vector<1x128xf32> to vector<1x128xf32>
    %11 = vector.broadcast %10 : vector<1x128xf32> to vector<8x128xf32>
    %cst_12 = arith.constant 0.000000e+00 : f32
    %12 = vector.broadcast %cst_12 : f32 to vector<8x128xf32>
    %c0_13 = arith.constant 0 : index
    %c0_14 = arith.constant 0 : index
    %c0_15 = arith.constant 0 : index
    %13 = vector.load %arg9[%c0_13, %c0_14, %c0_15] : memref<8x8x384xf32, #tpu.memory_space<vmem>>, vector<8x1x384xf32>
    %14 = vector.shape_cast %13 : vector<8x1x384xf32> to vector<8x384xf32>
    %cst_16 = arith.constant dense<0.000000e+00> : vector<8x384xf32>
    %15 = tpu.matmul %12, %8, %cst_16 {dimension_numbers = #tpu.dot_dimension_numbers<[1], [0], [0], [1], [0, 0, 1, 1], [], []>} : vector<8x128xf32>, vector<128x384xf32>, vector<8x384xf32> -> vector<8x384xf32>
    %16 = vector.extract_strided_slice %14 {offsets = [0, 0], sizes = [8, 256], strides = [1, 1]} : vector<8x384xf32> to vector<8x256xf32>
    %17 = vector.extract_strided_slice %15 {offsets = [0, 0], sizes = [8, 256], strides = [1, 1]} : vector<8x384xf32> to vector<8x256xf32>
    %18 = arith.addf %16, %17 : vector<8x256xf32>
    %19 = arith.negf %18 : vector<8x256xf32>
    %20 = math.exp %19 : vector<8x256xf32>
    %cst_17 = arith.constant 1.000000e+00 : f32
    %21 = vector.broadcast %cst_17 : f32 to vector<8x256xf32>
    %22 = arith.addf %21, %20 : vector<8x256xf32>
    %23 = arith.divf %21, %22 : vector<8x256xf32>
    %24 = vector.extract_strided_slice %23 {offsets = [0, 0], sizes = [8, 128], strides = [1, 1]} : vector<8x256xf32> to vector<8x128xf32>
    %25 = vector.extract_strided_slice %23 {offsets = [0, 128], sizes = [8, 128], strides = [1, 1]} : vector<8x256xf32> to vector<8x128xf32>
    %26 = vector.extract_strided_slice %14 {offsets = [0, 256], sizes = [8, 128], strides = [1, 1]} : vector<8x384xf32> to vector<8x128xf32>
    %27 = vector.extract_strided_slice %15 {offsets = [0, 256], sizes = [8, 128], strides = [1, 1]} : vector<8x384xf32> to vector<8x128xf32>
    %28 = arith.addf %27, %11 : vector<8x128xf32>
    %29 = arith.mulf %24, %28 : vector<8x128xf32>
    %30 = arith.addf %26, %29 : vector<8x128xf32>
    %31 = math.tanh %30 : vector<8x128xf32>
    %cst_18 = arith.constant 1.000000e+00 : f32
    %32 = vector.broadcast %cst_18 : f32 to vector<8x128xf32>
    %33 = arith.subf %32, %25 : vector<8x128xf32>
    %34 = arith.mulf %33, %31 : vector<8x128xf32>
    %35 = arith.mulf %25, %12 : vector<8x128xf32>
    %36 = arith.addf %34, %35 : vector<8x128xf32>
    %c0_19 = arith.constant 0 : index
    %c1 = arith.constant 1 : index
    %c0_20 = arith.constant 0 : index
    %37 = vector.load %arg9[%c0_19, %c1, %c0_20] : memref<8x8x384xf32, #tpu.memory_space<vmem>>, vector<8x1x384xf32>
    %38 = vector.shape_cast %37 : vector<8x1x384xf32> to vector<8x384xf32>
    %cst_21 = arith.constant dense<0.000000e+00> : vector<8x384xf32>
    %39 = tpu.matmul %36, %8, %cst_21 {dimension_numbers = #tpu.dot_dimension_numbers<[1], [0], [0], [1], [0, 0, 1, 1], [], []>} : vector<8x128xf32>, vector<128x384xf32>, vector<8x384xf32> -> vector<8x384xf32>
    %40 = vector.extract_strided_slice %38 {offsets = [0, 0], sizes = [8, 256], strides = [1, 1]} : vector<8x384xf32> to vector<8x256xf32>
    %41 = vector.extract_strided_slice %39 {offsets = [0, 0], sizes = [8, 256], strides = [1, 1]} : vector<8x384xf32> to vector<8x256xf32>
    %42 = arith.addf %40, %41 : vector<8x256xf32>
    %43 = arith.negf %42 : vector<8x256xf32>
    %44 = math.exp %43 : vector<8x256xf32>
    %cst_22 = arith.constant 1.000000e+00 : f32
    %45 = vector.broadcast %cst_22 : f32 to vector<8x256xf32>
    %46 = arith.addf %45, %44 : vector<8x256xf32>
    %47 = arith.divf %45, %46 : vector<8x256xf32>
    %48 = vector.extract_strided_slice %47 {offsets = [0, 0], sizes = [8, 128], strides = [1, 1]} : vector<8x256xf32> to vector<8x128xf32>
    %49 = vector.extract_strided_slice %47 {offsets = [0, 128], sizes = [8, 128], strides = [1, 1]} : vector<8x256xf32> to vector<8x128xf32>
    %50 = vector.extract_strided_slice %38 {offsets = [0, 256], sizes = [8, 128], strides = [1, 1]} : vector<8x384xf32> to vector<8x128xf32>
    %51 = vector.extract_strided_slice %39 {offsets = [0, 256], sizes = [8, 128], strides = [1, 1]} : vector<8x384xf32> to vector<8x128xf32>
    %52 = arith.addf %51, %11 : vector<8x128xf32>
    %53 = arith.mulf %48, %52 : vector<8x128xf32>
    %54 = arith.addf %50, %53 : vector<8x128xf32>
    %55 = math.tanh %54 : vector<8x128xf32>
    %cst_23 = arith.constant 1.000000e+00 : f32
    %56 = vector.broadcast %cst_23 : f32 to vector<8x128xf32>
    %57 = arith.subf %56, %49 : vector<8x128xf32>
    %58 = arith.mulf %57, %55 : vector<8x128xf32>
    %59 = arith.mulf %49, %36 : vector<8x128xf32>
    %60 = arith.addf %58, %59 : vector<8x128xf32>
    %c0_24 = arith.constant 0 : index
    %c2 = arith.constant 2 : index
    %c0_25 = arith.constant 0 : index
    %61 = vector.load %arg9[%c0_24, %c2, %c0_25] : memref<8x8x384xf32, #tpu.memory_space<vmem>>, vector<8x1x384xf32>
    %62 = vector.shape_cast %61 : vector<8x1x384xf32> to vector<8x384xf32>
    %cst_26 = arith.constant dense<0.000000e+00> : vector<8x384xf32>
    %63 = tpu.matmul %60, %8, %cst_26 {dimension_numbers = #tpu.dot_dimension_numbers<[1], [0], [0], [1], [0, 0, 1, 1], [], []>} : vector<8x128xf32>, vector<128x384xf32>, vector<8x384xf32> -> vector<8x384xf32>
    %64 = vector.extract_strided_slice %62 {offsets = [0, 0], sizes = [8, 256], strides = [1, 1]} : vector<8x384xf32> to vector<8x256xf32>
    %65 = vector.extract_strided_slice %63 {offsets = [0, 0], sizes = [8, 256], strides = [1, 1]} : vector<8x384xf32> to vector<8x256xf32>
    %66 = arith.addf %64, %65 : vector<8x256xf32>
    %67 = arith.negf %66 : vector<8x256xf32>
    %68 = math.exp %67 : vector<8x256xf32>
    %cst_27 = arith.constant 1.000000e+00 : f32
    %69 = vector.broadcast %cst_27 : f32 to vector<8x256xf32>
    %70 = arith.addf %69, %68 : vector<8x256xf32>
    %71 = arith.divf %69, %70 : vector<8x256xf32>
    %72 = vector.extract_strided_slice %71 {offsets = [0, 0], sizes = [8, 128], strides = [1, 1]} : vector<8x256xf32> to vector<8x128xf32>
    %73 = vector.extract_strided_slice %71 {offsets = [0, 128], sizes = [8, 128], strides = [1, 1]} : vector<8x256xf32> to vector<8x128xf32>
    %74 = vector.extract_strided_slice %62 {offsets = [0, 256], sizes = [8, 128], strides = [1, 1]} : vector<8x384xf32> to vector<8x128xf32>
    %75 = vector.extract_strided_slice %63 {offsets = [0, 256], sizes = [8, 128], strides = [1, 1]} : vector<8x384xf32> to vector<8x128xf32>
    %76 = arith.addf %75, %11 : vector<8x128xf32>
    %77 = arith.mulf %72, %76 : vector<8x128xf32>
    %78 = arith.addf %74, %77 : vector<8x128xf32>
    %79 = math.tanh %78 : vector<8x128xf32>
    %cst_28 = arith.constant 1.000000e+00 : f32
    %80 = vector.broadcast %cst_28 : f32 to vector<8x128xf32>
    %81 = arith.subf %80, %73 : vector<8x128xf32>
    %82 = arith.mulf %81, %79 : vector<8x128xf32>
    %83 = arith.mulf %73, %60 : vector<8x128xf32>
    %84 = arith.addf %82, %83 : vector<8x128xf32>
    %c0_29 = arith.constant 0 : index
    %c3 = arith.constant 3 : index
    %c0_30 = arith.constant 0 : index
    %85 = vector.load %arg9[%c0_29, %c3, %c0_30] : memref<8x8x384xf32, #tpu.memory_space<vmem>>, vector<8x1x384xf32>
    %86 = vector.shape_cast %85 : vector<8x1x384xf32> to vector<8x384xf32>
    %cst_31 = arith.constant dense<0.000000e+00> : vector<8x384xf32>
    %87 = tpu.matmul %84, %8, %cst_31 {dimension_numbers = #tpu.dot_dimension_numbers<[1], [0], [0], [1], [0, 0, 1, 1], [], []>} : vector<8x128xf32>, vector<128x384xf32>, vector<8x384xf32> -> vector<8x384xf32>
    %88 = vector.extract_strided_slice %86 {offsets = [0, 0], sizes = [8, 256], strides = [1, 1]} : vector<8x384xf32> to vector<8x256xf32>
    %89 = vector.extract_strided_slice %87 {offsets = [0, 0], sizes = [8, 256], strides = [1, 1]} : vector<8x384xf32> to vector<8x256xf32>
    %90 = arith.addf %88, %89 : vector<8x256xf32>
    %91 = arith.negf %90 : vector<8x256xf32>
    %92 = math.exp %91 : vector<8x256xf32>
    %cst_32 = arith.constant 1.000000e+00 : f32
    %93 = vector.broadcast %cst_32 : f32 to vector<8x256xf32>
    %94 = arith.addf %93, %92 : vector<8x256xf32>
    %95 = arith.divf %93, %94 : vector<8x256xf32>
    %96 = vector.extract_strided_slice %95 {offsets = [0, 0], sizes = [8, 128], strides = [1, 1]} : vector<8x256xf32> to vector<8x128xf32>
    %97 = vector.extract_strided_slice %95 {offsets = [0, 128], sizes = [8, 128], strides = [1, 1]} : vector<8x256xf32> to vector<8x128xf32>
    %98 = vector.extract_strided_slice %86 {offsets = [0, 256], sizes = [8, 128], strides = [1, 1]} : vector<8x384xf32> to vector<8x128xf32>
    %99 = vector.extract_strided_slice %87 {offsets = [0, 256], sizes = [8, 128], strides = [1, 1]} : vector<8x384xf32> to vector<8x128xf32>
    %100 = arith.addf %99, %11 : vector<8x128xf32>
    %101 = arith.mulf %96, %100 : vector<8x128xf32>
    %102 = arith.addf %98, %101 : vector<8x128xf32>
    %103 = math.tanh %102 : vector<8x128xf32>
    %cst_33 = arith.constant 1.000000e+00 : f32
    %104 = vector.broadcast %cst_33 : f32 to vector<8x128xf32>
    %105 = arith.subf %104, %97 : vector<8x128xf32>
    %106 = arith.mulf %105, %103 : vector<8x128xf32>
    %107 = arith.mulf %97, %84 : vector<8x128xf32>
    %108 = arith.addf %106, %107 : vector<8x128xf32>
    %c0_34 = arith.constant 0 : index
    %c4 = arith.constant 4 : index
    %c0_35 = arith.constant 0 : index
    %109 = vector.load %arg9[%c0_34, %c4, %c0_35] : memref<8x8x384xf32, #tpu.memory_space<vmem>>, vector<8x1x384xf32>
    %110 = vector.shape_cast %109 : vector<8x1x384xf32> to vector<8x384xf32>
    %cst_36 = arith.constant dense<0.000000e+00> : vector<8x384xf32>
    %111 = tpu.matmul %108, %8, %cst_36 {dimension_numbers = #tpu.dot_dimension_numbers<[1], [0], [0], [1], [0, 0, 1, 1], [], []>} : vector<8x128xf32>, vector<128x384xf32>, vector<8x384xf32> -> vector<8x384xf32>
    %112 = vector.extract_strided_slice %110 {offsets = [0, 0], sizes = [8, 256], strides = [1, 1]} : vector<8x384xf32> to vector<8x256xf32>
    %113 = vector.extract_strided_slice %111 {offsets = [0, 0], sizes = [8, 256], strides = [1, 1]} : vector<8x384xf32> to vector<8x256xf32>
    %114 = arith.addf %112, %113 : vector<8x256xf32>
    %115 = arith.negf %114 : vector<8x256xf32>
    %116 = math.exp %115 : vector<8x256xf32>
    %cst_37 = arith.constant 1.000000e+00 : f32
    %117 = vector.broadcast %cst_37 : f32 to vector<8x256xf32>
    %118 = arith.addf %117, %116 : vector<8x256xf32>
    %119 = arith.divf %117, %118 : vector<8x256xf32>
    %120 = vector.extract_strided_slice %119 {offsets = [0, 0], sizes = [8, 128], strides = [1, 1]} : vector<8x256xf32> to vector<8x128xf32>
    %121 = vector.extract_strided_slice %119 {offsets = [0, 128], sizes = [8, 128], strides = [1, 1]} : vector<8x256xf32> to vector<8x128xf32>
    %122 = vector.extract_strided_slice %110 {offsets = [0, 256], sizes = [8, 128], strides = [1, 1]} : vector<8x384xf32> to vector<8x128xf32>
    %123 = vector.extract_strided_slice %111 {offsets = [0, 256], sizes = [8, 128], strides = [1, 1]} : vector<8x384xf32> to vector<8x128xf32>
    %124 = arith.addf %123, %11 : vector<8x128xf32>
    %125 = arith.mulf %120, %124 : vector<8x128xf32>
    %126 = arith.addf %122, %125 : vector<8x128xf32>
    %127 = math.tanh %126 : vector<8x128xf32>
    %cst_38 = arith.constant 1.000000e+00 : f32
    %128 = vector.broadcast %cst_38 : f32 to vector<8x128xf32>
    %129 = arith.subf %128, %121 : vector<8x128xf32>
    %130 = arith.mulf %129, %127 : vector<8x128xf32>
    %131 = arith.mulf %121, %108 : vector<8x128xf32>
    %132 = arith.addf %130, %131 : vector<8x128xf32>
    %c0_39 = arith.constant 0 : index
    %c5 = arith.constant 5 : index
    %c0_40 = arith.constant 0 : index
    %133 = vector.load %arg9[%c0_39, %c5, %c0_40] : memref<8x8x384xf32, #tpu.memory_space<vmem>>, vector<8x1x384xf32>
    %134 = vector.shape_cast %133 : vector<8x1x384xf32> to vector<8x384xf32>
    %cst_41 = arith.constant dense<0.000000e+00> : vector<8x384xf32>
    %135 = tpu.matmul %132, %8, %cst_41 {dimension_numbers = #tpu.dot_dimension_numbers<[1], [0], [0], [1], [0, 0, 1, 1], [], []>} : vector<8x128xf32>, vector<128x384xf32>, vector<8x384xf32> -> vector<8x384xf32>
    %136 = vector.extract_strided_slice %134 {offsets = [0, 0], sizes = [8, 256], strides = [1, 1]} : vector<8x384xf32> to vector<8x256xf32>
    %137 = vector.extract_strided_slice %135 {offsets = [0, 0], sizes = [8, 256], strides = [1, 1]} : vector<8x384xf32> to vector<8x256xf32>
    %138 = arith.addf %136, %137 : vector<8x256xf32>
    %139 = arith.negf %138 : vector<8x256xf32>
    %140 = math.exp %139 : vector<8x256xf32>
    %cst_42 = arith.constant 1.000000e+00 : f32
    %141 = vector.broadcast %cst_42 : f32 to vector<8x256xf32>
    %142 = arith.addf %141, %140 : vector<8x256xf32>
    %143 = arith.divf %141, %142 : vector<8x256xf32>
    %144 = vector.extract_strided_slice %143 {offsets = [0, 0], sizes = [8, 128], strides = [1, 1]} : vector<8x256xf32> to vector<8x128xf32>
    %145 = vector.extract_strided_slice %143 {offsets = [0, 128], sizes = [8, 128], strides = [1, 1]} : vector<8x256xf32> to vector<8x128xf32>
    %146 = vector.extract_strided_slice %134 {offsets = [0, 256], sizes = [8, 128], strides = [1, 1]} : vector<8x384xf32> to vector<8x128xf32>
    %147 = vector.extract_strided_slice %135 {offsets = [0, 256], sizes = [8, 128], strides = [1, 1]} : vector<8x384xf32> to vector<8x128xf32>
    %148 = arith.addf %147, %11 : vector<8x128xf32>
    %149 = arith.mulf %144, %148 : vector<8x128xf32>
    %150 = arith.addf %146, %149 : vector<8x128xf32>
    %151 = math.tanh %150 : vector<8x128xf32>
    %cst_43 = arith.constant 1.000000e+00 : f32
    %152 = vector.broadcast %cst_43 : f32 to vector<8x128xf32>
    %153 = arith.subf %152, %145 : vector<8x128xf32>
    %154 = arith.mulf %153, %151 : vector<8x128xf32>
    %155 = arith.mulf %145, %132 : vector<8x128xf32>
    %156 = arith.addf %154, %155 : vector<8x128xf32>
    %c0_44 = arith.constant 0 : index
    %c6 = arith.constant 6 : index
    %c0_45 = arith.constant 0 : index
    %157 = vector.load %arg9[%c0_44, %c6, %c0_45] : memref<8x8x384xf32, #tpu.memory_space<vmem>>, vector<8x1x384xf32>
    %158 = vector.shape_cast %157 : vector<8x1x384xf32> to vector<8x384xf32>
    %cst_46 = arith.constant dense<0.000000e+00> : vector<8x384xf32>
    %159 = tpu.matmul %156, %8, %cst_46 {dimension_numbers = #tpu.dot_dimension_numbers<[1], [0], [0], [1], [0, 0, 1, 1], [], []>} : vector<8x128xf32>, vector<128x384xf32>, vector<8x384xf32> -> vector<8x384xf32>
    %160 = vector.extract_strided_slice %158 {offsets = [0, 0], sizes = [8, 256], strides = [1, 1]} : vector<8x384xf32> to vector<8x256xf32>
    %161 = vector.extract_strided_slice %159 {offsets = [0, 0], sizes = [8, 256], strides = [1, 1]} : vector<8x384xf32> to vector<8x256xf32>
    %162 = arith.addf %160, %161 : vector<8x256xf32>
    %163 = arith.negf %162 : vector<8x256xf32>
    %164 = math.exp %163 : vector<8x256xf32>
    %cst_47 = arith.constant 1.000000e+00 : f32
    %165 = vector.broadcast %cst_47 : f32 to vector<8x256xf32>
    %166 = arith.addf %165, %164 : vector<8x256xf32>
    %167 = arith.divf %165, %166 : vector<8x256xf32>
    %168 = vector.extract_strided_slice %167 {offsets = [0, 0], sizes = [8, 128], strides = [1, 1]} : vector<8x256xf32> to vector<8x128xf32>
    %169 = vector.extract_strided_slice %167 {offsets = [0, 128], sizes = [8, 128], strides = [1, 1]} : vector<8x256xf32> to vector<8x128xf32>
    %170 = vector.extract_strided_slice %158 {offsets = [0, 256], sizes = [8, 128], strides = [1, 1]} : vector<8x384xf32> to vector<8x128xf32>
    %171 = vector.extract_strided_slice %159 {offsets = [0, 256], sizes = [8, 128], strides = [1, 1]} : vector<8x384xf32> to vector<8x128xf32>
    %172 = arith.addf %171, %11 : vector<8x128xf32>
    %173 = arith.mulf %168, %172 : vector<8x128xf32>
    %174 = arith.addf %170, %173 : vector<8x128xf32>
    %175 = math.tanh %174 : vector<8x128xf32>
    %cst_48 = arith.constant 1.000000e+00 : f32
    %176 = vector.broadcast %cst_48 : f32 to vector<8x128xf32>
    %177 = arith.subf %176, %169 : vector<8x128xf32>
    %178 = arith.mulf %177, %175 : vector<8x128xf32>
    %179 = arith.mulf %169, %156 : vector<8x128xf32>
    %180 = arith.addf %178, %179 : vector<8x128xf32>
    %c0_49 = arith.constant 0 : index
    %c7 = arith.constant 7 : index
    %c0_50 = arith.constant 0 : index
    %181 = vector.load %arg9[%c0_49, %c7, %c0_50] : memref<8x8x384xf32, #tpu.memory_space<vmem>>, vector<8x1x384xf32>
    %182 = vector.shape_cast %181 : vector<8x1x384xf32> to vector<8x384xf32>
    %cst_51 = arith.constant dense<0.000000e+00> : vector<8x384xf32>
    %183 = tpu.matmul %180, %8, %cst_51 {dimension_numbers = #tpu.dot_dimension_numbers<[1], [0], [0], [1], [0, 0, 1, 1], [], []>} : vector<8x128xf32>, vector<128x384xf32>, vector<8x384xf32> -> vector<8x384xf32>
    %184 = vector.extract_strided_slice %182 {offsets = [0, 0], sizes = [8, 256], strides = [1, 1]} : vector<8x384xf32> to vector<8x256xf32>
    %185 = vector.extract_strided_slice %183 {offsets = [0, 0], sizes = [8, 256], strides = [1, 1]} : vector<8x384xf32> to vector<8x256xf32>
    %186 = arith.addf %184, %185 : vector<8x256xf32>
    %187 = arith.negf %186 : vector<8x256xf32>
    %188 = math.exp %187 : vector<8x256xf32>
    %cst_52 = arith.constant 1.000000e+00 : f32
    %189 = vector.broadcast %cst_52 : f32 to vector<8x256xf32>
    %190 = arith.addf %189, %188 : vector<8x256xf32>
    %191 = arith.divf %189, %190 : vector<8x256xf32>
    %192 = vector.extract_strided_slice %191 {offsets = [0, 0], sizes = [8, 128], strides = [1, 1]} : vector<8x256xf32> to vector<8x128xf32>
    %193 = vector.extract_strided_slice %191 {offsets = [0, 128], sizes = [8, 128], strides = [1, 1]} : vector<8x256xf32> to vector<8x128xf32>
    %194 = vector.extract_strided_slice %182 {offsets = [0, 256], sizes = [8, 128], strides = [1, 1]} : vector<8x384xf32> to vector<8x128xf32>
    %195 = vector.extract_strided_slice %183 {offsets = [0, 256], sizes = [8, 128], strides = [1, 1]} : vector<8x384xf32> to vector<8x128xf32>
    %196 = arith.addf %195, %11 : vector<8x128xf32>
    %197 = arith.mulf %192, %196 : vector<8x128xf32>
    %198 = arith.addf %194, %197 : vector<8x128xf32>
    %199 = math.tanh %198 : vector<8x128xf32>
    %cst_53 = arith.constant 1.000000e+00 : f32
    %200 = vector.broadcast %cst_53 : f32 to vector<8x128xf32>
    %201 = arith.subf %200, %193 : vector<8x128xf32>
    %202 = arith.mulf %201, %199 : vector<8x128xf32>
    %203 = arith.mulf %193, %180 : vector<8x128xf32>
    %204 = arith.addf %202, %203 : vector<8x128xf32>
    %c0_54 = arith.constant 0 : index
    %c0_55 = arith.constant 0 : index
    %205 = vector.load %arg6[%c0_54, %c0_55] : memref<128x128xf32, #tpu.memory_space<vmem>>, vector<128x128xf32>
    %cst_56 = arith.constant dense<0.000000e+00> : vector<8x128xf32>
    %206 = tpu.matmul %204, %205, %cst_56 {dimension_numbers = #tpu.dot_dimension_numbers<[1], [0], [0], [1], [0, 0, 1, 1], [], []>} : vector<8x128xf32>, vector<128x128xf32>, vector<8x128xf32> -> vector<8x128xf32>
    %c0_57 = arith.constant 0 : index
    %c0_58 = arith.constant 0 : index
    %207 = vector.load %arg7[%c0_57, %c0_58] : memref<1x128xf32, #tpu.memory_space<vmem>>, vector<1x128xf32>
    %208 = vector.broadcast %207 : vector<1x128xf32> to vector<8x128xf32>
    %209 = arith.addf %206, %208 : vector<8x128xf32>
    %cst_59 = arith.constant 0.000000e+00 : f32
    %210 = vector.broadcast %cst_59 : f32 to vector<8x128xf32>
    %211 = arith.maximumf %209, %210 : vector<8x128xf32>
    %c0_60 = arith.constant 0 : index
    %c0_61 = arith.constant 0 : index
    %212 = vector.load %arg8[%c0_60, %c0_61] : memref<8x128xf32, #tpu.memory_space<vmem>>, vector<8x128xf32>
    tpu.vector_store %arg8[%c0_60, %c0_61], %211 {strides = array<i32>} : memref<8x128xf32, #tpu.memory_space<vmem>>, vector<8x128xf32>,
    return
  }
  func.func @transform_0(%arg0: i32) -> (i32, i32) {
    %c0_i32 = arith.constant 0 : i32
    %c0_i32_0 = arith.constant 0 : i32
    return %arg0, %c0_i32 : i32, i32
  }
  func.func @transform_1(%arg0: i32) -> (i32, i32) {
    %c0_i32 = arith.constant 0 : i32
    %c0_i32_0 = arith.constant 0 : i32
    %c0_i32_1 = arith.constant 0 : i32
    return %c0_i32, %c0_i32_0 : i32, i32
  }
  func.func @transform_2(%arg0: i32) -> (i32, i32) {
    %c0_i32 = arith.constant 0 : i32
    %c0_i32_0 = arith.constant 0 : i32
    %c0_i32_1 = arith.constant 0 : i32
    return %c0_i32, %c0_i32_0 : i32, i32
  }
  func.func @transform_3(%arg0: i32) -> (i32, i32) {
    %c0_i32 = arith.constant 0 : i32
    %c0_i32_0 = arith.constant 0 : i32
    %c0_i32_1 = arith.constant 0 : i32
    return %c0_i32, %c0_i32_0 : i32, i32
  }
  func.func @transform_4(%arg0: i32) -> (i32, i32) {
    %c0_i32 = arith.constant 0 : i32
    %c0_i32_0 = arith.constant 0 : i32
    %c0_i32_1 = arith.constant 0 : i32
    return %c0_i32, %c0_i32_0 : i32, i32
  }
  func.func @transform_5(%arg0: i32) -> (i32, i32) {
    %c0_i32 = arith.constant 0 : i32
    %c0_i32_0 = arith.constant 0 : i32
    %c0_i32_1 = arith.constant 0 : i32
    return %c0_i32, %c0_i32_0 : i32, i32
  }
  func.func @transform_6(%arg0: i32) -> (i32, i32) {
    %c0_i32 = arith.constant 0 : i32
    %c0_i32_0 = arith.constant 0 : i32
    %c0_i32_1 = arith.constant 0 : i32
    return %c0_i32, %c0_i32_0 : i32, i32
  }
  func.func @transform_7(%arg0: i32) -> (i32, i32) {
    %c0_i32 = arith.constant 0 : i32
    %c0_i32_0 = arith.constant 0 : i32
    return %arg0, %c0_i32 : i32, i32
  }
}

</mosaic_0001>

<llo_original>
// kernel: tpu_custom_call.1
$region0: #{tpu_custom_call.1}
  #allocation0 [shape = 'u32[]', space=smem, size = 0x4, offset = 0x4, fixed_abs, tag = 'smem constant byte address 0x4 - core index']
  #allocation1 [shape = 'u32[144,128]{1,0:T(1,128)}', space=vmem, size = 0x12000, scoped, tag = 'internal scratch']
  #allocation2 [shape = 'f32[8,8,384]{2,1,0:T(8,128)}', space=vmem, size = 0x18000, scoped, tag = 'scratch operand']
  %s0 = inlined_call_operand.hbm [shape: f32[16,16], index: 0, kind: input, shape index: {}]
  %s1 = inlined_call_operand.hbm [shape: f32[16,384], index: 1, kind: input, shape index: {}]
  %s2 = inlined_call_operand.vmem [shape: f32[1,384], index: 2, kind: input, shape index: {}]
  %s3 = inlined_call_operand.hbm [shape: f32[128,384], index: 3, kind: input, shape index: {}]
  %s4 = inlined_call_operand.vmem [shape: f32[1,128], index: 4, kind: input, shape index: {}]
  %s5 = inlined_call_operand.hbm [shape: f32[128,128], index: 5, kind: input, shape index: {}]
  %s6 = inlined_call_operand.vmem [shape: f32[1,128], index: 6, kind: input, shape index: {}]
  %s7 = inlined_call_operand.hbm [shape: f32[2,128], index: 7, kind: output, shape index: {}]
  %s8 = sld [smem:[#allocation0]]
  $region54: #{tpu_custom_call.1} parent=0
    _
  %s10 = ssub.s32 1, %s8
  %s11 = scalar_select 0, %s10, %s8
  $region1: #{tpu_custom_call.1} parent=0
    #allocation3 [shape = 'u8[32768]{0}', space=vmem, size = 0x8000, scoped, tag = 'input window, operand 0, single buffered']
    #allocation4 [shape = 's32[1]{0}', space=sflag, size = 0x4, scoped, tag = 'scoped memory for tpu_custom_call.1']
    #allocation5 [shape = 's32[1]{0}', space=sflag, size = 0x4, scoped, tag = 'scoped memory for tpu_custom_call.1']
    #allocation6 [shape = 'u8[24576]{0}', space=vmem, size = 0x6000, scoped, tag = 'input window, operand 1, single buffered']
    #allocation7 [shape = 's32[1]{0}', space=sflag, size = 0x4, scoped, tag = 'scoped memory for tpu_custom_call.1']
    #allocation8 [shape = 'u8[196608]{0}', space=vmem, size = 0x30000, scoped, tag = 'input window, operand 3, single buffered']
    #allocation9 [shape = 'u8[65536]{0}', space=vmem, size = 0x10000, scoped, tag = 'input window, operand 5, single buffered']
    #allocation10 [shape = 's32[1]{0}', space=sflag, size = 0x4, scoped, tag = 'scoped memory for tpu_custom_call.1']
    #allocation11 [shape = 'u8[4096]{0}', space=vmem, size = 0x1000, scoped, tag = 'output window, operand 0, single buffered']
    %12 = vsyncpa [#allocation4], 0
    %13 = vsyncpa [#allocation7], 0
    %14 = vsyncpa [#allocation10], 0
    %15 = vsyncpa [#allocation5], 0
    // Predicated region
    $region2: #{tpu_custom_call.1} parent=1 // pred_check
      _
    $region3: #{tpu_custom_call.1} parent=1 // pred_check_branch
      %17 = sbr.rel (0) target = $region5
    $region4: #{tpu_custom_call.1} parent=1 // pred_region
      %s19 = ssub.s32 1024, 256
      %20 = vsyncadd [#allocation4], %s19
      %s21 = sshll.u32 [#allocation3], 4
      %s22 = int_to_ptr.vmem [resolvable:$true] %s21
      %27 = dma.hbm_to_vmem [thread:$0]  %s0, 256, %s22, [#allocation4], 128, 128, 8
    $region5: #{tpu_custom_call.1} parent=1 // pred_fallthru
      _
    // Predicated region
    $region6: #{tpu_custom_call.1} parent=1 // pred_check
      _
    $region7: #{tpu_custom_call.1} parent=1 // pred_check_branch
      %29 = sbr.rel (0) target = $region9
    $region8: #{tpu_custom_call.1} parent=1 // pred_region
      %s31 = ssub.s32 768, 768
      %32 = vsyncadd [#allocation7], %s31
      %s33 = sshll.u32 [#allocation6], 4
      %s34 = int_to_ptr.vmem [resolvable:$true] %s33
      %39 = dma.hbm_to_vmem [thread:$0]  %s1, 768, %s34, [#allocation7], 384, 384, 24
    $region9: #{tpu_custom_call.1} parent=1 // pred_fallthru
      _
    // Predicated region
    $region10: #{tpu_custom_call.1} parent=1 // pred_check
      _
    $region11: #{tpu_custom_call.1} parent=1 // pred_check_branch
      %41 = sbr.rel (0) target = $region13
    $region12: #{tpu_custom_call.1} parent=1 // pred_region
      _
    $region13: #{tpu_custom_call.1} parent=1 // pred_fallthru
      _
    // Predicated region
    $region14: #{tpu_custom_call.1} parent=1 // pred_check
      _
    $region15: #{tpu_custom_call.1} parent=1 // pred_check_branch
      %43 = sbr.rel (0) target = $region17
    $region16: #{tpu_custom_call.1} parent=1 // pred_region
      %s45 = ssub.s32 6144, 6144
      %46 = vsyncadd [#allocation7], %s45
      %s47 = sshll.u32 [#allocation8], 4
      %s48 = int_to_ptr.vmem [resolvable:$true] %s47
      %53 = dma.hbm_to_vmem [thread:$0]  %s3, 6144, %s48, [#allocation7], 384, 384, 24
    $region17: #{tpu_custom_call.1} parent=1 // pred_fallthru
      _
    // Predicated region
    $region18: #{tpu_custom_call.1} parent=1 // pred_check
      _
    $region19: #{tpu_custom_call.1} parent=1 // pred_check_branch
      %55 = sbr.rel (0) target = $region21
    $region20: #{tpu_custom_call.1} parent=1 // pred_region
      _
    $region21: #{tpu_custom_call.1} parent=1 // pred_fallthru
      _
    // Predicated region
    $region22: #{tpu_custom_call.1} parent=1 // pred_check
      _
    $region23: #{tpu_custom_call.1} parent=1 // pred_check_branch
      %57 = sbr.rel (0) target = $region25
    $region24: #{tpu_custom_call.1} parent=1 // pred_region
      %s59 = ssub.s32 2048, 2048
      %60 = vsyncadd [#allocation10], %s59
      %s61 = sshll.u32 [#allocation9], 4
      %s62 = int_to_ptr.vmem [resolvable:$true] %s61
      %67 = dma.hbm_to_vmem [thread:$0]  %s5, 2048, %s62, [#allocation10], 128, 128, 8
    $region25: #{tpu_custom_call.1} parent=1 // pred_fallthru
      _
    // Predicated region
    $region26: #{tpu_custom_call.1} parent=1 // pred_check
      _
    $region27: #{tpu_custom_call.1} parent=1 // pred_check_branch
      %69 = sbr.rel (0) target = $region29
    $region28: #{tpu_custom_call.1} parent=1 // pred_region
      _
    $region29: #{tpu_custom_call.1} parent=1 // pred_fallthru
      _
    // Predicated region
    $region30: #{tpu_custom_call.1} parent=1 // pred_check
      _
    $region31: #{tpu_custom_call.1} parent=1 // pred_check_branch
      %71 = sbr.rel (0) target = $region33
    $region32: #{tpu_custom_call.1} parent=1 // pred_region
      %72 = dma.done [#allocation4], 1024
    $region33: #{tpu_custom_call.1} parent=1 // pred_fallthru
      _
    // Predicated region
    $region34: #{tpu_custom_call.1} parent=1 // pred_check
      _
    $region35: #{tpu_custom_call.1} parent=1 // pred_check_branch
      %74 = sbr.rel (0) target = $region37
    $region36: #{tpu_custom_call.1} parent=1 // pred_region
      %75 = dma.done [#allocation7], 768
    $region37: #{tpu_custom_call.1} parent=1 // pred_fallthru
      _
    // Predicated region
    $region38: #{tpu_custom_call.1} parent=1 // pred_check
      _
    $region39: #{tpu_custom_call.1} parent=1 // pred_check_branch
      %77 = sbr.rel (0) target = $region41
    $region40: #{tpu_custom_call.1} parent=1 // pred_region
      %78 = dma.done [#allocation7], 6144
    $region41: #{tpu_custom_call.1} parent=1 // pred_fallthru
      _
    // Predicated region
    $region42: #{tpu_custom_call.1} parent=1 // pred_check
      _
    $region43: #{tpu_custom_call.1} parent=1 // pred_check_branch
      %80 = sbr.rel (0) target = $region45
    $region44: #{tpu_custom_call.1} parent=1 // pred_region
      %81 = dma.done [#allocation10], 2048
    $region45: #{tpu_custom_call.1} parent=1 // pred_fallthru
      _
    %v82 = vld [vmem:[#allocation3] sm:$0xff]
    %v83 = vld [vmem:[#allocation3 + $0x8] sm:$0xff]
    %v84 = vld [vmem:[#allocation3 + $0x10] sm:$0xff]
    %v85 = vld [vmem:[#allocation3 + $0x18] sm:$0xff]
    %v86 = vld [vmem:[#allocation3 + $0x20] sm:$0xff]
    %v87 = vld [vmem:[#allocation3 + $0x28] sm:$0xff]
    %v88 = vld [vmem:[#allocation3 + $0x30] sm:$0xff]
    %v89 = vld [vmem:[#allocation3 + $0x38] sm:$0xff]
    %v90 = vld [vmem:[#allocation6] sm:$0xff]
    %v91 = vld [vmem:[#allocation6 + $0x8] sm:$0xff]
    %v92 = vld [vmem:[#allocation6 + $0x10] sm:$0xff]
    %v93 = vld [vmem:[#allocation6 + $0x18] sm:$0xff]
    %v94 = vld [vmem:[#allocation6 + $0x20] sm:$0xff]
    %v95 = vld [vmem:[#allocation6 + $0x28] sm:$0xff]
    %v96 = vld [vmem:[%s2] sm:$0x7]
    %v98 = vlaneseq
    %v99 = vshrl.u32 %v98, 7
    %v100 = vsub.s32 0, %v99
    %v101 = vrot.slane %v96, %v100
    %v102 = vlaneseq
    %v103 = vshrl.u32 %v102, 7
    %v104 = vsub.s32 1, %v103
    %v105 = vrot.slane %v96, %v104
    %v106 = vlaneseq
    %v107 = vshrl.u32 %v106, 7
    %v108 = vsub.s32 2, %v107
    %v109 = vrot.slane %v96, %v108
    %vm113 = vcmask 130048
    %v115 = vsel %vm113, %v82, 0
    %v118 = vsel %vm113, %v83, 0
    %v121 = vsel %vm113, %v84, 0
    %v124 = vsel %vm113, %v85, 0
    %v127 = vsel %vm113, %v86, 0
    %v130 = vsel %vm113, %v87, 0
    %v133 = vsel %vm113, %v88, 0
    %v136 = vsel %vm113, %v89, 0
    %138 = vmatprep.subr.mxu0 %v91
    %139 = vmatpush1.msra.mxu0 %v90
    %140 = vmatprep.subr.mxu0 %v94
    %141 = vmatpush1.msra.mxu0 %v93
    %142 = vmatprep.subr.mxu0 0.0
    %143 = vmatpush1.msra.mxu0 0.0
    %144 = vmatprep.subr.mxu0 0.0
    %145 = vmatpush1.msra.mxu0 0.0
    %146 = vmatprep.subr.mxu0 0.0
    %147 = vmatpush1.msra.mxu0 0.0
    %148 = vmatprep.subr.mxu0 0.0
    %149 = vmatpush1.msra.mxu0 0.0
    %150 = vmatprep.subr.mxu0 0.0
    %151 = vmatpush1.msra.mxu0 0.0
    %152 = vmatprep.subr.mxu0 0.0
    %153 = vmatpush1.msra.mxu0 0.0
    %154 = vmatprep.subr.mxu0 0.0
    %155 = vmatpush1.msra.mxu0 0.0
    %156 = vmatprep.subr.mxu0 0.0
    %157 = vmatpush1.msra.mxu0 0.0
    %158 = vmatprep.subr.mxu0 0.0
    %159 = vmatpush1.msra.mxu0 0.0
    %160 = vmatprep.subr.mxu0 0.0
    %161 = vmatpush1.msra.mxu0 0.0
    %162 = vmatprep.subr.mxu0 0.0
    %163 = vmatpush1.msra.mxu0 0.0
    %164 = vmatprep.subr.mxu0 0.0
    %165 = vmatpush1.msra.mxu0 0.0
    %166 = vmatprep.subr.mxu0 0.0
    %167 = vmatpush1.msra.mxu0 0.0
    %168 = vmatprep.subr.mxu0 0.0
    %169 = vmatpush1.msra.mxu0 0.0
    %170 = vmatprep.subr.mxu0 0.0
    %171 = vmatpush1.msra.mxu0 0.0
    %172 = vmatprep.subr.mxu0 0.0
    %173 = vmatpush1.msra.mxu0 0.0
    %174 = vmatprep.subr.mxu0 0.0
    %175 = vmatpush1.msra.mxu0 0.0
    %176 = vmatprep.subr.mxu0 0.0
    %177 = vmatpush1.msra.mxu0 0.0
    %178 = vmatprep.subr.mxu0 0.0
    %179 = vmatpush1.msra.mxu0 0.0
    %180 = vmatprep.subr.mxu0 0.0
    %181 = vmatpush1.msra.mxu0 0.0
    %182 = vmatprep.subr.mxu0 0.0
    %183 = vmatpush1.msra.mxu0 0.0
    %184 = vmatprep.subr.mxu0 0.0
    %185 = vmatpush1.msra.mxu0 0.0
    %186 = vmatprep.subr.mxu0 0.0
    %187 = vmatpush1.msra.mxu0 0.0
    %188 = vmatprep.subr.mxu0 0.0
    %189 = vmatpush1.msra.mxu0 0.0
    %190 = vmatprep.subr.mxu0 0.0
    %191 = vmatpush1.msra.mxu0 0.0
    %192 = vmatprep.subr.mxu0 0.0
    %193 = vmatpush1.msra.mxu0 0.0
    %194 = vmatprep.subr.mxu0 0.0
    %195 = vmatpush1.msra.mxu0 0.0
    %196 = vmatprep.subr.mxu0 0.0
    %197 = vmatpush1.msra.mxu0 0.0
    %198 = vmatprep.subr.mxu0 0.0
    %199 = vmatpush1.msra.mxu0 0.0
    %200 = vmatprep.subr.mxu0 0.0
    %201 = vmatpush1.msra.mxu0 0.0
    %202 = vmatprep.mubr.f32.mxu0 0.0
    %203 = vmatmul.mubr.f32.gmra.mrb[0].mxu0 %v115
    %v204 = vpop.f32.mrb[0].mxu0
    %v205 = vadd.f32 %v101, %v204
    %v206 = vpop.f32.mrb[0].mxu0
    %v207 = vadd.f32 %v105, %v206
    %208 = vmatprep.mubr.f32.mxu0 0.0
    %209 = vmatmul.mubr.f32.gmra.mrb[0].mxu0 %v118
    %v210 = vpop.f32.mrb[0].mxu0
    %v211 = vadd.f32 %v101, %v210
    %v212 = vpop.f32.mrb[0].mxu0
    %v213 = vadd.f32 %v105, %v212
    %214 = vmatprep.mubr.f32.mxu0 0.0
    %215 = vmatmul.mubr.f32.gmra.mrb[0].mxu0 %v121
    %v216 = vpop.f32.mrb[0].mxu0
    %v217 = vadd.f32 %v101, %v216
    %v218 = vpop.f32.mrb[0].mxu0
    %v219 = vadd.f32 %v105, %v218
    %220 = vmatprep.mubr.f32.mxu0 0.0
    %221 = vmatmul.mubr.f32.gmra.mrb[0].mxu0 %v124
    %v222 = vpop.f32.mrb[0].mxu0
    %v223 = vadd.f32 %v101, %v222
    %v224 = vpop.f32.mrb[0].mxu0
    %v225 = vadd.f32 %v105, %v224
    %226 = vmatprep.mubr.f32.mxu0 0.0
    %227 = vmatmul.mubr.f32.gmra.mrb[0].mxu0 %v127
    %v228 = vpop.f32.mrb[0].mxu0
    %v229 = vadd.f32 %v101, %v228
    %v230 = vpop.f32.mrb[0].mxu0
    %v231 = vadd.f32 %v105, %v230
    %232 = vmatprep.mubr.f32.mxu0 0.0
    %233 = vmatmul.mubr.f32.gmra.mrb[0].mxu0 %v130
    %v234 = vpop.f32.mrb[0].mxu0
    %v235 = vadd.f32 %v101, %v234
    %v236 = vpop.f32.mrb[0].mxu0
    %v237 = vadd.f32 %v105, %v236
    %238 = vmatprep.mubr.f32.mxu0 0.0
    %239 = vmatmul.mubr.f32.gmra.mrb[0].mxu0 %v133
    %v240 = vpop.f32.mrb[0].mxu0
    %v241 = vadd.f32 %v101, %v240
    %v242 = vpop.f32.mrb[0].mxu0
    %v243 = vadd.f32 %v105, %v242
    %244 = vmatprep.mubr.f32.mxu0 0.0
    %245 = vmatmul.mubr.f32.gmra.mrb[0].mxu0 %v136
    %v246 = vpop.f32.mrb[0].mxu0
    %v247 = vadd.f32 %v101, %v246
    %v248 = vpop.f32.mrb[0].mxu0
    %v249 = vadd.f32 %v105, %v248
    %250 = vdwg.mxu0
    %251 = vmatprep.subr.mxu0 0.0
    %252 = vmatpush1.msra.mxu0 %v92
    %253 = vmatprep.subr.mxu0 0.0
    %254 = vmatpush1.msra.mxu0 %v95
    %255 = vmatprep.subr.mxu0 0.0
    %256 = vmatpush1.msra.mxu0 0.0
    %257 = vmatprep.subr.mxu0 0.0
    %258 = vmatpush1.msra.mxu0 0.0
    %259 = vmatprep.subr.mxu0 0.0
    %260 = vmatpush1.msra.mxu0 0.0
    %261 = vmatprep.subr.mxu0 0.0
    %262 = vmatpush1.msra.mxu0 0.0
    %263 = vmatprep.subr.mxu0 0.0
    %264 = vmatpush1.msra.mxu0 0.0
    %265 = vmatprep.subr.mxu0 0.0
    %266 = vmatpush1.msra.mxu0 0.0
    %267 = vmatprep.subr.mxu0 0.0
    %268 = vmatpush1.msra.mxu0 0.0
    %269 = vmatprep.subr.mxu0 0.0
    %270 = vmatpush1.msra.mxu0 0.0
    %271 = vmatprep.subr.mxu0 0.0
    %272 = vmatpush1.msra.mxu0 0.0
    %273 = vmatprep.subr.mxu0 0.0
    %274 = vmatpush1.msra.mxu0 0.0
    %275 = vmatprep.subr.mxu0 0.0
    %276 = vmatpush1.msra.mxu0 0.0
    %277 = vmatprep.subr.mxu0 0.0
    %278 = vmatpush1.msra.mxu0 0.0
    %279 = vmatprep.subr.mxu0 0.0
    %280 = vmatpush1.msra.mxu0 0.0
    %281 = vmatprep.subr.mxu0 0.0
    %282 = vmatpush1.msra.mxu0 0.0
    %283 = vmatprep.subr.mxu0 0.0
    %284 = vmatpush1.msra.mxu0 0.0
    %285 = vmatprep.subr.mxu0 0.0
    %286 = vmatpush1.msra.mxu0 0.0
    %287 = vmatprep.subr.mxu0 0.0
    %288 = vmatpush1.msra.mxu0 0.0
    %289 = vmatprep.subr.mxu0 0.0
    %290 = vmatpush1.msra.mxu0 0.0
    %291 = vmatprep.subr.mxu0 0.0
    %292 = vmatpush1.msra.mxu0 0.0
    %293 = vmatprep.subr.mxu0 0.0
    %294 = vmatpush1.msra.mxu0 0.0
    %295 = vmatprep.subr.mxu0 0.0
    %296 = vmatpush1.msra.mxu0 0.0
    %297 = vmatprep.subr.mxu0 0.0
    %298 = vmatpush1.msra.mxu0 0.0
    %299 = vmatprep.subr.mxu0 0.0
    %300 = vmatpush1.msra.mxu0 0.0
    %301 = vmatprep.subr.mxu0 0.0
    %302 = vmatpush1.msra.mxu0 0.0
    %303 = vmatprep.subr.mxu0 0.0
    %304 = vmatpush1.msra.mxu0 0.0
    %305 = vmatprep.subr.mxu0 0.0
    %306 = vmatpush1.msra.mxu0 0.0
    %307 = vmatprep.subr.mxu0 0.0
    %308 = vmatpush1.msra.mxu0 0.0
    %309 = vmatprep.subr.mxu0 0.0
    %310 = vmatpush1.msra.mxu0 0.0
    %311 = vmatprep.subr.mxu0 0.0
    %312 = vmatpush1.msra.mxu0 0.0
    %313 = vmatprep.subr.mxu0 0.0
    %314 = vmatpush1.msra.mxu0 0.0
    %315 = vmatprep.mubr.f32.mxu0 0.0
    %316 = vmatmul.mubr.f32.gmra.mrb[0].mxu0 %v115
    %v317 = vpop.f32.mrb[0].mxu0
    %v318 = vadd.f32 %v109, %v317
    %v319 = vpop.f32.mrb[0].mxu0
    %320 = vmatprep.mubr.f32.mxu0 0.0
    %321 = vmatmul.mubr.f32.gmra.mrb[0].mxu0 %v118
    %v322 = vpop.f32.mrb[0].mxu0
    %v323 = vadd.f32 %v109, %v322
    %v324 = vpop.f32.mrb[0].mxu0
    %325 = vmatprep.mubr.f32.mxu0 0.0
    %326 = vmatmul.mubr.f32.gmra.mrb[0].mxu0 %v121
    %v327 = vpop.f32.mrb[0].mxu0
    %v328 = vadd.f32 %v109, %v327
    %v329 = vpop.f32.mrb[0].mxu0
    %330 = vmatprep.mubr.f32.mxu0 0.0
    %331 = vmatmul.mubr.f32.gmra.mrb[0].mxu0 %v124
    %v332 = vpop.f32.mrb[0].mxu0
    %v333 = vadd.f32 %v109, %v332
    %v334 = vpop.f32.mrb[0].mxu0
    %335 = vmatprep.mubr.f32.mxu0 0.0
    %336 = vmatmul.mubr.f32.gmra.mrb[0].mxu0 %v127
    %v337 = vpop.f32.mrb[0].mxu0
    %v338 = vadd.f32 %v109, %v337
    %v339 = vpop.f32.mrb[0].mxu0
    %340 = vmatprep.mubr.f32.mxu0 0.0
    %341 = vmatmul.mubr.f32.gmra.mrb[0].mxu0 %v130
    %v342 = vpop.f32.mrb[0].mxu0
    %v343 = vadd.f32 %v109, %v342
    %v344 = vpop.f32.mrb[0].mxu0
    %345 = vmatprep.mubr.f32.mxu0 0.0
    %346 = vmatmul.mubr.f32.gmra.mrb[0].mxu0 %v133
    %v347 = vpop.f32.mrb[0].mxu0
    %v348 = vadd.f32 %v109, %v347
    %v349 = vpop.f32.mrb[0].mxu0
    %350 = vmatprep.mubr.f32.mxu0 0.0
    %351 = vmatmul.mubr.f32.gmra.mrb[0].mxu0 %v136
    %v352 = vpop.f32.mrb[0].mxu0
    %v353 = vadd.f32 %v109, %v352
    %v354 = vpop.f32.mrb[0].mxu0
    %355 = vdwg.mxu0
    %356 = vst [vmem:[#allocation2] sm:$0xff] %v205
    %357 = vst [vmem:[#allocation2 + $0x8] sm:$0xff] %v207
    %358 = vst [vmem:[#allocation2 + $0x10] sm:$0xff] %v318
    %359 = vst [vmem:[#allocation2 + $0x18] sm:$0xff] %v211
    %360 = vst [vmem:[#allocation2 + $0x20] sm:$0xff] %v213
    %361 = vst [vmem:[#allocation2 + $0x28] sm:$0xff] %v323
    %362 = vst [vmem:[#allocation2 + $0x30] sm:$0xff] %v217
    %363 = vst [vmem:[#allocation2 + $0x38] sm:$0xff] %v219
    %364 = vst [vmem:[#allocation2 + $0x40] sm:$0xff] %v328
    %365 = vst [vmem:[#allocation2 + $0x48] sm:$0xff] %v223
    %366 = vst [vmem:[#allocation2 + $0x50] sm:$0xff] %v225
    %367 = vst [vmem:[#allocation2 + $0x58] sm:$0xff] %v333
    %368 = vst [vmem:[#allocation2 + $0x60] sm:$0xff] %v229
    %369 = vst [vmem:[#allocation2 + $0x68] sm:$0xff] %v231
    %370 = vst [vmem:[#allocation2 + $0x70] sm:$0xff] %v338
    %371 = vst [vmem:[#allocation2 + $0x78] sm:$0xff] %v235
    %372 = vst [vmem:[#allocation2 + $0x80] sm:$0xff] %v237
    %373 = vst [vmem:[#allocation2 + $0x88] sm:$0xff] %v343
    %374 = vst [vmem:[#allocation2 + $0x90] sm:$0xff] %v241
    %375 = vst [vmem:[#allocation2 + $0x98] sm:$0xff] %v243
    %376 = vst [vmem:[#allocation2 + $0xa0] sm:$0xff] %v348
    %377 = vst [vmem:[#allocation2 + $0xa8] sm:$0xff] %v247
    %378 = vst [vmem:[#allocation2 + $0xb0] sm:$0xff] %v249
    %379 = vst [vmem:[#allocation2 + $0xb8] sm:$0xff] %v353
    %v380 = vld [vmem:[#allocation8] sm:$0xff]
    %v381 = vld [vmem:[#allocation8 + $0x8] sm:$0xff]
    %v382 = vld [vmem:[#allocation8 + $0x10] sm:$0xff]
    %v383 = vld [vmem:[#allocation8 + $0x18] sm:$0xff]
    %v384 = vld [vmem:[#allocation8 + $0x20] sm:$0xff]
    %v385 = vld [vmem:[#allocation8 + $0x28] sm:$0xff]
    %v386 = vld [vmem:[#allocation8 + $0x30] sm:$0xff]
    %v387 = vld [vmem:[#allocation8 + $0x38] sm:$0xff]
    %v388 = vld [vmem:[#allocation8 + $0x40] sm:$0xff]
    %v389 = vld [vmem:[#allocation8 + $0x48] sm:$0xff]
    %v390 = vld [vmem:[#allocation8 + $0x50] sm:$0xff]
    %v391 = vld [vmem:[#allocation8 + $0x58] sm:$0xff]
    %v392 = vld [vmem:[#allocation8 + $0x60] sm:$0xff]
    %v393 = vld [vmem:[#allocation8 + $0x68] sm:$0xff]
    %v394 = vld [vmem:[#allocation8 + $0x70] sm:$0xff]
    %v395 = vld [vmem:[#allocation8 + $0x78] sm:$0xff]
    %v396 = vld [vmem:[#allocation8 + $0x80] sm:$0xff]
    %v397 = vld [vmem:[#allocation8 + $0x88] sm:$0xff]
    %v398 = vld [vmem:[#allocation8 + $0x90] sm:$0xff]
    %v399 = vld [vmem:[#allocation8 + $0x98] sm:$0xff]
    %v400 = vld [vmem:[#allocation8 + $0xa0] sm:$0xff]
    %v401 = vld [vmem:[#allocation8 + $0xa8] sm:$0xff]
    %v402 = vld [vmem:[#allocation8 + $0xb0] sm:$0xff]
    %v403 = vld [vmem:[#allocation8 + $0xb8] sm:$0xff]
    %v404 = vld [vmem:[#allocation8 + $0xc0] sm:$0xff]
    %v405 = vld [vmem:[#allocation8 + $0xc8] sm:$0xff]
    %v406 = vld [vmem:[#allocation8 + $0xd0] sm:$0xff]
    %v407 = vld [vmem:[#allocation8 + $0xd8] sm:$0xff]
    %v408 = vld [vmem:[#allocation8 + $0xe0] sm:$0xff]
    %v409 = vld [vmem:[#allocation8 + $0xe8] sm:$0xff]
    %v410 = vld [vmem:[#allocation8 + $0xf0] sm:$0xff]
    %v411 = vld [vmem:[#allocation8 + $0xf8] sm:$0xff]
    %v412 = vld [vmem:[#allocation8 + $0x100] sm:$0xff]
    %v413 = vld [vmem:[#allocation8 + $0x108] sm:$0xff]
    %v414 = vld [vmem:[#allocation8 + $0x110] sm:$0xff]
    %v415 = vld [vmem:[#allocation8 + $0x118] sm:$0xff]
    %v416 = vld [vmem:[#allocation8 + $0x120] sm:$0xff]
    %v417 = vld [vmem:[#allocation8 + $0x128] sm:$0xff]
    %v418 = vld [vmem:[#allocation8 + $0x130] sm:$0xff]
    %v419 = vld [vmem:[#allocation8 + $0x138] sm:$0xff]
    %v420 = vld [vmem:[#allocation8 + $0x140] sm:$0xff]
    %v421 = vld [vmem:[#allocation8 + $0x148] sm:$0xff]
    %v422 = vld [vmem:[#allocation8 + $0x150] sm:$0xff]
    %v423 = vld [vmem:[#allocation8 + $0x158] sm:$0xff]
    %v424 = vld [vmem:[#allocation8 + $0x160] sm:$0xff]
    %v425 = vld [vmem:[#allocation8 + $0x168] sm:$0xff]
    %v426 = vld [vmem:[#allocation8 + $0x170] sm:$0xff]
    %v427 = vld [vmem:[#allocation8 + $0x178] sm:$0xff]
    %v428 = vld [vmem:[%s4] sm:$0x1]
    %v430 = vlaneseq
    %v431 = vshrl.u32 %v430, 7
    %v432 = vsub.s32 0, %v431
    %v433 = vrot.slane %v428, %v432
    %v435 = vld [vmem:[#allocation2] ss:$8 sm:$0x7]
    %s436 = scalar_lea.vmem [#allocation2], 24
    %v437 = vld [vmem:[%s436] ss:$8 sm:$0x7]
    %s438 = scalar_lea.vmem [#allocation2], 48
    %v439 = vld [vmem:[%s438] ss:$8 sm:$0x7]
    %s440 = scalar_lea.vmem [#allocation2], 72
    %v441 = vld [vmem:[%s440] ss:$8 sm:$0x7]
    %s442 = scalar_lea.vmem [#allocation2], 96
    %v443 = vld [vmem:[%s442] ss:$8 sm:$0x7]
    %s444 = scalar_lea.vmem [#allocation2], 120
    %v445 = vld [vmem:[%s444] ss:$8 sm:$0x7]
    %s446 = scalar_lea.vmem [#allocation2], 144
    %v447 = vld [vmem:[%s446] ss:$8 sm:$0x7]
    %s448 = scalar_lea.vmem [#allocation2], 168
    %v449 = vld [vmem:[%s448] ss:$8 sm:$0x7]
    %450 = vmatprep.subr.mxu0 %v381
    %451 = vmatpush1.msra.mxu0 %v380
    %452 = vmatprep.subr.mxu0 %v384
    %453 = vmatpush1.msra.mxu0 %v383
    %454 = vmatprep.subr.mxu0 %v387
    %455 = vmatpush1.msra.mxu0 %v386
    %456 = vmatprep.subr.mxu0 %v390
    %457 = vmatpush1.msra.mxu0 %v389
    %458 = vmatprep.subr.mxu0 %v393
    %459 = vmatpush1.msra.mxu0 %v392
    %460 = vmatprep.subr.mxu0 %v396
    %461 = vmatpush1.msra.mxu0 %v395
    %462 = vmatprep.subr.mxu0 %v399
    %463 = vmatpush1.msra.mxu0 %v398
    %464 = vmatprep.subr.mxu0 %v402
    %465 = vmatpush1.msra.mxu0 %v401
    %466 = vmatprep.subr.mxu0 %v405
    %467 = vmatpush1.msra.mxu0 %v404
    %468 = vmatprep.subr.mxu0 %v408
    %469 = vmatpush1.msra.mxu0 %v407
    %470 = vmatprep.subr.mxu0 %v411
    %471 = vmatpush1.msra.mxu0 %v410
    %472 = vmatprep.subr.mxu0 %v414
    %473 = vmatpush1.msra.mxu0 %v413
    %474 = vmatprep.subr.mxu0 %v417
    %475 = vmatpush1.msra.mxu0 %v416
    %476 = vmatprep.subr.mxu0 %v420
    %477 = vmatpush1.msra.mxu0 %v419
    %478 = vmatprep.subr.mxu0 %v423
    %479 = vmatpush1.msra.mxu0 %v422
    %480 = vmatprep.subr.mxu0 %v426
    %481 = vmatpush1.msra.mxu0 %v425
    %482 = vmatprep.subr.mxu0 0.0
    %483 = vmatpush1.msra.mxu0 0.0
    %484 = vmatprep.subr.mxu0 0.0
    %485 = vmatpush1.msra.mxu0 0.0
    %486 = vmatprep.subr.mxu0 0.0
    %487 = vmatpush1.msra.mxu0 0.0
    %488 = vmatprep.subr.mxu0 0.0
    %489 = vmatpush1.msra.mxu0 0.0
    %490 = vmatprep.subr.mxu0 0.0
    %491 = vmatpush1.msra.mxu0 0.0
    %492 = vmatprep.subr.mxu0 0.0
    %493 = vmatpush1.msra.mxu0 0.0
    %494 = vmatprep.subr.mxu0 0.0
    %495 = vmatpush1.msra.mxu0 0.0
    %496 = vmatprep.subr.mxu0 0.0
    %497 = vmatpush1.msra.mxu0 0.0
    %498 = vmatprep.subr.mxu0 0.0
    %499 = vmatpush1.msra.mxu0 0.0
    %500 = vmatprep.subr.mxu0 0.0
    %501 = vmatpush1.msra.mxu0 0.0
    %502 = vmatprep.subr.mxu0 0.0
    %503 = vmatpush1.msra.mxu0 0.0
    %504 = vmatprep.subr.mxu0 0.0
    %505 = vmatpush1.msra.mxu0 0.0
    %506 = vmatprep.subr.mxu0 0.0
    %507 = vmatpush1.msra.mxu0 0.0
    %508 = vmatprep.subr.mxu0 0.0
    %509 = vmatpush1.msra.mxu0 0.0
    %510 = vmatprep.subr.mxu0 0.0
    %511 = vmatpush1.msra.mxu0 0.0
    %512 = vmatprep.subr.mxu0 0.0
    %513 = vmatpush1.msra.mxu0 0.0
    %514 = vmatprep.mubr.f32.mxu0 0.0
    %515 = vmatmul.mubr.f32.gmra.mrb[0].mxu0 0.0
    %v516 = vpop.f32.mrb[0].mxu0
    %v517 = vadd.f32 0.0, %v516
    %v518 = vpop.f32.mrb[0].mxu0
    %v519 = vadd.f32 0.0, %v518
    %520 = vdwg.mxu0
    %521 = vmatprep.subr.mxu0 0.0
    %522 = vmatpush1.msra.mxu0 %v382
    %523 = vmatprep.subr.mxu0 0.0
    %524 = vmatpush1.msra.mxu0 %v385
    %525 = vmatprep.subr.mxu0 0.0
    %526 = vmatpush1.msra.mxu0 %v388
    %527 = vmatprep.subr.mxu0 0.0
    %528 = vmatpush1.msra.mxu0 %v391
    %529 = vmatprep.subr.mxu0 0.0
    %530 = vmatpush1.msra.mxu0 %v394
    %531 = vmatprep.subr.mxu0 0.0
    %532 = vmatpush1.msra.mxu0 %v397
    %533 = vmatprep.subr.mxu0 0.0
    %534 = vmatpush1.msra.mxu0 %v400
    %535 = vmatprep.subr.mxu0 0.0
    %536 = vmatpush1.msra.mxu0 %v403
    %537 = vmatprep.subr.mxu0 0.0
    %538 = vmatpush1.msra.mxu0 %v406
    %539 = vmatprep.subr.mxu0 0.0
    %540 = vmatpush1.msra.mxu0 %v409
    %541 = vmatprep.subr.mxu0 0.0
    %542 = vmatpush1.msra.mxu0 %v412
    %543 = vmatprep.subr.mxu0 0.0
    %544 = vmatpush1.msra.mxu0 %v415
    %545 = vmatprep.subr.mxu0 0.0
    %546 = vmatpush1.msra.mxu0 %v418
    %547 = vmatprep.subr.mxu0 0.0
    %548 = vmatpush1.msra.mxu0 %v421
    %549 = vmatprep.subr.mxu0 0.0
    %550 = vmatpush1.msra.mxu0 %v424
    %551 = vmatprep.subr.mxu0 0.0
    %552 = vmatpush1.msra.mxu0 %v427
    %553 = vmatprep.subr.mxu0 0.0
    %554 = vmatpush1.msra.mxu0 0.0
    %555 = vmatprep.subr.mxu0 0.0
    %556 = vmatpush1.msra.mxu0 0.0
    %557 = vmatprep.subr.mxu0 0.0
    %558 = vmatpush1.msra.mxu0 0.0
    %559 = vmatprep.subr.mxu0 0.0
    %560 = vmatpush1.msra.mxu0 0.0
    %561 = vmatprep.subr.mxu0 0.0
    %562 = vmatpush1.msra.mxu0 0.0
    %563 = vmatprep.subr.mxu0 0.0
    %564 = vmatpush1.msra.mxu0 0.0
    %565 = vmatprep.subr.mxu0 0.0
    %566 = vmatpush1.msra.mxu0 0.0
    %567 = vmatprep.subr.mxu0 0.0
    %568 = vmatpush1.msra.mxu0 0.0
    %569 = vmatprep.subr.mxu0 0.0
    %570 = vmatpush1.msra.mxu0 0.0
    %571 = vmatprep.subr.mxu0 0.0
    %572 = vmatpush1.msra.mxu0 0.0
    %573 = vmatprep.subr.mxu0 0.0
    %574 = vmatpush1.msra.mxu0 0.0
    %575 = vmatprep.subr.mxu0 0.0
    %576 = vmatpush1.msra.mxu0 0.0
    %577 = vmatprep.subr.mxu0 0.0
    %578 = vmatpush1.msra.mxu0 0.0
    %579 = vmatprep.subr.mxu0 0.0
    %580 = vmatpush1.msra.mxu0 0.0
    %581 = vmatprep.subr.mxu0 0.0
    %582 = vmatpush1.msra.mxu0 0.0
    %583 = vmatprep.subr.mxu0 0.0
    %584 = vmatpush1.msra.mxu0 0.0
    %585 = vmatprep.mubr.f32.mxu0 0.0
    %586 = vmatmul.mubr.f32.gmra.mrb[0].mxu0 0.0
    %v587 = vpop.f32.mrb[0].mxu0
    %v588 = vadd.f32 0.0, %v587
    %v589 = vpop.f32.mrb[0].mxu0
    %590 = vdwg.mxu0
    %v593 = vcombine.low %v517, %v519
    %v594 = vcombine.high %v517, %v519
    %v596 = vunpack.c.l.s4 1966171168
    %v597 = vunpack.c.0.s8 %v596
    %v598 = vlaneseq
    %v599 = vshrl.u32 %v598, 7
    %v600 = vsub.s32 %v597, %v599
    %v601 = vrot.slane %v593, %v600
    %v603 = vunpack.c.l.s4 1966171168
    %v604 = vunpack.c.0.s8 %v603
    %v605 = vlaneseq
    %v606 = vshrl.u32 %v605, 7
    %v607 = vsub.s32 %v604, %v606
    %v608 = vrot.slane %v594, %v607
    %v609 = vcombine.high %v601, %v601
    %v610 = vcombine.high %v608, %v608
    %v612 = vunpack.c.l.s4 1966171168
    %v613 = vunpack.c.0.s8 %v612
    %v614 = vlaneseq
    %v615 = vshrl.u32 %v614, 7
    %v616 = vsub.s32 %v613, %v615
    %v617 = vrot.slane %v601, %v616
    %v619 = vunpack.c.l.s4 1966171168
    %v620 = vunpack.c.0.s8 %v619
    %v621 = vlaneseq
    %v622 = vshrl.u32 %v621, 7
    %v623 = vsub.s32 %v620, %v622
    %v624 = vrot.slane %v608, %v623
    %v626 = vunpack.c.l.s4 1966171168
    %v627 = vunpack.c.0.s8 %v626
    %v628 = vlaneseq
    %v629 = vshrl.u32 %v628, 7
    %v630 = vsub.s32 %v627, %v629
    %v631 = vrot.slane %v609, %v630
    %v633 = vunpack.c.l.s4 1966171168
    %v634 = vunpack.c.0.s8 %v633
    %v635 = vlaneseq
    %v636 = vshrl.u32 %v635, 7
    %v637 = vsub.s32 %v634, %v636
    %v638 = vrot.slane %v610, %v637
    %v639 = vcombine.high %v617, %v617
    %v640 = vcombine.high %v624, %v624
    %v641 = vcombine.high %v631, %v631
    %v642 = vcombine.high %v638, %v638
    %v651 = vadd.f32 %v435, %v617
    %v652 = vadd.f32 %v437, %v631
    %v653 = vadd.f32 %v439, %v639
    %v654 = vadd.f32 %v441, %v641
    %v655 = vadd.f32 %v443, %v624
    %v656 = vadd.f32 %v445, %v638
    %v657 = vadd.f32 %v447, %v640
    %v658 = vadd.f32 %v449, %v642
    %v659 = vxor.u32 %v651, 2147483648
    %v660 = vxor.u32 %v652, 2147483648
    %v661 = vxor.u32 %v653, 2147483648
    %v662 = vxor.u32 %v654, 2147483648
    %v663 = vxor.u32 %v655, 2147483648
    %v664 = vxor.u32 %v656, 2147483648
    %v665 = vxor.u32 %v657, 2147483648
    %v666 = vxor.u32 %v658, 2147483648
    %v667 = vmul.f32 %v659, 1.442695
    %v668 = vpow.pop %v667
    %v669 = vmul.f32 %v660, 1.442695
    %v670 = vpow.pop %v669
    %v671 = vmul.f32 %v661, 1.442695
    %v672 = vpow.pop %v671
    %v673 = vmul.f32 %v662, 1.442695
    %v674 = vpow.pop %v673
    %v675 = vmul.f32 %v663, 1.442695
    %v676 = vpow.pop %v675
    %v677 = vmul.f32 %v664, 1.442695
    %v678 = vpow.pop %v677
    %v679 = vmul.f32 %v665, 1.442695
    %v680 = vpow.pop %v679
    %v681 = vmul.f32 %v666, 1.442695
    %v682 = vpow.pop %v681
    %v683 = vadd.f32 %v668, 1.0
    %v684 = vadd.f32 %v670, 1.0
    %v685 = vadd.f32 %v672, 1.0
    %v686 = vadd.f32 %v674, 1.0
    %v687 = vadd.f32 %v676, 1.0
    %v688 = vadd.f32 %v678, 1.0
    %v689 = vadd.f32 %v680, 1.0
    %v690 = vadd.f32 %v682, 1.0
    %v691 = vrcp.pop %v683
    %v692 = vmul.f32 1.0, %v691
    %v693 = vrcp.pop %v684
    %v694 = vmul.f32 1.0, %v693
    %v695 = vrcp.pop %v685
    %v696 = vmul.f32 1.0, %v695
    %v697 = vrcp.pop %v686
    %v698 = vmul.f32 1.0, %v697
    %v699 = vrcp.pop %v687
    %v700 = vmul.f32 1.0, %v699
    %v701 = vrcp.pop %v688
    %v702 = vmul.f32 1.0, %v701
    %v703 = vrcp.pop %v689
    %v704 = vmul.f32 1.0, %v703
    %v705 = vrcp.pop %v690
    %v706 = vmul.f32 1.0, %v705
    %v707 = vadd.f32 %v588, %v433
    %v709 = vcombine.high %v707, %v707
    %v711 = vunpack.c.l.s4 1966171168
    %v712 = vunpack.c.0.s8 %v711
    %v713 = vlaneseq
    %v714 = vshrl.u32 %v713, 7
    %v715 = vsub.s32 %v712, %v714
    %v716 = vrot.slane %v707, %v715
    %v718 = vunpack.c.l.s4 1966171168
    %v719 = vunpack.c.0.s8 %v718
    %v720 = vlaneseq
    %v721 = vshrl.u32 %v720, 7
    %v722 = vsub.s32 %v719, %v721
    %v723 = vrot.slane %v709, %v722
    %v724 = vcombine.high %v716, %v716
    %v725 = vcombine.high %v723, %v723
    %v727 = vunpack.c.l.s4 1966171168
    %v728 = vunpack.c.0.s8 %v727
    %v729 = vlaneseq
    %v730 = vshrl.u32 %v729, 7
    %v731 = vsub.s32 %v728, %v730
    %v732 = vrot.slane %v716, %v731
    %v734 = vunpack.c.l.s4 1966171168
    %v735 = vunpack.c.0.s8 %v734
    %v736 = vlaneseq
    %v737 = vshrl.u32 %v736, 7
    %v738 = vsub.s32 %v735, %v737
    %v739 = vrot.slane %v723, %v738
    %v741 = vunpack.c.l.s4 1966171168
    %v742 = vunpack.c.0.s8 %v741
    %v743 = vlaneseq
    %v744 = vshrl.u32 %v743, 7
    %v745 = vsub.s32 %v742, %v744
    %v746 = vrot.slane %v724, %v745
    %v748 = vunpack.c.l.s4 1966171168
    %v749 = vunpack.c.0.s8 %v748
    %v750 = vlaneseq
    %v751 = vshrl.u32 %v750, 7
    %v752 = vsub.s32 %v749, %v751
    %v753 = vrot.slane %v725, %v752
    %v754 = vcombine.high %v732, %v732
    %v755 = vcombine.high %v739, %v739
    %v756 = vcombine.high %v746, %v746
    %v757 = vcombine.high %v753, %v753
    %v766 = vmul.f32 %v692, %v732
    %v767 = vmul.f32 %v694, %v746
    %v768 = vmul.f32 %v696, %v754
    %v769 = vmul.f32 %v698, %v756
    %v770 = vmul.f32 %v700, %v739
    %v771 = vmul.f32 %v702, %v753
    %v772 = vmul.f32 %v704, %v755
    %v773 = vmul.f32 %v706, %v757
    %v782 = vrot.slane %v435, 2
    %v783 = vrot.slane %v437, 2
    %v784 = vrot.slane %v439, 2
    %v785 = vrot.slane %v441, 2
    %v786 = vrot.slane %v443, 2
    %v787 = vrot.slane %v445, 2
    %v788 = vrot.slane %v447, 2
    %v789 = vrot.slane %v449, 2
    %v798 = vadd.f32 %v782, %v766
    %v799 = vadd.f32 %v783, %v767
    %v800 = vadd.f32 %v784, %v768
    %v801 = vadd.f32 %v785, %v769
    %v802 = vadd.f32 %v786, %v770
    %v803 = vadd.f32 %v787, %v771
    %v804 = vadd.f32 %v788, %v772
    %v805 = vadd.f32 %v789, %v773
    %v806 = vtanh.pop %v798
    %v807 = vtanh.pop %v799
    %v808 = vtanh.pop %v800
    %v809 = vtanh.pop %v801
    %v810 = vtanh.pop %v802
    %v811 = vtanh.pop %v803
    %v812 = vtanh.pop %v804
    %v813 = vtanh.pop %v805
    %v822 = vrot.slane %v692, 1
    %v823 = vrot.slane %v694, 1
    %v824 = vrot.slane %v696, 1
    %v825 = vrot.slane %v698, 1
    %v826 = vrot.slane %v700, 1
    %v827 = vrot.slane %v702, 1
    %v828 = vrot.slane %v704, 1
    %v829 = vrot.slane %v706, 1
    %v838 = vsub.f32 1.0, %v822
    %v839 = vsub.f32 1.0, %v823
    %v840 = vsub.f32 1.0, %v824
    %v841 = vsub.f32 1.0, %v825
    %v842 = vsub.f32 1.0, %v826
    %v843 = vsub.f32 1.0, %v827
    %v844 = vsub.f32 1.0, %v828
    %v845 = vsub.f32 1.0, %v829
    %v846 = vmul.f32 %v838, %v806
    %v847 = vmul.f32 %v839, %v807
    %v848 = vmul.f32 %v840, %v808
    %v849 = vmul.f32 %v841, %v809
    %v850 = vmul.f32 %v842, %v810
    %v851 = vmul.f32 %v843, %v811
    %v852 = vmul.f32 %v844, %v812
    %v853 = vmul.f32 %v845, %v813
    %v854 = vmul.f32 %v822, 0.0
    %v855 = vmul.f32 %v823, 0.0
    %v856 = vmul.f32 %v824, 0.0
    %v857 = vmul.f32 %v825, 0.0
    %v858 = vmul.f32 %v826, 0.0
    %v859 = vmul.f32 %v827, 0.0
    %v860 = vmul.f32 %v828, 0.0
    %v861 = vmul.f32 %v829, 0.0
    %v862 = vadd.f32 %v846, %v854
    %v863 = vadd.f32 %v847, %v855
    %v864 = vadd.f32 %v848, %v856
    %v865 = vadd.f32 %v849, %v857
    %v866 = vadd.f32 %v850, %v858
    %v867 = vadd.f32 %v851, %v859
    %v868 = vadd.f32 %v852, %v860
    %v869 = vadd.f32 %v853, %v861
    %s870 = scalar_lea.vmem [#allocation2], 1
    %v871 = vld [vmem:[%s870] ss:$8 sm:$0x7]
    %s872 = scalar_lea.vmem [#allocation2], 25
    %v873 = vld [vmem:[%s872] ss:$8 sm:$0x7]
    %s874 = scalar_lea.vmem [#allocation2], 49
    %v875 = vld [vmem:[%s874] ss:$8 sm:$0x7]
    %s876 = scalar_lea.vmem [#allocation2], 73
    %v877 = vld [vmem:[%s876] ss:$8 sm:$0x7]
    %s878 = scalar_lea.vmem [#allocation2], 97
    %v879 = vld [vmem:[%s878] ss:$8 sm:$0x7]
    %s880 = scalar_lea.vmem [#allocation2], 121
    %v881 = vld [vmem:[%s880] ss:$8 sm:$0x7]
    %s882 = scalar_lea.vmem [#allocation2], 145
    %v883 = vld [vmem:[%s882] ss:$8 sm:$0x7]
    %s884 = scalar_lea.vmem [#allocation2], 169
    %v885 = vld [vmem:[%s884] ss:$8 sm:$0x7]
    %v894 = vcombine.low %v862, %v863
    %v895 = vcombine.low %v864, %v865
    %v896 = vcombine.low %v866, %v867
    %v897 = vcombine.low %v868, %v869
    %v899 = vunpack.c.l.s4 1966171168
    %v900 = vunpack.c.0.s8 %v899
    %v901 = vlaneseq
    %v902 = vshrl.u32 %v901, 7
    %v903 = vsub.s32 %v900, %v902
    %v904 = vrot.slane %v894, %v903
    %v906 = vunpack.c.l.s4 1966171168
    %v907 = vunpack.c.0.s8 %v906
    %v908 = vlaneseq
    %v909 = vshrl.u32 %v908, 7
    %v910 = vsub.s32 %v907, %v909
    %v911 = vrot.slane %v895, %v910
    %v913 = vunpack.c.l.s4 1966171168
    %v914 = vunpack.c.0.s8 %v913
    %v915 = vlaneseq
    %v916 = vshrl.u32 %v915, 7
    %v917 = vsub.s32 %v914, %v916
    %v918 = vrot.slane %v896, %v917
    %v920 = vunpack.c.l.s4 1966171168
    %v921 = vunpack.c.0.s8 %v920
    %v922 = vlaneseq
    %v923 = vshrl.u32 %v922, 7
    %v924 = vsub.s32 %v921, %v923
    %v925 = vrot.slane %v897, %v924
    %v926 = vcombine.low %v904, %v911
    %v927 = vcombine.low %v918, %v925
    %v929 = vunpack.c.l.s4 1966171168
    %v930 = vunpack.c.0.s8 %v929
    %v931 = vlaneseq
    %v932 = vshrl.u32 %v931, 7
    %v933 = vsub.s32 %v930, %v932
    %v934 = vrot.slane %v926, %v933
    %v936 = vunpack.c.l.s4 1966171168
    %v937 = vunpack.c.0.s8 %v936
    %v938 = vlaneseq
    %v939 = vshrl.u32 %v938, 7
    %v940 = vsub.s32 %v937, %v939
    %v941 = vrot.slane %v927, %v940
    %v942 = vcombine.low %v934, %v941
    %944 = vmatprep.subr.mxu0 %v381
    %945 = vmatpush1.msra.mxu0 %v380
    %946 = vmatprep.subr.mxu0 %v384
    %947 = vmatpush1.msra.mxu0 %v383
    %948 = vmatprep.subr.mxu0 %v387
    %949 = vmatpush1.msra.mxu0 %v386
    %950 = vmatprep.subr.mxu0 %v390
    %951 = vmatpush1.msra.mxu0 %v389
    %952 = vmatprep.subr.mxu0 %v393
    %953 = vmatpush1.msra.mxu0 %v392
    %954 = vmatprep.subr.mxu0 %v396
    %955 = vmatpush1.msra.mxu0 %v395
    %956 = vmatprep.subr.mxu0 %v399
    %957 = vmatpush1.msra.mxu0 %v398
    %958 = vmatprep.subr.mxu0 %v402
    %959 = vmatpush1.msra.mxu0 %v401
    %960 = vmatprep.subr.mxu0 %v405
    %961 = vmatpush1.msra.mxu0 %v404
    %962 = vmatprep.subr.mxu0 %v408
    %963 = vmatpush1.msra.mxu0 %v407
    %964 = vmatprep.subr.mxu0 %v411
    %965 = vmatpush1.msra.mxu0 %v410
    %966 = vmatprep.subr.mxu0 %v414
    %967 = vmatpush1.msra.mxu0 %v413
    %968 = vmatprep.subr.mxu0 %v417
    %969 = vmatpush1.msra.mxu0 %v416
    %970 = vmatprep.subr.mxu0 %v420
    %971 = vmatpush1.msra.mxu0 %v419
    %972 = vmatprep.subr.mxu0 %v423
    %973 = vmatpush1.msra.mxu0 %v422
    %974 = vmatprep.subr.mxu0 %v426
    %975 = vmatpush1.msra.mxu0 %v425
    %976 = vmatprep.subr.mxu0 0.0
    %977 = vmatpush1.msra.mxu0 0.0
    %978 = vmatprep.subr.mxu0 0.0
    %979 = vmatpush1.msra.mxu0 0.0
    %980 = vmatprep.subr.mxu0 0.0
    %981 = vmatpush1.msra.mxu0 0.0
    %982 = vmatprep.subr.mxu0 0.0
    %983 = vmatpush1.msra.mxu0 0.0
    %984 = vmatprep.subr.mxu0 0.0
    %985 = vmatpush1.msra.mxu0 0.0
    %986 = vmatprep.subr.mxu0 0.0
    %987 = vmatpush1.msra.mxu0 0.0
    %988 = vmatprep.subr.mxu0 0.0
    %989 = vmatpush1.msra.mxu0 0.0
    %990 = vmatprep.subr.mxu0 0.0
    %991 = vmatpush1.msra.mxu0 0.0
    %992 = vmatprep.subr.mxu0 0.0
    %993 = vmatpush1.msra.mxu0 0.0
    %994 = vmatprep.subr.mxu0 0.0
    %995 = vmatpush1.msra.mxu0 0.0
    %996 = vmatprep.subr.mxu0 0.0
    %997 = vmatpush1.msra.mxu0 0.0
    %998 = vmatprep.subr.mxu0 0.0
    %999 = vmatpush1.msra.mxu0 0.0
    %1000 = vmatprep.subr.mxu0 0.0
    %1001 = vmatpush1.msra.mxu0 0.0
    %1002 = vmatprep.subr.mxu0 0.0
    %1003 = vmatpush1.msra.mxu0 0.0
    %1004 = vmatprep.subr.mxu0 0.0
    %1005 = vmatpush1.msra.mxu0 0.0
    %1006 = vmatprep.subr.mxu0 0.0
    %1007 = vmatpush1.msra.mxu0 0.0
    %1008 = vmatprep.mubr.f32.mxu0 0.0
    %1009 = vmatmul.mubr.f32.gmra.mrb[0].mxu0 %v942
    %v1010 = vpop.f32.mrb[0].mxu0
    %v1011 = vadd.f32 0.0, %v1010
    %v1012 = vpop.f32.mrb[0].mxu0
    %v1013 = vadd.f32 0.0, %v1012
    %1014 = vdwg.mxu0
    %1015 = vmatprep.subr.mxu0 0.0
    %1016 = vmatpush1.msra.mxu0 %v382
    %1017 = vmatprep.subr.mxu0 0.0
    %1018 = vmatpush1.msra.mxu0 %v385
    %1019 = vmatprep.subr.mxu0 0.0
    %1020 = vmatpush1.msra.mxu0 %v388
    %1021 = vmatprep.subr.mxu0 0.0
    %1022 = vmatpush1.msra.mxu0 %v391
    %1023 = vmatprep.subr.mxu0 0.0
    %1024 = vmatpush1.msra.mxu0 %v394
    %1025 = vmatprep.subr.mxu0 0.0
    %1026 = vmatpush1.msra.mxu0 %v397
    %1027 = vmatprep.subr.mxu0 0.0
    %1028 = vmatpush1.msra.mxu0 %v400
    %1029 = vmatprep.subr.mxu0 0.0
    %1030 = vmatpush1.msra.mxu0 %v403
    %1031 = vmatprep.subr.mxu0 0.0
    %1032 = vmatpush1.msra.mxu0 %v406
    %1033 = vmatprep.subr.mxu0 0.0
    %1034 = vmatpush1.msra.mxu0 %v409
    %1035 = vmatprep.subr.mxu0 0.0
    %1036 = vmatpush1.msra.mxu0 %v412
    %1037 = vmatprep.subr.mxu0 0.0
    %1038 = vmatpush1.msra.mxu0 %v415
    %1039 = vmatprep.subr.mxu0 0.0
    %1040 = vmatpush1.msra.mxu0 %v418
    %1041 = vmatprep.subr.mxu0 0.0
    %1042 = vmatpush1.msra.mxu0 %v421
    %1043 = vmatprep.subr.mxu0 0.0
    %1044 = vmatpush1.msra.mxu0 %v424
    %1045 = vmatprep.subr.mxu0 0.0
    %1046 = vmatpush1.msra.mxu0 %v427
    %1047 = vmatprep.subr.mxu0 0.0
    %1048 = vmatpush1.msra.mxu0 0.0
    %1049 = vmatprep.subr.mxu0 0.0
    %1050 = vmatpush1.msra.mxu0 0.0
    %1051 = vmatprep.subr.mxu0 0.0
    %1052 = vmatpush1.msra.mxu0 0.0
    %1053 = vmatprep.subr.mxu0 0.0
    %1054 = vmatpush1.msra.mxu0 0.0
    %1055 = vmatprep.subr.mxu0 0.0
    %1056 = vmatpush1.msra.mxu0 0.0
    %1057 = vmatprep.subr.mxu0 0.0
    %1058 = vmatpush1.msra.mxu0 0.0
    %1059 = vmatprep.subr.mxu0 0.0
    %1060 = vmatpush1.msra.mxu0 0.0
    %1061 = vmatprep.subr.mxu0 0.0
    %1062 = vmatpush1.msra.mxu0 0.0
    %1063 = vmatprep.subr.mxu0 0.0
    %1064 = vmatpush1.msra.mxu0 0.0
    %1065 = vmatprep.subr.mxu0 0.0
    %1066 = vmatpush1.msra.mxu0 0.0
    %1067 = vmatprep.subr.mxu0 0.0
    %1068 = vmatpush1.msra.mxu0 0.0
    %1069 = vmatprep.subr.mxu0 0.0
    %1070 = vmatpush1.msra.mxu0 0.0
    %1071 = vmatprep.subr.mxu0 0.0
    %1072 = vmatpush1.msra.mxu0 0.0
    %1073 = vmatprep.subr.mxu0 0.0
    %1074 = vmatpush1.msra.mxu0 0.0
    %1075 = vmatprep.subr.mxu0 0.0
    %1076 = vmatpush1.msra.mxu0 0.0
    %1077 = vmatprep.subr.mxu0 0.0
    %1078 = vmatpush1.msra.mxu0 0.0
    %1079 = vmatprep.mubr.f32.mxu0 0.0
    %1080 = vmatmul.mubr.f32.gmra.mrb[0].mxu0 %v942
    %v1081 = vpop.f32.mrb[0].mxu0
    %v1082 = vadd.f32 0.0, %v1081
    %v1083 = vpop.f32.mrb[0].mxu0
    %1084 = vdwg.mxu0
    %v1087 = vcombine.low %v1011, %v1013
    %v1088 = vcombine.high %v1011, %v1013
    %v1090 = vunpack.c.l.s4 1966171168
    %v1091 = vunpack.c.0.s8 %v1090
    %v1092 = vlaneseq
    %v1093 = vshrl.u32 %v1092, 7
    %v1094 = vsub.s32 %v1091, %v1093
    %v1095 = vrot.slane %v1087, %v1094
    %v1097 = vunpack.c.l.s4 1966171168
    %v1098 = vunpack.c.0.s8 %v1097
    %v1099 = vlaneseq
    %v1100 = vshrl.u32 %v1099, 7
    %v1101 = vsub.s32 %v1098, %v1100
    %v1102 = vrot.slane %v1088, %v1101
    %v1103 = vcombine.high %v1095, %v1095
    %v1104 = vcombine.high %v1102, %v1102
    %v1106 = vunpack.c.l.s4 1966171168
    %v1107 = vunpack.c.0.s8 %v1106
    %v1108 = vlaneseq
    %v1109 = vshrl.u32 %v1108, 7
    %v1110 = vsub.s32 %v1107, %v1109
    %v1111 = vrot.slane %v1095, %v1110
    %v1113 = vunpack.c.l.s4 1966171168
    %v1114 = vunpack.c.0.s8 %v1113
    %v1115 = vlaneseq
    %v1116 = vshrl.u32 %v1115, 7
    %v1117 = vsub.s32 %v1114, %v1116
    %v1118 = vrot.slane %v1102, %v1117
    %v1120 = vunpack.c.l.s4 1966171168
    %v1121 = vunpack.c.0.s8 %v1120
    %v1122 = vlaneseq
    %v1123 = vshrl.u32 %v1122, 7
    %v1124 = vsub.s32 %v1121, %v1123
    %v1125 = vrot.slane %v1103, %v1124
    %v1127 = vunpack.c.l.s4 1966171168
    %v1128 = vunpack.c.0.s8 %v1127
    %v1129 = vlaneseq
    %v1130 = vshrl.u32 %v1129, 7
    %v1131 = vsub.s32 %v1128, %v1130
    %v1132 = vrot.slane %v1104, %v1131
    %v1133 = vcombine.high %v1111, %v1111
    %v1134 = vcombine.high %v1118, %v1118
    %v1135 = vcombine.high %v1125, %v1125
    %v1136 = vcombine.high %v1132, %v1132
    %v1145 = vadd.f32 %v871, %v1111
    %v1146 = vadd.f32 %v873, %v1125
    %v1147 = vadd.f32 %v875, %v1133
    %v1148 = vadd.f32 %v877, %v1135
    %v1149 = vadd.f32 %v879, %v1118
    %v1150 = vadd.f32 %v881, %v1132
    %v1151 = vadd.f32 %v883, %v1134
    %v1152 = vadd.f32 %v885, %v1136
    %v1153 = vxor.u32 %v1145, 2147483648
    %v1154 = vxor.u32 %v1146, 2147483648
    %v1155 = vxor.u32 %v1147, 2147483648
    %v1156 = vxor.u32 %v1148, 2147483648
    %v1157 = vxor.u32 %v1149, 2147483648
    %v1158 = vxor.u32 %v1150, 2147483648
    %v1159 = vxor.u32 %v1151, 2147483648
    %v1160 = vxor.u32 %v1152, 2147483648
    %v1161 = vmul.f32 %v1153, 1.442695
    %v1162 = vpow.pop %v1161
    %v1163 = vmul.f32 %v1154, 1.442695
    %v1164 = vpow.pop %v1163
    %v1165 = vmul.f32 %v1155, 1.442695
    %v1166 = vpow.pop %v1165
    %v1167 = vmul.f32 %v1156, 1.442695
    %v1168 = vpow.pop %v1167
    %v1169 = vmul.f32 %v1157, 1.442695
    %v1170 = vpow.pop %v1169
    %v1171 = vmul.f32 %v1158, 1.442695
    %v1172 = vpow.pop %v1171
    %v1173 = vmul.f32 %v1159, 1.442695
    %v1174 = vpow.pop %v1173
    %v1175 = vmul.f32 %v1160, 1.442695
    %v1176 = vpow.pop %v1175
    %v1177 = vadd.f32 %v1162, 1.0
    %v1178 = vadd.f32 %v1164, 1.0
    %v1179 = vadd.f32 %v1166, 1.0
    %v1180 = vadd.f32 %v1168, 1.0
    %v1181 = vadd.f32 %v1170, 1.0
    %v1182 = vadd.f32 %v1172, 1.0
    %v1183 = vadd.f32 %v1174, 1.0
    %v1184 = vadd.f32 %v1176, 1.0
    %v1185 = vrcp.pop %v1177
    %v1186 = vmul.f32 1.0, %v1185
    %v1187 = vrcp.pop %v1178
    %v1188 = vmul.f32 1.0, %v1187
    %v1189 = vrcp.pop %v1179
    %v1190 = vmul.f32 1.0, %v1189
    %v1191 = vrcp.pop %v1180
    %v1192 = vmul.f32 1.0, %v1191
    %v1193 = vrcp.pop %v1181
    %v1194 = vmul.f32 1.0, %v1193
    %v1195 = vrcp.pop %v1182
    %v1196 = vmul.f32 1.0, %v1195
    %v1197 = vrcp.pop %v1183
    %v1198 = vmul.f32 1.0, %v1197
    %v1199 = vrcp.pop %v1184
    %v1200 = vmul.f32 1.0, %v1199
    %v1201 = vadd.f32 %v1082, %v433
    %v1203 = vcombine.high %v1201, %v1201
    %v1205 = vunpack.c.l.s4 1966171168
    %v1206 = vunpack.c.0.s8 %v1205
    %v1207 = vlaneseq
    %v1208 = vshrl.u32 %v1207, 7
    %v1209 = vsub.s32 %v1206, %v1208
    %v1210 = vrot.slane %v1201, %v1209
    %v1212 = vunpack.c.l.s4 1966171168
    %v1213 = vunpack.c.0.s8 %v1212
    %v1214 = vlaneseq
    %v1215 = vshrl.u32 %v1214, 7
    %v1216 = vsub.s32 %v1213, %v1215
    %v1217 = vrot.slane %v1203, %v1216
    %v1218 = vcombine.high %v1210, %v1210
    %v1219 = vcombine.high %v1217, %v1217
    %v1221 = vunpack.c.l.s4 1966171168
    %v1222 = vunpack.c.0.s8 %v1221
    %v1223 = vlaneseq
    %v1224 = vshrl.u32 %v1223, 7
    %v1225 = vsub.s32 %v1222, %v1224
    %v1226 = vrot.slane %v1210, %v1225
    %v1228 = vunpack.c.l.s4 1966171168
    %v1229 = vunpack.c.0.s8 %v1228
    %v1230 = vlaneseq
    %v1231 = vshrl.u32 %v1230, 7
    %v1232 = vsub.s32 %v1229, %v1231
    %v1233 = vrot.slane %v1217, %v1232
    %v1235 = vunpack.c.l.s4 1966171168
    %v1236 = vunpack.c.0.s8 %v1235
    %v1237 = vlaneseq
    %v1238 = vshrl.u32 %v1237, 7
    %v1239 = vsub.s32 %v1236, %v1238
    %v1240 = vrot.slane %v1218, %v1239
    %v1242 = vunpack.c.l.s4 1966171168
    %v1243 = vunpack.c.0.s8 %v1242
    %v1244 = vlaneseq
    %v1245 = vshrl.u32 %v1244, 7
    %v1246 = vsub.s32 %v1243, %v1245
    %v1247 = vrot.slane %v1219, %v1246
    %v1248 = vcombine.high %v1226, %v1226
    %v1249 = vcombine.high %v1233, %v1233
    %v1250 = vcombine.high %v1240, %v1240
    %v1251 = vcombine.high %v1247, %v1247
    %v1260 = vmul.f32 %v1186, %v1226
    %v1261 = vmul.f32 %v1188, %v1240
    %v1262 = vmul.f32 %v1190, %v1248
    %v1263 = vmul.f32 %v1192, %v1250
    %v1264 = vmul.f32 %v1194, %v1233
    %v1265 = vmul.f32 %v1196, %v1247
    %v1266 = vmul.f32 %v1198, %v1249
    %v1267 = vmul.f32 %v1200, %v1251
    %v1276 = vrot.slane %v871, 2
    %v1277 = vrot.slane %v873, 2
    %v1278 = vrot.slane %v875, 2
    %v1279 = vrot.slane %v877, 2
    %v1280 = vrot.slane %v879, 2
    %v1281 = vrot.slane %v881, 2
    %v1282 = vrot.slane %v883, 2
    %v1283 = vrot.slane %v885, 2
    %v1292 = vadd.f32 %v1276, %v1260
    %v1293 = vadd.f32 %v1277, %v1261
    %v1294 = vadd.f32 %v1278, %v1262
    %v1295 = vadd.f32 %v1279, %v1263
    %v1296 = vadd.f32 %v1280, %v1264
    %v1297 = vadd.f32 %v1281, %v1265
    %v1298 = vadd.f32 %v1282, %v1266
    %v1299 = vadd.f32 %v1283, %v1267
    %v1300 = vtanh.pop %v1292
    %v1301 = vtanh.pop %v1293
    %v1302 = vtanh.pop %v1294
    %v1303 = vtanh.pop %v1295
    %v1304 = vtanh.pop %v1296
    %v1305 = vtanh.pop %v1297
    %v1306 = vtanh.pop %v1298
    %v1307 = vtanh.pop %v1299
    %v1316 = vrot.slane %v1186, 1
    %v1317 = vrot.slane %v1188, 1
    %v1318 = vrot.slane %v1190, 1
    %v1319 = vrot.slane %v1192, 1
    %v1320 = vrot.slane %v1194, 1
    %v1321 = vrot.slane %v1196, 1
    %v1322 = vrot.slane %v1198, 1
    %v1323 = vrot.slane %v1200, 1
    %v1332 = vsub.f32 1.0, %v1316
    %v1333 = vsub.f32 1.0, %v1317
    %v1334 = vsub.f32 1.0, %v1318
    %v1335 = vsub.f32 1.0, %v1319
    %v1336 = vsub.f32 1.0, %v1320
    %v1337 = vsub.f32 1.0, %v1321
    %v1338 = vsub.f32 1.0, %v1322
    %v1339 = vsub.f32 1.0, %v1323
    %v1340 = vmul.f32 %v1332, %v1300
    %v1341 = vmul.f32 %v1333, %v1301
    %v1342 = vmul.f32 %v1334, %v1302
    %v1343 = vmul.f32 %v1335, %v1303
    %v1344 = vmul.f32 %v1336, %v1304
    %v1345 = vmul.f32 %v1337, %v1305
    %v1346 = vmul.f32 %v1338, %v1306
    %v1347 = vmul.f32 %v1339, %v1307
    %v1348 = vmul.f32 %v1316, %v862
    %v1349 = vmul.f32 %v1317, %v863
    %v1350 = vmul.f32 %v1318, %v864
    %v1351 = vmul.f32 %v1319, %v865
    %v1352 = vmul.f32 %v1320, %v866
    %v1353 = vmul.f32 %v1321, %v867
    %v1354 = vmul.f32 %v1322, %v868
    %v1355 = vmul.f32 %v1323, %v869
    %v1356 = vadd.f32 %v1340, %v1348
    %v1357 = vadd.f32 %v1341, %v1349
    %v1358 = vadd.f32 %v1342, %v1350
    %v1359 = vadd.f32 %v1343, %v1351
    %v1360 = vadd.f32 %v1344, %v1352
    %v1361 = vadd.f32 %v1345, %v1353
    %v1362 = vadd.f32 %v1346, %v1354
    %v1363 = vadd.f32 %v1347, %v1355
    %s1364 = scalar_lea.vmem [#allocation2], 2
    %v1365 = vld [vmem:[%s1364] ss:$8 sm:$0x7]
    %s1366 = scalar_lea.vmem [#allocation2], 26
    %v1367 = vld [vmem:[%s1366] ss:$8 sm:$0x7]
    %s1368 = scalar_lea.vmem [#allocation2], 50
    %v1369 = vld [vmem:[%s1368] ss:$8 sm:$0x7]
    %s1370 = scalar_lea.vmem [#allocation2], 74
    %v1371 = vld [vmem:[%s1370] ss:$8 sm:$0x7]
    %s1372 = scalar_lea.vmem [#allocation2], 98
    %v1373 = vld [vmem:[%s1372] ss:$8 sm:$0x7]
    %s1374 = scalar_lea.vmem [#allocation2], 122
    %v1375 = vld [vmem:[%s1374] ss:$8 sm:$0x7]
    %s1376 = scalar_lea.vmem [#allocation2], 146
    %v1377 = vld [vmem:[%s1376] ss:$8 sm:$0x7]
    %s1378 = scalar_lea.vmem [#allocation2], 170
    %v1379 = vld [vmem:[%s1378] ss:$8 sm:$0x7]
    %v1388 = vcombine.low %v1356, %v1357
    %v1389 = vcombine.low %v1358, %v1359
    %v1390 = vcombine.low %v1360, %v1361
    %v1391 = vcombine.low %v1362, %v1363
    %v1393 = vunpack.c.l.s4 1966171168
    %v1394 = vunpack.c.0.s8 %v1393
    %v1395 = vlaneseq
    %v1396 = vshrl.u32 %v1395, 7
    %v1397 = vsub.s32 %v1394, %v1396
    %v1398 = vrot.slane %v1388, %v1397
    %v1400 = vunpack.c.l.s4 1966171168
    %v1401 = vunpack.c.0.s8 %v1400
    %v1402 = vlaneseq
    %v1403 = vshrl.u32 %v1402, 7
    %v1404 = vsub.s32 %v1401, %v1403
    %v1405 = vrot.slane %v1389, %v1404
    %v1407 = vunpack.c.l.s4 1966171168
    %v1408 = vunpack.c.0.s8 %v1407
    %v1409 = vlaneseq
    %v1410 = vshrl.u32 %v1409, 7
    %v1411 = vsub.s32 %v1408, %v1410
    %v1412 = vrot.slane %v1390, %v1411
    %v1414 = vunpack.c.l.s4 1966171168
    %v1415 = vunpack.c.0.s8 %v1414
    %v1416 = vlaneseq
    %v1417 = vshrl.u32 %v1416, 7
    %v1418 = vsub.s32 %v1415, %v1417
    %v1419 = vrot.slane %v1391, %v1418
    %v1420 = vcombine.low %v1398, %v1405
    %v1421 = vcombine.low %v1412, %v1419
    %v1423 = vunpack.c.l.s4 1966171168
    %v1424 = vunpack.c.0.s8 %v1423
    %v1425 = vlaneseq
    %v1426 = vshrl.u32 %v1425, 7
    %v1427 = vsub.s32 %v1424, %v1426
    %v1428 = vrot.slane %v1420, %v1427
    %v1430 = vunpack.c.l.s4 1966171168
    %v1431 = vunpack.c.0.s8 %v1430
    %v1432 = vlaneseq
    %v1433 = vshrl.u32 %v1432, 7
    %v1434 = vsub.s32 %v1431, %v1433
    %v1435 = vrot.slane %v1421, %v1434
    %v1436 = vcombine.low %v1428, %v1435
    %1438 = vmatprep.subr.mxu0 %v381
    %1439 = vmatpush1.msra.mxu0 %v380
    %1440 = vmatprep.subr.mxu0 %v384
    %1441 = vmatpush1.msra.mxu0 %v383
    %1442 = vmatprep.subr.mxu0 %v387
    %1443 = vmatpush1.msra.mxu0 %v386
    %1444 = vmatprep.subr.mxu0 %v390
    %1445 = vmatpush1.msra.mxu0 %v389
    %1446 = vmatprep.subr.mxu0 %v393
    %1447 = vmatpush1.msra.mxu0 %v392
    %1448 = vmatprep.subr.mxu0 %v396
    %1449 = vmatpush1.msra.mxu0 %v395
    %1450 = vmatprep.subr.mxu0 %v399
    %1451 = vmatpush1.msra.mxu0 %v398
    %1452 = vmatprep.subr.mxu0 %v402
    %1453 = vmatpush1.msra.mxu0 %v401
    %1454 = vmatprep.subr.mxu0 %v405
    %1455 = vmatpush1.msra.mxu0 %v404
    %1456 = vmatprep.subr.mxu0 %v408
    %1457 = vmatpush1.msra.mxu0 %v407
    %1458 = vmatprep.subr.mxu0 %v411
    %1459 = vmatpush1.msra.mxu0 %v410
    %1460 = vmatprep.subr.mxu0 %v414
    %1461 = vmatpush1.msra.mxu0 %v413
    %1462 = vmatprep.subr.mxu0 %v417
    %1463 = vmatpush1.msra.mxu0 %v416
    %1464 = vmatprep.subr.mxu0 %v420
    %1465 = vmatpush1.msra.mxu0 %v419
    %1466 = vmatprep.subr.mxu0 %v423
    %1467 = vmatpush1.msra.mxu0 %v422
    %1468 = vmatprep.subr.mxu0 %v426
    %1469 = vmatpush1.msra.mxu0 %v425
    %1470 = vmatprep.subr.mxu0 0.0
    %1471 = vmatpush1.msra.mxu0 0.0
    %1472 = vmatprep.subr.mxu0 0.0
    %1473 = vmatpush1.msra.mxu0 0.0
    %1474 = vmatprep.subr.mxu0 0.0
    %1475 = vmatpush1.msra.mxu0 0.0
    %1476 = vmatprep.subr.mxu0 0.0
    %1477 = vmatpush1.msra.mxu0 0.0
    %1478 = vmatprep.subr.mxu0 0.0
    %1479 = vmatpush1.msra.mxu0 0.0
    %1480 = vmatprep.subr.mxu0 0.0
    %1481 = vmatpush1.msra.mxu0 0.0
    %1482 = vmatprep.subr.mxu0 0.0
    %1483 = vmatpush1.msra.mxu0 0.0
    %1484 = vmatprep.subr.mxu0 0.0
    %1485 = vmatpush1.msra.mxu0 0.0
    %1486 = vmatprep.subr.mxu0 0.0
    %1487 = vmatpush1.msra.mxu0 0.0
    %1488 = vmatprep.subr.mxu0 0.0
    %1489 = vmatpush1.msra.mxu0 0.0
    %1490 = vmatprep.subr.mxu0 0.0
    %1491 = vmatpush1.msra.mxu0 0.0
    %1492 = vmatprep.subr.mxu0 0.0
    %1493 = vmatpush1.msra.mxu0 0.0
    %1494 = vmatprep.subr.mxu0 0.0
    %1495 = vmatpush1.msra.mxu0 0.0
    %1496 = vmatprep.subr.mxu0 0.0
    %1497 = vmatpush1.msra.mxu0 0.0
    %1498 = vmatprep.subr.mxu0 0.0
    %1499 = vmatpush1.msra.mxu0 0.0
    %1500 = vmatprep.subr.mxu0 0.0
    %1501 = vmatpush1.msra.mxu0 0.0
    %1502 = vmatprep.mubr.f32.mxu0 0.0
    %1503 = vmatmul.mubr.f32.gmra.mrb[0].mxu0 %v1436
    %v1504 = vpop.f32.mrb[0].mxu0
    %v1505 = vadd.f32 0.0, %v1504
    %v1506 = vpop.f32.mrb[0].mxu0
    %v1507 = vadd.f32 0.0, %v1506
    %1508 = vdwg.mxu0
    %1509 = vmatprep.subr.mxu0 0.0
    %1510 = vmatpush1.msra.mxu0 %v382
    %1511 = vmatprep.subr.mxu0 0.0
    %1512 = vmatpush1.msra.mxu0 %v385
    %1513 = vmatprep.subr.mxu0 0.0
    %1514 = vmatpush1.msra.mxu0 %v388
    %1515 = vmatprep.subr.mxu0 0.0
    %1516 = vmatpush1.msra.mxu0 %v391
    %1517 = vmatprep.subr.mxu0 0.0
    %1518 = vmatpush1.msra.mxu0 %v394
    %1519 = vmatprep.subr.mxu0 0.0
    %1520 = vmatpush1.msra.mxu0 %v397
    %1521 = vmatprep.subr.mxu0 0.0
    %1522 = vmatpush1.msra.mxu0 %v400
    %1523 = vmatprep.subr.mxu0 0.0
    %1524 = vmatpush1.msra.mxu0 %v403
    %1525 = vmatprep.subr.mxu0 0.0
    %1526 = vmatpush1.msra.mxu0 %v406
    %1527 = vmatprep.subr.mxu0 0.0
    %1528 = vmatpush1.msra.mxu0 %v409
    %1529 = vmatprep.subr.mxu0 0.0
    %1530 = vmatpush1.msra.mxu0 %v412
    %1531 = vmatprep.subr.mxu0 0.0
    %1532 = vmatpush1.msra.mxu0 %v415
    %1533 = vmatprep.subr.mxu0 0.0
    %1534 = vmatpush1.msra.mxu0 %v418
    %1535 = vmatprep.subr.mxu0 0.0
    %1536 = vmatpush1.msra.mxu0 %v421
    %1537 = vmatprep.subr.mxu0 0.0
    %1538 = vmatpush1.msra.mxu0 %v424
    %1539 = vmatprep.subr.mxu0 0.0
    %1540 = vmatpush1.msra.mxu0 %v427
    %1541 = vmatprep.subr.mxu0 0.0
    %1542 = vmatpush1.msra.mxu0 0.0
    %1543 = vmatprep.subr.mxu0 0.0
    %1544 = vmatpush1.msra.mxu0 0.0
    %1545 = vmatprep.subr.mxu0 0.0
    %1546 = vmatpush1.msra.mxu0 0.0
    %1547 = vmatprep.subr.mxu0 0.0
    %1548 = vmatpush1.msra.mxu0 0.0
    %1549 = vmatprep.subr.mxu0 0.0
    %1550 = vmatpush1.msra.mxu0 0.0
    %1551 = vmatprep.subr.mxu0 0.0
    %1552 = vmatpush1.msra.mxu0 0.0
    %1553 = vmatprep.subr.mxu0 0.0
    %1554 = vmatpush1.msra.mxu0 0.0
    %1555 = vmatprep.subr.mxu0 0.0
    %1556 = vmatpush1.msra.mxu0 0.0
    %1557 = vmatprep.subr.mxu0 0.0
    %1558 = vmatpush1.msra.mxu0 0.0
    %1559 = vmatprep.subr.mxu0 0.0
    %1560 = vmatpush1.msra.mxu0 0.0
    %1561 = vmatprep.subr.mxu0 0.0
    %1562 = vmatpush1.msra.mxu0 0.0
    %1563 = vmatprep.subr.mxu0 0.0
    %1564 = vmatpush1.msra.mxu0 0.0
    %1565 = vmatprep.subr.mxu0 0.0
    %1566 = vmatpush1.msra.mxu0 0.0
    %1567 = vmatprep.subr.mxu0 0.0
    %1568 = vmatpush1.msra.mxu0 0.0
    %1569 = vmatprep.subr.mxu0 0.0
    %1570 = vmatpush1.msra.mxu0 0.0
    %1571 = vmatprep.subr.mxu0 0.0
    %1572 = vmatpush1.msra.mxu0 0.0
    %1573 = vmatprep.mubr.f32.mxu0 0.0
    %1574 = vmatmul.mubr.f32.gmra.mrb[0].mxu0 %v1436
    %v1575 = vpop.f32.mrb[0].mxu0
    %v1576 = vadd.f32 0.0, %v1575
    %v1577 = vpop.f32.mrb[0].mxu0
    %1578 = vdwg.mxu0
    %v1581 = vcombine.low %v1505, %v1507
    %v1582 = vcombine.high %v1505, %v1507
    %v1584 = vunpack.c.l.s4 1966171168
    %v1585 = vunpack.c.0.s8 %v1584
    %v1586 = vlaneseq
    %v1587 = vshrl.u32 %v1586, 7
    %v1588 = vsub.s32 %v1585, %v1587
    %v1589 = vrot.slane %v1581, %v1588
    %v1591 = vunpack.c.l.s4 1966171168
    %v1592 = vunpack.c.0.s8 %v1591
    %v1593 = vlaneseq
    %v1594 = vshrl.u32 %v1593, 7
    %v1595 = vsub.s32 %v1592, %v1594
    %v1596 = vrot.slane %v1582, %v1595
    %v1597 = vcombine.high %v1589, %v1589
    %v1598 = vcombine.high %v1596, %v1596
    %v1600 = vunpack.c.l.s4 1966171168
    %v1601 = vunpack.c.0.s8 %v1600
    %v1602 = vlaneseq
    %v1603 = vshrl.u32 %v1602, 7
    %v1604 = vsub.s32 %v1601, %v1603
    %v1605 = vrot.slane %v1589, %v1604
    %v1607 = vunpack.c.l.s4 1966171168
    %v1608 = vunpack.c.0.s8 %v1607
    %v1609 = vlaneseq
    %v1610 = vshrl.u32 %v1609, 7
    %v1611 = vsub.s32 %v1608, %v1610
    %v1612 = vrot.slane %v1596, %v1611
    %v1614 = vunpack.c.l.s4 1966171168
    %v1615 = vunpack.c.0.s8 %v1614
    %v1616 = vlaneseq
    %v1617 = vshrl.u32 %v1616, 7
    %v1618 = vsub.s32 %v1615, %v1617
    %v1619 = vrot.slane %v1597, %v1618
    %v1621 = vunpack.c.l.s4 1966171168
    %v1622 = vunpack.c.0.s8 %v1621
    %v1623 = vlaneseq
    %v1624 = vshrl.u32 %v1623, 7
    %v1625 = vsub.s32 %v1622, %v1624
    %v1626 = vrot.slane %v1598, %v1625
    %v1627 = vcombine.high %v1605, %v1605
    %v1628 = vcombine.high %v1612, %v1612
    %v1629 = vcombine.high %v1619, %v1619
    %v1630 = vcombine.high %v1626, %v1626
    %v1639 = vadd.f32 %v1365, %v1605
    %v1640 = vadd.f32 %v1367, %v1619
    %v1641 = vadd.f32 %v1369, %v1627
    %v1642 = vadd.f32 %v1371, %v1629
    %v1643 = vadd.f32 %v1373, %v1612
    %v1644 = vadd.f32 %v1375, %v1626
    %v1645 = vadd.f32 %v1377, %v1628
    %v1646 = vadd.f32 %v1379, %v1630
    %v1647 = vxor.u32 %v1639, 2147483648
    %v1648 = vxor.u32 %v1640, 2147483648
    %v1649 = vxor.u32 %v1641, 2147483648
    %v1650 = vxor.u32 %v1642, 2147483648
    %v1651 = vxor.u32 %v1643, 2147483648
    %v1652 = vxor.u32 %v1644, 2147483648
    %v1653 = vxor.u32 %v1645, 2147483648
    %v1654 = vxor.u32 %v1646, 2147483648
    %v1655 = vmul.f32 %v1647, 1.442695
    %v1656 = vpow.pop %v1655
    %v1657 = vmul.f32 %v1648, 1.442695
    %v1658 = vpow.pop %v1657
    %v1659 = vmul.f32 %v1649, 1.442695
    %v1660 = vpow.pop %v1659
    %v1661 = vmul.f32 %v1650, 1.442695
    %v1662 = vpow.pop %v1661
    %v1663 = vmul.f32 %v1651, 1.442695
    %v1664 = vpow.pop %v1663
    %v1665 = vmul.f32 %v1652, 1.442695
    %v1666 = vpow.pop %v1665
    %v1667 = vmul.f32 %v1653, 1.442695
    %v1668 = vpow.pop %v1667
    %v1669 = vmul.f32 %v1654, 1.442695
    %v1670 = vpow.pop %v1669
    %v1671 = vadd.f32 %v1656, 1.0
    %v1672 = vadd.f32 %v1658, 1.0
    %v1673 = vadd.f32 %v1660, 1.0
    %v1674 = vadd.f32 %v1662, 1.0
    %v1675 = vadd.f32 %v1664, 1.0
    %v1676 = vadd.f32 %v1666, 1.0
    %v1677 = vadd.f32 %v1668, 1.0
    %v1678 = vadd.f32 %v1670, 1.0
    %v1679 = vrcp.pop %v1671
    %v1680 = vmul.f32 1.0, %v1679
    %v1681 = vrcp.pop %v1672
    %v1682 = vmul.f32 1.0, %v1681
    %v1683 = vrcp.pop %v1673
    %v1684 = vmul.f32 1.0, %v1683
    %v1685 = vrcp.pop %v1674
    %v1686 = vmul.f32 1.0, %v1685
    %v1687 = vrcp.pop %v1675
    %v1688 = vmul.f32 1.0, %v1687
    %v1689 = vrcp.pop %v1676
    %v1690 = vmul.f32 1.0, %v1689
    %v1691 = vrcp.pop %v1677
    %v1692 = vmul.f32 1.0, %v1691
    %v1693 = vrcp.pop %v1678
    %v1694 = vmul.f32 1.0, %v1693
    %v1695 = vadd.f32 %v1576, %v433
    %v1697 = vcombine.high %v1695, %v1695
    %v1699 = vunpack.c.l.s4 1966171168
    %v1700 = vunpack.c.0.s8 %v1699
    %v1701 = vlaneseq
    %v1702 = vshrl.u32 %v1701, 7
    %v1703 = vsub.s32 %v1700, %v1702
    %v1704 = vrot.slane %v1695, %v1703
    %v1706 = vunpack.c.l.s4 1966171168
    %v1707 = vunpack.c.0.s8 %v1706
    %v1708 = vlaneseq
    %v1709 = vshrl.u32 %v1708, 7
    %v1710 = vsub.s32 %v1707, %v1709
    %v1711 = vrot.slane %v1697, %v1710
    %v1712 = vcombine.high %v1704, %v1704
    %v1713 = vcombine.high %v1711, %v1711
    %v1715 = vunpack.c.l.s4 1966171168
    %v1716 = vunpack.c.0.s8 %v1715
    %v1717 = vlaneseq
    %v1718 = vshrl.u32 %v1717, 7
    %v1719 = vsub.s32 %v1716, %v1718
    %v1720 = vrot.slane %v1704, %v1719
    %v1722 = vunpack.c.l.s4 1966171168
    %v1723 = vunpack.c.0.s8 %v1722
    %v1724 = vlaneseq
    %v1725 = vshrl.u32 %v1724, 7
    %v1726 = vsub.s32 %v1723, %v1725
    %v1727 = vrot.slane %v1711, %v1726
    %v1729 = vunpack.c.l.s4 1966171168
    %v1730 = vunpack.c.0.s8 %v1729
    %v1731 = vlaneseq
    %v1732 = vshrl.u32 %v1731, 7
    %v1733 = vsub.s32 %v1730, %v1732
    %v1734 = vrot.slane %v1712, %v1733
    %v1736 = vunpack.c.l.s4 1966171168
    %v1737 = vunpack.c.0.s8 %v1736
    %v1738 = vlaneseq
    %v1739 = vshrl.u32 %v1738, 7
    %v1740 = vsub.s32 %v1737, %v1739
    %v1741 = vrot.slane %v1713, %v1740
    %v1742 = vcombine.high %v1720, %v1720
    %v1743 = vcombine.high %v1727, %v1727
    %v1744 = vcombine.high %v1734, %v1734
    %v1745 = vcombine.high %v1741, %v1741
    %v1754 = vmul.f32 %v1680, %v1720
    %v1755 = vmul.f32 %v1682, %v1734
    %v1756 = vmul.f32 %v1684, %v1742
    %v1757 = vmul.f32 %v1686, %v1744
    %v1758 = vmul.f32 %v1688, %v1727
    %v1759 = vmul.f32 %v1690, %v1741
    %v1760 = vmul.f32 %v1692, %v1743
    %v1761 = vmul.f32 %v1694, %v1745
    %v1770 = vrot.slane %v1365, 2
    %v1771 = vrot.slane %v1367, 2
    %v1772 = vrot.slane %v1369, 2
    %v1773 = vrot.slane %v1371, 2
    %v1774 = vrot.slane %v1373, 2
    %v1775 = vrot.slane %v1375, 2
    %v1776 = vrot.slane %v1377, 2
    %v1777 = vrot.slane %v1379, 2
    %v1786 = vadd.f32 %v1770, %v1754
    %v1787 = vadd.f32 %v1771, %v1755
    %v1788 = vadd.f32 %v1772, %v1756
    %v1789 = vadd.f32 %v1773, %v1757
    %v1790 = vadd.f32 %v1774, %v1758
    %v1791 = vadd.f32 %v1775, %v1759
    %v1792 = vadd.f32 %v1776, %v1760
    %v1793 = vadd.f32 %v1777, %v1761
    %v1794 = vtanh.pop %v1786
    %v1795 = vtanh.pop %v1787
    %v1796 = vtanh.pop %v1788
    %v1797 = vtanh.pop %v1789
    %v1798 = vtanh.pop %v1790
    %v1799 = vtanh.pop %v1791
    %v1800 = vtanh.pop %v1792
    %v1801 = vtanh.pop %v1793
    %v1810 = vrot.slane %v1680, 1
    %v1811 = vrot.slane %v1682, 1
    %v1812 = vrot.slane %v1684, 1
    %v1813 = vrot.slane %v1686, 1
    %v1814 = vrot.slane %v1688, 1
    %v1815 = vrot.slane %v1690, 1
    %v1816 = vrot.slane %v1692, 1
    %v1817 = vrot.slane %v1694, 1
    %v1826 = vsub.f32 1.0, %v1810
    %v1827 = vsub.f32 1.0, %v1811
    %v1828 = vsub.f32 1.0, %v1812
    %v1829 = vsub.f32 1.0, %v1813
    %v1830 = vsub.f32 1.0, %v1814
    %v1831 = vsub.f32 1.0, %v1815
    %v1832 = vsub.f32 1.0, %v1816
    %v1833 = vsub.f32 1.0, %v1817
    %v1834 = vmul.f32 %v1826, %v1794
    %v1835 = vmul.f32 %v1827, %v1795
    %v1836 = vmul.f32 %v1828, %v1796
    %v1837 = vmul.f32 %v1829, %v1797
    %v1838 = vmul.f32 %v1830, %v1798
    %v1839 = vmul.f32 %v1831, %v1799
    %v1840 = vmul.f32 %v1832, %v1800
    %v1841 = vmul.f32 %v1833, %v1801
    %v1842 = vmul.f32 %v1810, %v1356
    %v1843 = vmul.f32 %v1811, %v1357
    %v1844 = vmul.f32 %v1812, %v1358
    %v1845 = vmul.f32 %v1813, %v1359
    %v1846 = vmul.f32 %v1814, %v1360
    %v1847 = vmul.f32 %v1815, %v1361
    %v1848 = vmul.f32 %v1816, %v1362
    %v1849 = vmul.f32 %v1817, %v1363
    %v1850 = vadd.f32 %v1834, %v1842
    %v1851 = vadd.f32 %v1835, %v1843
    %v1852 = vadd.f32 %v1836, %v1844
    %v1853 = vadd.f32 %v1837, %v1845
    %v1854 = vadd.f32 %v1838, %v1846
    %v1855 = vadd.f32 %v1839, %v1847
    %v1856 = vadd.f32 %v1840, %v1848
    %v1857 = vadd.f32 %v1841, %v1849
    %s1858 = scalar_lea.vmem [#allocation2], 3
    %v1859 = vld [vmem:[%s1858] ss:$8 sm:$0x7]
    %s1860 = scalar_lea.vmem [#allocation2], 27
    %v1861 = vld [vmem:[%s1860] ss:$8 sm:$0x7]
    %s1862 = scalar_lea.vmem [#allocation2], 51
    %v1863 = vld [vmem:[%s1862] ss:$8 sm:$0x7]
    %s1864 = scalar_lea.vmem [#allocation2], 75
    %v1865 = vld [vmem:[%s1864] ss:$8 sm:$0x7]
    %s1866 = scalar_lea.vmem [#allocation2], 99
    %v1867 = vld [vmem:[%s1866] ss:$8 sm:$0x7]
    %s1868 = scalar_lea.vmem [#allocation2], 123
    %v1869 = vld [vmem:[%s1868] ss:$8 sm:$0x7]
    %s1870 = scalar_lea.vmem [#allocation2], 147
    %v1871 = vld [vmem:[%s1870] ss:$8 sm:$0x7]
    %s1872 = scalar_lea.vmem [#allocation2], 171
    %v1873 = vld [vmem:[%s1872] ss:$8 sm:$0x7]
    %v1882 = vcombine.low %v1850, %v1851
    %v1883 = vcombine.low %v1852, %v1853
    %v1884 = vcombine.low %v1854, %v1855
    %v1885 = vcombine.low %v1856, %v1857
    %v1887 = vunpack.c.l.s4 1966171168
    %v1888 = vunpack.c.0.s8 %v1887
    %v1889 = vlaneseq
    %v1890 = vshrl.u32 %v1889, 7
    %v1891 = vsub.s32 %v1888, %v1890
    %v1892 = vrot.slane %v1882, %v1891
    %v1894 = vunpack.c.l.s4 1966171168
    %v1895 = vunpack.c.0.s8 %v1894
    %v1896 = vlaneseq
    %v1897 = vshrl.u32 %v1896, 7
    %v1898 = vsub.s32 %v1895, %v1897
    %v1899 = vrot.slane %v1883, %v1898
    %v1901 = vunpack.c.l.s4 1966171168
    %v1902 = vunpack.c.0.s8 %v1901
    %v1903 = vlaneseq
    %v1904 = vshrl.u32 %v1903, 7
    %v1905 = vsub.s32 %v1902, %v1904
    %v1906 = vrot.slane %v1884, %v1905
    %v1908 = vunpack.c.l.s4 1966171168
    %v1909 = vunpack.c.0.s8 %v1908
    %v1910 = vlaneseq
    %v1911 = vshrl.u32 %v1910, 7
    %v1912 = vsub.s32 %v1909, %v1911
    %v1913 = vrot.slane %v1885, %v1912
    %v1914 = vcombine.low %v1892, %v1899
    %v1915 = vcombine.low %v1906, %v1913
    %v1917 = vunpack.c.l.s4 1966171168
    %v1918 = vunpack.c.0.s8 %v1917
    %v1919 = vlaneseq
    %v1920 = vshrl.u32 %v1919, 7
    %v1921 = vsub.s32 %v1918, %v1920
    %v1922 = vrot.slane %v1914, %v1921
    %v1924 = vunpack.c.l.s4 1966171168
    %v1925 = vunpack.c.0.s8 %v1924
    %v1926 = vlaneseq
    %v1927 = vshrl.u32 %v1926, 7
    %v1928 = vsub.s32 %v1925, %v1927
    %v1929 = vrot.slane %v1915, %v1928
    %v1930 = vcombine.low %v1922, %v1929
    %1932 = vmatprep.subr.mxu0 %v381
    %1933 = vmatpush1.msra.mxu0 %v380
    %1934 = vmatprep.subr.mxu0 %v384
    %1935 = vmatpush1.msra.mxu0 %v383
    %1936 = vmatprep.subr.mxu0 %v387
    %1937 = vmatpush1.msra.mxu0 %v386
    %1938 = vmatprep.subr.mxu0 %v390
    %1939 = vmatpush1.msra.mxu0 %v389
    %1940 = vmatprep.subr.mxu0 %v393
    %1941 = vmatpush1.msra.mxu0 %v392
    %1942 = vmatprep.subr.mxu0 %v396
    %1943 = vmatpush1.msra.mxu0 %v395
    %1944 = vmatprep.subr.mxu0 %v399
    %1945 = vmatpush1.msra.mxu0 %v398
    %1946 = vmatprep.subr.mxu0 %v402
    %1947 = vmatpush1.msra.mxu0 %v401
    %1948 = vmatprep.subr.mxu0 %v405
    %1949 = vmatpush1.msra.mxu0 %v404
    %1950 = vmatprep.subr.mxu0 %v408
    %1951 = vmatpush1.msra.mxu0 %v407
    %1952 = vmatprep.subr.mxu0 %v411
    %1953 = vmatpush1.msra.mxu0 %v410
    %1954 = vmatprep.subr.mxu0 %v414
    %1955 = vmatpush1.msra.mxu0 %v413
    %1956 = vmatprep.subr.mxu0 %v417
    %1957 = vmatpush1.msra.mxu0 %v416
    %1958 = vmatprep.subr.mxu0 %v420
    %1959 = vmatpush1.msra.mxu0 %v419
    %1960 = vmatprep.subr.mxu0 %v423
    %1961 = vmatpush1.msra.mxu0 %v422
    %1962 = vmatprep.subr.mxu0 %v426
    %1963 = vmatpush1.msra.mxu0 %v425
    %1964 = vmatprep.subr.mxu0 0.0
    %1965 = vmatpush1.msra.mxu0 0.0
    %1966 = vmatprep.subr.mxu0 0.0
    %1967 = vmatpush1.msra.mxu0 0.0
    %1968 = vmatprep.subr.mxu0 0.0
    %1969 = vmatpush1.msra.mxu0 0.0
    %1970 = vmatprep.subr.mxu0 0.0
    %1971 = vmatpush1.msra.mxu0 0.0
    %1972 = vmatprep.subr.mxu0 0.0
    %1973 = vmatpush1.msra.mxu0 0.0
    %1974 = vmatprep.subr.mxu0 0.0
    %1975 = vmatpush1.msra.mxu0 0.0
    %1976 = vmatprep.subr.mxu0 0.0
    %1977 = vmatpush1.msra.mxu0 0.0
    %1978 = vmatprep.subr.mxu0 0.0
    %1979 = vmatpush1.msra.mxu0 0.0
    %1980 = vmatprep.subr.mxu0 0.0
    %1981 = vmatpush1.msra.mxu0 0.0
    %1982 = vmatprep.subr.mxu0 0.0
    %1983 = vmatpush1.msra.mxu0 0.0
    %1984 = vmatprep.subr.mxu0 0.0
    %1985 = vmatpush1.msra.mxu0 0.0
    %1986 = vmatprep.subr.mxu0 0.0
    %1987 = vmatpush1.msra.mxu0 0.0
    %1988 = vmatprep.subr.mxu0 0.0
    %1989 = vmatpush1.msra.mxu0 0.0
    %1990 = vmatprep.subr.mxu0 0.0
    %1991 = vmatpush1.msra.mxu0 0.0
    %1992 = vmatprep.subr.mxu0 0.0
    %1993 = vmatpush1.msra.mxu0 0.0
    %1994 = vmatprep.subr.mxu0 0.0
    %1995 = vmatpush1.msra.mxu0 0.0
    %1996 = vmatprep.mubr.f32.mxu0 0.0
    %1997 = vmatmul.mubr.f32.gmra.mrb[0].mxu0 %v1930
    %v1998 = vpop.f32.mrb[0].mxu0
    %v1999 = vadd.f32 0.0, %v1998
    %v2000 = vpop.f32.mrb[0].mxu0
    %v2001 = vadd.f32 0.0, %v2000
    %2002 = vdwg.mxu0
    %2003 = vmatprep.subr.mxu0 0.0
    %2004 = vmatpush1.msra.mxu0 %v382
    %2005 = vmatprep.subr.mxu0 0.0
    %2006 = vmatpush1.msra.mxu0 %v385
    %2007 = vmatprep.subr.mxu0 0.0
    %2008 = vmatpush1.msra.mxu0 %v388
    %2009 = vmatprep.subr.mxu0 0.0
    %2010 = vmatpush1.msra.mxu0 %v391
    %2011 = vmatprep.subr.mxu0 0.0
    %2012 = vmatpush1.msra.mxu0 %v394
    %2013 = vmatprep.subr.mxu0 0.0
    %2014 = vmatpush1.msra.mxu0 %v397
    %2015 = vmatprep.subr.mxu0 0.0
    %2016 = vmatpush1.msra.mxu0 %v400
    %2017 = vmatprep.subr.mxu0 0.0
    %2018 = vmatpush1.msra.mxu0 %v403
    %2019 = vmatprep.subr.mxu0 0.0
    %2020 = vmatpush1.msra.mxu0 %v406
    %2021 = vmatprep.subr.mxu0 0.0
    %2022 = vmatpush1.msra.mxu0 %v409
    %2023 = vmatprep.subr.mxu0 0.0
    %2024 = vmatpush1.msra.mxu0 %v412
    %2025 = vmatprep.subr.mxu0 0.0
    %2026 = vmatpush1.msra.mxu0 %v415
    %2027 = vmatprep.subr.mxu0 0.0
    %2028 = vmatpush1.msra.mxu0 %v418
    %2029 = vmatprep.subr.mxu0 0.0
    %2030 = vmatpush1.msra.mxu0 %v421
    %2031 = vmatprep.subr.mxu0 0.0
    %2032 = vmatpush1.msra.mxu0 %v424
    %2033 = vmatprep.subr.mxu0 0.0
    %2034 = vmatpush1.msra.mxu0 %v427
    %2035 = vmatprep.subr.mxu0 0.0
    %2036 = vmatpush1.msra.mxu0 0.0
    %2037 = vmatprep.subr.mxu0 0.0
    %2038 = vmatpush1.msra.mxu0 0.0
    %2039 = vmatprep.subr.mxu0 0.0
    %2040 = vmatpush1.msra.mxu0 0.0
    %2041 = vmatprep.subr.mxu0 0.0
    %2042 = vmatpush1.msra.mxu0 0.0
    %2043 = vmatprep.subr.mxu0 0.0
    %2044 = vmatpush1.msra.mxu0 0.0
    %2045 = vmatprep.subr.mxu0 0.0
    %2046 = vmatpush1.msra.mxu0 0.0
    %2047 = vmatprep.subr.mxu0 0.0
    %2048 = vmatpush1.msra.mxu0 0.0
    %2049 = vmatprep.subr.mxu0 0.0
    %2050 = vmatpush1.msra.mxu0 0.0
    %2051 = vmatprep.subr.mxu0 0.0
    %2052 = vmatpush1.msra.mxu0 0.0
    %2053 = vmatprep.subr.mxu0 0.0
    %2054 = vmatpush1.msra.mxu0 0.0
    %2055 = vmatprep.subr.mxu0 0.0
    %2056 = vmatpush1.msra.mxu0 0.0
    %2057 = vmatprep.subr.mxu0 0.0
    %2058 = vmatpush1.msra.mxu0 0.0
    %2059 = vmatprep.subr.mxu0 0.0
    %2060 = vmatpush1.msra.mxu0 0.0
    %2061 = vmatprep.subr.mxu0 0.0
    %2062 = vmatpush1.msra.mxu0 0.0
    %2063 = vmatprep.subr.mxu0 0.0
    %2064 = vmatpush1.msra.mxu0 0.0
    %2065 = vmatprep.subr.mxu0 0.0
    %2066 = vmatpush1.msra.mxu0 0.0
    %2067 = vmatprep.mubr.f32.mxu0 0.0
    %2068 = vmatmul.mubr.f32.gmra.mrb[0].mxu0 %v1930
    %v2069 = vpop.f32.mrb[0].mxu0
    %v2070 = vadd.f32 0.0, %v2069
    %v2071 = vpop.f32.mrb[0].mxu0
    %2072 = vdwg.mxu0
    %v2075 = vcombine.low %v1999, %v2001
    %v2076 = vcombine.high %v1999, %v2001
    %v2078 = vunpack.c.l.s4 1966171168
    %v2079 = vunpack.c.0.s8 %v2078
    %v2080 = vlaneseq
    %v2081 = vshrl.u32 %v2080, 7
    %v2082 = vsub.s32 %v2079, %v2081
    %v2083 = vrot.slane %v2075, %v2082
    %v2085 = vunpack.c.l.s4 1966171168
    %v2086 = vunpack.c.0.s8 %v2085
    %v2087 = vlaneseq
    %v2088 = vshrl.u32 %v2087, 7
    %v2089 = vsub.s32 %v2086, %v2088
    %v2090 = vrot.slane %v2076, %v2089
    %v2091 = vcombine.high %v2083, %v2083
    %v2092 = vcombine.high %v2090, %v2090
    %v2094 = vunpack.c.l.s4 1966171168
    %v2095 = vunpack.c.0.s8 %v2094
    %v2096 = vlaneseq
    %v2097 = vshrl.u32 %v2096, 7
    %v2098 = vsub.s32 %v2095, %v2097
    %v2099 = vrot.slane %v2083, %v2098
    %v2101 = vunpack.c.l.s4 1966171168
    %v2102 = vunpack.c.0.s8 %v2101
    %v2103 = vlaneseq
    %v2104 = vshrl.u32 %v2103, 7
    %v2105 = vsub.s32 %v2102, %v2104
    %v2106 = vrot.slane %v2090, %v2105
    %v2108 = vunpack.c.l.s4 1966171168
    %v2109 = vunpack.c.0.s8 %v2108
    %v2110 = vlaneseq
    %v2111 = vshrl.u32 %v2110, 7
    %v2112 = vsub.s32 %v2109, %v2111
    %v2113 = vrot.slane %v2091, %v2112
    %v2115 = vunpack.c.l.s4 1966171168
    %v2116 = vunpack.c.0.s8 %v2115
    %v2117 = vlaneseq
    %v2118 = vshrl.u32 %v2117, 7
    %v2119 = vsub.s32 %v2116, %v2118
    %v2120 = vrot.slane %v2092, %v2119
    %v2121 = vcombine.high %v2099, %v2099
    %v2122 = vcombine.high %v2106, %v2106
    %v2123 = vcombine.high %v2113, %v2113
    %v2124 = vcombine.high %v2120, %v2120
    %v2133 = vadd.f32 %v1859, %v2099
    %v2134 = vadd.f32 %v1861, %v2113
    %v2135 = vadd.f32 %v1863, %v2121
    %v2136 = vadd.f32 %v1865, %v2123
    %v2137 = vadd.f32 %v1867, %v2106
    %v2138 = vadd.f32 %v1869, %v2120
    %v2139 = vadd.f32 %v1871, %v2122
    %v2140 = vadd.f32 %v1873, %v2124
    %v2141 = vxor.u32 %v2133, 2147483648
    %v2142 = vxor.u32 %v2134, 2147483648
    %v2143 = vxor.u32 %v2135, 2147483648
    %v2144 = vxor.u32 %v2136, 2147483648
    %v2145 = vxor.u32 %v2137, 2147483648
    %v2146 = vxor.u32 %v2138, 2147483648
    %v2147 = vxor.u32 %v2139, 2147483648
    %v2148 = vxor.u32 %v2140, 2147483648
    %v2149 = vmul.f32 %v2141, 1.442695
    %v2150 = vpow.pop %v2149
    %v2151 = vmul.f32 %v2142, 1.442695
    %v2152 = vpow.pop %v2151
    %v2153 = vmul.f32 %v2143, 1.442695
    %v2154 = vpow.pop %v2153
    %v2155 = vmul.f32 %v2144, 1.442695
    %v2156 = vpow.pop %v2155
    %v2157 = vmul.f32 %v2145, 1.442695
    %v2158 = vpow.pop %v2157
    %v2159 = vmul.f32 %v2146, 1.442695
    %v2160 = vpow.pop %v2159
    %v2161 = vmul.f32 %v2147, 1.442695
    %v2162 = vpow.pop %v2161
    %v2163 = vmul.f32 %v2148, 1.442695
    %v2164 = vpow.pop %v2163
    %v2165 = vadd.f32 %v2150, 1.0
    %v2166 = vadd.f32 %v2152, 1.0
    %v2167 = vadd.f32 %v2154, 1.0
    %v2168 = vadd.f32 %v2156, 1.0
    %v2169 = vadd.f32 %v2158, 1.0
    %v2170 = vadd.f32 %v2160, 1.0
    %v2171 = vadd.f32 %v2162, 1.0
    %v2172 = vadd.f32 %v2164, 1.0
    %v2173 = vrcp.pop %v2165
    %v2174 = vmul.f32 1.0, %v2173
    %v2175 = vrcp.pop %v2166
    %v2176 = vmul.f32 1.0, %v2175
    %v2177 = vrcp.pop %v2167
    %v2178 = vmul.f32 1.0, %v2177
    %v2179 = vrcp.pop %v2168
    %v2180 = vmul.f32 1.0, %v2179
    %v2181 = vrcp.pop %v2169
    %v2182 = vmul.f32 1.0, %v2181
    %v2183 = vrcp.pop %v2170
    %v2184 = vmul.f32 1.0, %v2183
    %v2185 = vrcp.pop %v2171
    %v2186 = vmul.f32 1.0, %v2185
    %v2187 = vrcp.pop %v2172
    %v2188 = vmul.f32 1.0, %v2187
    %v2189 = vadd.f32 %v2070, %v433
    %v2191 = vcombine.high %v2189, %v2189
    %v2193 = vunpack.c.l.s4 1966171168
    %v2194 = vunpack.c.0.s8 %v2193
    %v2195 = vlaneseq
    %v2196 = vshrl.u32 %v2195, 7
    %v2197 = vsub.s32 %v2194, %v2196
    %v2198 = vrot.slane %v2189, %v2197
    %v2200 = vunpack.c.l.s4 1966171168
    %v2201 = vunpack.c.0.s8 %v2200
    %v2202 = vlaneseq
    %v2203 = vshrl.u32 %v2202, 7
    %v2204 = vsub.s32 %v2201, %v2203
    %v2205 = vrot.slane %v2191, %v2204
    %v2206 = vcombine.high %v2198, %v2198
    %v2207 = vcombine.high %v2205, %v2205
    %v2209 = vunpack.c.l.s4 1966171168
    %v2210 = vunpack.c.0.s8 %v2209
    %v2211 = vlaneseq
    %v2212 = vshrl.u32 %v2211, 7
    %v2213 = vsub.s32 %v2210, %v2212
    %v2214 = vrot.slane %v2198, %v2213
    %v2216 = vunpack.c.l.s4 1966171168
    %v2217 = vunpack.c.0.s8 %v2216
    %v2218 = vlaneseq
    %v2219 = vshrl.u32 %v2218, 7
    %v2220 = vsub.s32 %v2217, %v2219
    %v2221 = vrot.slane %v2205, %v2220
    %v2223 = vunpack.c.l.s4 1966171168
    %v2224 = vunpack.c.0.s8 %v2223
    %v2225 = vlaneseq
    %v2226 = vshrl.u32 %v2225, 7
    %v2227 = vsub.s32 %v2224, %v2226
    %v2228 = vrot.slane %v2206, %v2227
    %v2230 = vunpack.c.l.s4 1966171168
    %v2231 = vunpack.c.0.s8 %v2230
    %v2232 = vlaneseq
    %v2233 = vshrl.u32 %v2232, 7
    %v2234 = vsub.s32 %v2231, %v2233
    %v2235 = vrot.slane %v2207, %v2234
    %v2236 = vcombine.high %v2214, %v2214
    %v2237 = vcombine.high %v2221, %v2221
    %v2238 = vcombine.high %v2228, %v2228
    %v2239 = vcombine.high %v2235, %v2235
    %v2248 = vmul.f32 %v2174, %v2214
    %v2249 = vmul.f32 %v2176, %v2228
    %v2250 = vmul.f32 %v2178, %v2236
    %v2251 = vmul.f32 %v2180, %v2238
    %v2252 = vmul.f32 %v2182, %v2221
    %v2253 = vmul.f32 %v2184, %v2235
    %v2254 = vmul.f32 %v2186, %v2237
    %v2255 = vmul.f32 %v2188, %v2239
    %v2264 = vrot.slane %v1859, 2
    %v2265 = vrot.slane %v1861, 2
    %v2266 = vrot.slane %v1863, 2
    %v2267 = vrot.slane %v1865, 2
    %v2268 = vrot.slane %v1867, 2
    %v2269 = vrot.slane %v1869, 2
    %v2270 = vrot.slane %v1871, 2
    %v2271 = vrot.slane %v1873, 2
    %v2280 = vadd.f32 %v2264, %v2248
    %v2281 = vadd.f32 %v2265, %v2249
    %v2282 = vadd.f32 %v2266, %v2250
    %v2283 = vadd.f32 %v2267, %v2251
    %v2284 = vadd.f32 %v2268, %v2252
    %v2285 = vadd.f32 %v2269, %v2253
    %v2286 = vadd.f32 %v2270, %v2254
    %v2287 = vadd.f32 %v2271, %v2255
    %v2288 = vtanh.pop %v2280
    %v2289 = vtanh.pop %v2281
    %v2290 = vtanh.pop %v2282
    %v2291 = vtanh.pop %v2283
    %v2292 = vtanh.pop %v2284
    %v2293 = vtanh.pop %v2285
    %v2294 = vtanh.pop %v2286
    %v2295 = vtanh.pop %v2287
    %v2304 = vrot.slane %v2174, 1
    %v2305 = vrot.slane %v2176, 1
    %v2306 = vrot.slane %v2178, 1
    %v2307 = vrot.slane %v2180, 1
    %v2308 = vrot.slane %v2182, 1
    %v2309 = vrot.slane %v2184, 1
    %v2310 = vrot.slane %v2186, 1
    %v2311 = vrot.slane %v2188, 1
    %v2320 = vsub.f32 1.0, %v2304
    %v2321 = vsub.f32 1.0, %v2305
    %v2322 = vsub.f32 1.0, %v2306
    %v2323 = vsub.f32 1.0, %v2307
    %v2324 = vsub.f32 1.0, %v2308
    %v2325 = vsub.f32 1.0, %v2309
    %v2326 = vsub.f32 1.0, %v2310
    %v2327 = vsub.f32 1.0, %v2311
    %v2328 = vmul.f32 %v2320, %v2288
    %v2329 = vmul.f32 %v2321, %v2289
    %v2330 = vmul.f32 %v2322, %v2290
    %v2331 = vmul.f32 %v2323, %v2291
    %v2332 = vmul.f32 %v2324, %v2292
    %v2333 = vmul.f32 %v2325, %v2293
    %v2334 = vmul.f32 %v2326, %v2294
    %v2335 = vmul.f32 %v2327, %v2295
    %v2336 = vmul.f32 %v2304, %v1850
    %v2337 = vmul.f32 %v2305, %v1851
    %v2338 = vmul.f32 %v2306, %v1852
    %v2339 = vmul.f32 %v2307, %v1853
    %v2340 = vmul.f32 %v2308, %v1854
    %v2341 = vmul.f32 %v2309, %v1855
    %v2342 = vmul.f32 %v2310, %v1856
    %v2343 = vmul.f32 %v2311, %v1857
    %v2344 = vadd.f32 %v2328, %v2336
    %v2345 = vadd.f32 %v2329, %v2337
    %v2346 = vadd.f32 %v2330, %v2338
    %v2347 = vadd.f32 %v2331, %v2339
    %v2348 = vadd.f32 %v2332, %v2340
    %v2349 = vadd.f32 %v2333, %v2341
    %v2350 = vadd.f32 %v2334, %v2342
    %v2351 = vadd.f32 %v2335, %v2343
    %s2352 = scalar_lea.vmem [#allocation2], 4
    %v2353 = vld [vmem:[%s2352] ss:$8 sm:$0x7]
    %s2354 = scalar_lea.vmem [#allocation2], 28
    %v2355 = vld [vmem:[%s2354] ss:$8 sm:$0x7]
    %s2356 = scalar_lea.vmem [#allocation2], 52
    %v2357 = vld [vmem:[%s2356] ss:$8 sm:$0x7]
    %s2358 = scalar_lea.vmem [#allocation2], 76
    %v2359 = vld [vmem:[%s2358] ss:$8 sm:$0x7]
    %s2360 = scalar_lea.vmem [#allocation2], 100
    %v2361 = vld [vmem:[%s2360] ss:$8 sm:$0x7]
    %s2362 = scalar_lea.vmem [#allocation2], 124
    %v2363 = vld [vmem:[%s2362] ss:$8 sm:$0x7]
    %s2364 = scalar_lea.vmem [#allocation2], 148
    %v2365 = vld [vmem:[%s2364] ss:$8 sm:$0x7]
    %s2366 = scalar_lea.vmem [#allocation2], 172
    %v2367 = vld [vmem:[%s2366] ss:$8 sm:$0x7]
    %v2376 = vcombine.low %v2344, %v2345
    %v2377 = vcombine.low %v2346, %v2347
    %v2378 = vcombine.low %v2348, %v2349
    %v2379 = vcombine.low %v2350, %v2351
    %v2381 = vunpack.c.l.s4 1966171168
    %v2382 = vunpack.c.0.s8 %v2381
    %v2383 = vlaneseq
    %v2384 = vshrl.u32 %v2383, 7
    %v2385 = vsub.s32 %v2382, %v2384
    %v2386 = vrot.slane %v2376, %v2385
    %v2388 = vunpack.c.l.s4 1966171168
    %v2389 = vunpack.c.0.s8 %v2388
    %v2390 = vlaneseq
    %v2391 = vshrl.u32 %v2390, 7
    %v2392 = vsub.s32 %v2389, %v2391
    %v2393 = vrot.slane %v2377, %v2392
    %v2395 = vunpack.c.l.s4 1966171168
    %v2396 = vunpack.c.0.s8 %v2395
    %v2397 = vlaneseq
    %v2398 = vshrl.u32 %v2397, 7
    %v2399 = vsub.s32 %v2396, %v2398
    %v2400 = vrot.slane %v2378, %v2399
    %v2402 = vunpack.c.l.s4 1966171168
    %v2403 = vunpack.c.0.s8 %v2402
    %v2404 = vlaneseq
    %v2405 = vshrl.u32 %v2404, 7
    %v2406 = vsub.s32 %v2403, %v2405
    %v2407 = vrot.slane %v2379, %v2406
    %v2408 = vcombine.low %v2386, %v2393
    %v2409 = vcombine.low %v2400, %v2407
    %v2411 = vunpack.c.l.s4 1966171168
    %v2412 = vunpack.c.0.s8 %v2411
    %v2413 = vlaneseq
    %v2414 = vshrl.u32 %v2413, 7
    %v2415 = vsub.s32 %v2412, %v2414
    %v2416 = vrot.slane %v2408, %v2415
    %v2418 = vunpack.c.l.s4 1966171168
    %v2419 = vunpack.c.0.s8 %v2418
    %v2420 = vlaneseq
    %v2421 = vshrl.u32 %v2420, 7
    %v2422 = vsub.s32 %v2419, %v2421
    %v2423 = vrot.slane %v2409, %v2422
    %v2424 = vcombine.low %v2416, %v2423
    %2426 = vmatprep.subr.mxu0 %v381
    %2427 = vmatpush1.msra.mxu0 %v380
    %2428 = vmatprep.subr.mxu0 %v384
    %2429 = vmatpush1.msra.mxu0 %v383
    %2430 = vmatprep.subr.mxu0 %v387
    %2431 = vmatpush1.msra.mxu0 %v386
    %2432 = vmatprep.subr.mxu0 %v390
    %2433 = vmatpush1.msra.mxu0 %v389
    %2434 = vmatprep.subr.mxu0 %v393
    %2435 = vmatpush1.msra.mxu0 %v392
    %2436 = vmatprep.subr.mxu0 %v396
    %2437 = vmatpush1.msra.mxu0 %v395
    %2438 = vmatprep.subr.mxu0 %v399
    %2439 = vmatpush1.msra.mxu0 %v398
    %2440 = vmatprep.subr.mxu0 %v402
    %2441 = vmatpush1.msra.mxu0 %v401
    %2442 = vmatprep.subr.mxu0 %v405
    %2443 = vmatpush1.msra.mxu0 %v404
    %2444 = vmatprep.subr.mxu0 %v408
    %2445 = vmatpush1.msra.mxu0 %v407
    %2446 = vmatprep.subr.mxu0 %v411
    %2447 = vmatpush1.msra.mxu0 %v410
    %2448 = vmatprep.subr.mxu0 %v414
    %2449 = vmatpush1.msra.mxu0 %v413
    %2450 = vmatprep.subr.mxu0 %v417
    %2451 = vmatpush1.msra.mxu0 %v416
    %2452 = vmatprep.subr.mxu0 %v420
    %2453 = vmatpush1.msra.mxu0 %v419
    %2454 = vmatprep.subr.mxu0 %v423
    %2455 = vmatpush1.msra.mxu0 %v422
    %2456 = vmatprep.subr.mxu0 %v426
    %2457 = vmatpush1.msra.mxu0 %v425
    %2458 = vmatprep.subr.mxu0 0.0
    %2459 = vmatpush1.msra.mxu0 0.0
    %2460 = vmatprep.subr.mxu0 0.0
    %2461 = vmatpush1.msra.mxu0 0.0
    %2462 = vmatprep.subr.mxu0 0.0
    %2463 = vmatpush1.msra.mxu0 0.0
    %2464 = vmatprep.subr.mxu0 0.0
    %2465 = vmatpush1.msra.mxu0 0.0
    %2466 = vmatprep.subr.mxu0 0.0
    %2467 = vmatpush1.msra.mxu0 0.0
    %2468 = vmatprep.subr.mxu0 0.0
    %2469 = vmatpush1.msra.mxu0 0.0
    %2470 = vmatprep.subr.mxu0 0.0
    %2471 = vmatpush1.msra.mxu0 0.0
    %2472 = vmatprep.subr.mxu0 0.0
    %2473 = vmatpush1.msra.mxu0 0.0
    %2474 = vmatprep.subr.mxu0 0.0
    %2475 = vmatpush1.msra.mxu0 0.0
    %2476 = vmatprep.subr.mxu0 0.0
    %2477 = vmatpush1.msra.mxu0 0.0
    %2478 = vmatprep.subr.mxu0 0.0
    %2479 = vmatpush1.msra.mxu0 0.0
    %2480 = vmatprep.subr.mxu0 0.0
    %2481 = vmatpush1.msra.mxu0 0.0
    %2482 = vmatprep.subr.mxu0 0.0
    %2483 = vmatpush1.msra.mxu0 0.0
    %2484 = vmatprep.subr.mxu0 0.0
    %2485 = vmatpush1.msra.mxu0 0.0
    %2486 = vmatprep.subr.mxu0 0.0
    %2487 = vmatpush1.msra.mxu0 0.0
    %2488 = vmatprep.subr.mxu0 0.0
    %2489 = vmatpush1.msra.mxu0 0.0
    %2490 = vmatprep.mubr.f32.mxu0 0.0
    %2491 = vmatmul.mubr.f32.gmra.mrb[0].mxu0 %v2424
    %v2492 = vpop.f32.mrb[0].mxu0
    %v2493 = vadd.f32 0.0, %v2492
    %v2494 = vpop.f32.mrb[0].mxu0
    %v2495 = vadd.f32 0.0, %v2494
    %2496 = vdwg.mxu0
    %2497 = vmatprep.subr.mxu0 0.0
    %2498 = vmatpush1.msra.mxu0 %v382
    %2499 = vmatprep.subr.mxu0 0.0
    %2500 = vmatpush1.msra.mxu0 %v385
    %2501 = vmatprep.subr.mxu0 0.0
    %2502 = vmatpush1.msra.mxu0 %v388
    %2503 = vmatprep.subr.mxu0 0.0
    %2504 = vmatpush1.msra.mxu0 %v391
    %2505 = vmatprep.subr.mxu0 0.0
    %2506 = vmatpush1.msra.mxu0 %v394
    %2507 = vmatprep.subr.mxu0 0.0
    %2508 = vmatpush1.msra.mxu0 %v397
    %2509 = vmatprep.subr.mxu0 0.0
    %2510 = vmatpush1.msra.mxu0 %v400
    %2511 = vmatprep.subr.mxu0 0.0
    %2512 = vmatpush1.msra.mxu0 %v403
    %2513 = vmatprep.subr.mxu0 0.0
    %2514 = vmatpush1.msra.mxu0 %v406
    %2515 = vmatprep.subr.mxu0 0.0
    %2516 = vmatpush1.msra.mxu0 %v409
    %2517 = vmatprep.subr.mxu0 0.0
    %2518 = vmatpush1.msra.mxu0 %v412
    %2519 = vmatprep.subr.mxu0 0.0
    %2520 = vmatpush1.msra.mxu0 %v415
    %2521 = vmatprep.subr.mxu0 0.0
    %2522 = vmatpush1.msra.mxu0 %v418
    %2523 = vmatprep.subr.mxu0 0.0
    %2524 = vmatpush1.msra.mxu0 %v421
    %2525 = vmatprep.subr.mxu0 0.0
    %2526 = vmatpush1.msra.mxu0 %v424
    %2527 = vmatprep.subr.mxu0 0.0
    %2528 = vmatpush1.msra.mxu0 %v427
    %2529 = vmatprep.subr.mxu0 0.0
    %2530 = vmatpush1.msra.mxu0 0.0
    %2531 = vmatprep.subr.mxu0 0.0
    %2532 = vmatpush1.msra.mxu0 0.0
    %2533 = vmatprep.subr.mxu0 0.0
    %2534 = vmatpush1.msra.mxu0 0.0
    %2535 = vmatprep.subr.mxu0 0.0
    %2536 = vmatpush1.msra.mxu0 0.0
    %2537 = vmatprep.subr.mxu0 0.0
    %2538 = vmatpush1.msra.mxu0 0.0
    %2539 = vmatprep.subr.mxu0 0.0
    %2540 = vmatpush1.msra.mxu0 0.0
    %2541 = vmatprep.subr.mxu0 0.0
    %2542 = vmatpush1.msra.mxu0 0.0
    %2543 = vmatprep.subr.mxu0 0.0
    %2544 = vmatpush1.msra.mxu0 0.0
    %2545 = vmatprep.subr.mxu0 0.0
    %2546 = vmatpush1.msra.mxu0 0.0
    %2547 = vmatprep.subr.mxu0 0.0
    %2548 = vmatpush1.msra.mxu0 0.0
    %2549 = vmatprep.subr.mxu0 0.0
    %2550 = vmatpush1.msra.mxu0 0.0
    %2551 = vmatprep.subr.mxu0 0.0
    %2552 = vmatpush1.msra.mxu0 0.0
    %2553 = vmatprep.subr.mxu0 0.0
    %2554 = vmatpush1.msra.mxu0 0.0
    %2555 = vmatprep.subr.mxu0 0.0
    %2556 = vmatpush1.msra.mxu0 0.0
    %2557 = vmatprep.subr.mxu0 0.0
    %2558 = vmatpush1.msra.mxu0 0.0
    %2559 = vmatprep.subr.mxu0 0.0
    %2560 = vmatpush1.msra.mxu0 0.0
    %2561 = vmatprep.mubr.f32.mxu0 0.0
    %2562 = vmatmul.mubr.f32.gmra.mrb[0].mxu0 %v2424
    %v2563 = vpop.f32.mrb[0].mxu0
    %v2564 = vadd.f32 0.0, %v2563
    %v2565 = vpop.f32.mrb[0].mxu0
    %2566 = vdwg.mxu0
    %v2569 = vcombine.low %v2493, %v2495
    %v2570 = vcombine.high %v2493, %v2495
    %v2572 = vunpack.c.l.s4 1966171168
    %v2573 = vunpack.c.0.s8 %v2572
    %v2574 = vlaneseq
    %v2575 = vshrl.u32 %v2574, 7
    %v2576 = vsub.s32 %v2573, %v2575
    %v2577 = vrot.slane %v2569, %v2576
    %v2579 = vunpack.c.l.s4 1966171168
    %v2580 = vunpack.c.0.s8 %v2579
    %v2581 = vlaneseq
    %v2582 = vshrl.u32 %v2581, 7
    %v2583 = vsub.s32 %v2580, %v2582
    %v2584 = vrot.slane %v2570, %v2583
    %v2585 = vcombine.high %v2577, %v2577
    %v2586 = vcombine.high %v2584, %v2584
    %v2588 = vunpack.c.l.s4 1966171168
    %v2589 = vunpack.c.0.s8 %v2588
    %v2590 = vlaneseq
    %v2591 = vshrl.u32 %v2590, 7
    %v2592 = vsub.s32 %v2589, %v2591
    %v2593 = vrot.slane %v2577, %v2592
    %v2595 = vunpack.c.l.s4 1966171168
    %v2596 = vunpack.c.0.s8 %v2595
    %v2597 = vlaneseq
    %v2598 = vshrl.u32 %v2597, 7
    %v2599 = vsub.s32 %v2596, %v2598
    %v2600 = vrot.slane %v2584, %v2599
    %v2602 = vunpack.c.l.s4 1966171168
    %v2603 = vunpack.c.0.s8 %v2602
    %v2604 = vlaneseq
    %v2605 = vshrl.u32 %v2604, 7
    %v2606 = vsub.s32 %v2603, %v2605
    %v2607 = vrot.slane %v2585, %v2606
    %v2609 = vunpack.c.l.s4 1966171168
    %v2610 = vunpack.c.0.s8 %v2609
    %v2611 = vlaneseq
    %v2612 = vshrl.u32 %v2611, 7
    %v2613 = vsub.s32 %v2610, %v2612
    %v2614 = vrot.slane %v2586, %v2613
    %v2615 = vcombine.high %v2593, %v2593
    %v2616 = vcombine.high %v2600, %v2600
    %v2617 = vcombine.high %v2607, %v2607
    %v2618 = vcombine.high %v2614, %v2614
    %v2627 = vadd.f32 %v2353, %v2593
    %v2628 = vadd.f32 %v2355, %v2607
    %v2629 = vadd.f32 %v2357, %v2615
    %v2630 = vadd.f32 %v2359, %v2617
    %v2631 = vadd.f32 %v2361, %v2600
    %v2632 = vadd.f32 %v2363, %v2614
    %v2633 = vadd.f32 %v2365, %v2616
    %v2634 = vadd.f32 %v2367, %v2618
    %v2635 = vxor.u32 %v2627, 2147483648
    %v2636 = vxor.u32 %v2628, 2147483648
    %v2637 = vxor.u32 %v2629, 2147483648
    %v2638 = vxor.u32 %v2630, 2147483648
    %v2639 = vxor.u32 %v2631, 2147483648
    %v2640 = vxor.u32 %v2632, 2147483648
    %v2641 = vxor.u32 %v2633, 2147483648
    %v2642 = vxor.u32 %v2634, 2147483648
    %v2643 = vmul.f32 %v2635, 1.442695
    %v2644 = vpow.pop %v2643
    %v2645 = vmul.f32 %v2636, 1.442695
    %v2646 = vpow.pop %v2645
    %v2647 = vmul.f32 %v2637, 1.442695
    %v2648 = vpow.pop %v2647
    %v2649 = vmul.f32 %v2638, 1.442695
    %v2650 = vpow.pop %v2649
    %v2651 = vmul.f32 %v2639, 1.442695
    %v2652 = vpow.pop %v2651
    %v2653 = vmul.f32 %v2640, 1.442695
    %v2654 = vpow.pop %v2653
    %v2655 = vmul.f32 %v2641, 1.442695
    %v2656 = vpow.pop %v2655
    %v2657 = vmul.f32 %v2642, 1.442695
    %v2658 = vpow.pop %v2657
    %v2659 = vadd.f32 %v2644, 1.0
    %v2660 = vadd.f32 %v2646, 1.0
    %v2661 = vadd.f32 %v2648, 1.0
    %v2662 = vadd.f32 %v2650, 1.0
    %v2663 = vadd.f32 %v2652, 1.0
    %v2664 = vadd.f32 %v2654, 1.0
    %v2665 = vadd.f32 %v2656, 1.0
    %v2666 = vadd.f32 %v2658, 1.0
    %v2667 = vrcp.pop %v2659
    %v2668 = vmul.f32 1.0, %v2667
    %v2669 = vrcp.pop %v2660
    %v2670 = vmul.f32 1.0, %v2669
    %v2671 = vrcp.pop %v2661
    %v2672 = vmul.f32 1.0, %v2671
    %v2673 = vrcp.pop %v2662
    %v2674 = vmul.f32 1.0, %v2673
    %v2675 = vrcp.pop %v2663
    %v2676 = vmul.f32 1.0, %v2675
    %v2677 = vrcp.pop %v2664
    %v2678 = vmul.f32 1.0, %v2677
    %v2679 = vrcp.pop %v2665
    %v2680 = vmul.f32 1.0, %v2679
    %v2681 = vrcp.pop %v2666
    %v2682 = vmul.f32 1.0, %v2681
    %v2683 = vadd.f32 %v2564, %v433
    %v2685 = vcombine.high %v2683, %v2683
    %v2687 = vunpack.c.l.s4 1966171168
    %v2688 = vunpack.c.0.s8 %v2687
    %v2689 = vlaneseq
    %v2690 = vshrl.u32 %v2689, 7
    %v2691 = vsub.s32 %v2688, %v2690
    %v2692 = vrot.slane %v2683, %v2691
    %v2694 = vunpack.c.l.s4 1966171168
    %v2695 = vunpack.c.0.s8 %v2694
    %v2696 = vlaneseq
    %v2697 = vshrl.u32 %v2696, 7
    %v2698 = vsub.s32 %v2695, %v2697
    %v2699 = vrot.slane %v2685, %v2698
    %v2700 = vcombine.high %v2692, %v2692
    %v2701 = vcombine.high %v2699, %v2699
    %v2703 = vunpack.c.l.s4 1966171168
    %v2704 = vunpack.c.0.s8 %v2703
    %v2705 = vlaneseq
    %v2706 = vshrl.u32 %v2705, 7
    %v2707 = vsub.s32 %v2704, %v2706
    %v2708 = vrot.slane %v2692, %v2707
    %v2710 = vunpack.c.l.s4 1966171168
    %v2711 = vunpack.c.0.s8 %v2710
    %v2712 = vlaneseq
    %v2713 = vshrl.u32 %v2712, 7
    %v2714 = vsub.s32 %v2711, %v2713
    %v2715 = vrot.slane %v2699, %v2714
    %v2717 = vunpack.c.l.s4 1966171168
    %v2718 = vunpack.c.0.s8 %v2717
    %v2719 = vlaneseq
    %v2720 = vshrl.u32 %v2719, 7
    %v2721 = vsub.s32 %v2718, %v2720
    %v2722 = vrot.slane %v2700, %v2721
    %v2724 = vunpack.c.l.s4 1966171168
    %v2725 = vunpack.c.0.s8 %v2724
    %v2726 = vlaneseq
    %v2727 = vshrl.u32 %v2726, 7
    %v2728 = vsub.s32 %v2725, %v2727
    %v2729 = vrot.slane %v2701, %v2728
    %v2730 = vcombine.high %v2708, %v2708
    %v2731 = vcombine.high %v2715, %v2715
    %v2732 = vcombine.high %v2722, %v2722
    %v2733 = vcombine.high %v2729, %v2729
    %v2742 = vmul.f32 %v2668, %v2708
    %v2743 = vmul.f32 %v2670, %v2722
    %v2744 = vmul.f32 %v2672, %v2730
    %v2745 = vmul.f32 %v2674, %v2732
    %v2746 = vmul.f32 %v2676, %v2715
    %v2747 = vmul.f32 %v2678, %v2729
    %v2748 = vmul.f32 %v2680, %v2731
    %v2749 = vmul.f32 %v2682, %v2733
    %v2758 = vrot.slane %v2353, 2
    %v2759 = vrot.slane %v2355, 2
    %v2760 = vrot.slane %v2357, 2
    %v2761 = vrot.slane %v2359, 2
    %v2762 = vrot.slane %v2361, 2
    %v2763 = vrot.slane %v2363, 2
    %v2764 = vrot.slane %v2365, 2
    %v2765 = vrot.slane %v2367, 2
    %v2774 = vadd.f32 %v2758, %v2742
    %v2775 = vadd.f32 %v2759, %v2743
    %v2776 = vadd.f32 %v2760, %v2744
    %v2777 = vadd.f32 %v2761, %v2745
    %v2778 = vadd.f32 %v2762, %v2746
    %v2779 = vadd.f32 %v2763, %v2747
    %v2780 = vadd.f32 %v2764, %v2748
    %v2781 = vadd.f32 %v2765, %v2749
    %v2782 = vtanh.pop %v2774
    %v2783 = vtanh.pop %v2775
    %v2784 = vtanh.pop %v2776
    %v2785 = vtanh.pop %v2777
    %v2786 = vtanh.pop %v2778
    %v2787 = vtanh.pop %v2779
    %v2788 = vtanh.pop %v2780
    %v2789 = vtanh.pop %v2781
    %v2798 = vrot.slane %v2668, 1
    %v2799 = vrot.slane %v2670, 1
    %v2800 = vrot.slane %v2672, 1
    %v2801 = vrot.slane %v2674, 1
    %v2802 = vrot.slane %v2676, 1
    %v2803 = vrot.slane %v2678, 1
    %v2804 = vrot.slane %v2680, 1
    %v2805 = vrot.slane %v2682, 1
    %v2814 = vsub.f32 1.0, %v2798
    %v2815 = vsub.f32 1.0, %v2799
    %v2816 = vsub.f32 1.0, %v2800
    %v2817 = vsub.f32 1.0, %v2801
    %v2818 = vsub.f32 1.0, %v2802
    %v2819 = vsub.f32 1.0, %v2803
    %v2820 = vsub.f32 1.0, %v2804
    %v2821 = vsub.f32 1.0, %v2805
    %v2822 = vmul.f32 %v2814, %v2782
    %v2823 = vmul.f32 %v2815, %v2783
    %v2824 = vmul.f32 %v2816, %v2784
    %v2825 = vmul.f32 %v2817, %v2785
    %v2826 = vmul.f32 %v2818, %v2786
    %v2827 = vmul.f32 %v2819, %v2787
    %v2828 = vmul.f32 %v2820, %v2788
    %v2829 = vmul.f32 %v2821, %v2789
    %v2830 = vmul.f32 %v2798, %v2344
    %v2831 = vmul.f32 %v2799, %v2345
    %v2832 = vmul.f32 %v2800, %v2346
    %v2833 = vmul.f32 %v2801, %v2347
    %v2834 = vmul.f32 %v2802, %v2348
    %v2835 = vmul.f32 %v2803, %v2349
    %v2836 = vmul.f32 %v2804, %v2350
    %v2837 = vmul.f32 %v2805, %v2351
    %v2838 = vadd.f32 %v2822, %v2830
    %v2839 = vadd.f32 %v2823, %v2831
    %v2840 = vadd.f32 %v2824, %v2832
    %v2841 = vadd.f32 %v2825, %v2833
    %v2842 = vadd.f32 %v2826, %v2834
    %v2843 = vadd.f32 %v2827, %v2835
    %v2844 = vadd.f32 %v2828, %v2836
    %v2845 = vadd.f32 %v2829, %v2837
    %s2846 = scalar_lea.vmem [#allocation2], 5
    %v2847 = vld [vmem:[%s2846] ss:$8 sm:$0x7]
    %s2848 = scalar_lea.vmem [#allocation2], 29
    %v2849 = vld [vmem:[%s2848] ss:$8 sm:$0x7]
    %s2850 = scalar_lea.vmem [#allocation2], 53
    %v2851 = vld [vmem:[%s2850] ss:$8 sm:$0x7]
    %s2852 = scalar_lea.vmem [#allocation2], 77
    %v2853 = vld [vmem:[%s2852] ss:$8 sm:$0x7]
    %s2854 = scalar_lea.vmem [#allocation2], 101
    %v2855 = vld [vmem:[%s2854] ss:$8 sm:$0x7]
    %s2856 = scalar_lea.vmem [#allocation2], 125
    %v2857 = vld [vmem:[%s2856] ss:$8 sm:$0x7]
    %s2858 = scalar_lea.vmem [#allocation2], 149
    %v2859 = vld [vmem:[%s2858] ss:$8 sm:$0x7]
    %s2860 = scalar_lea.vmem [#allocation2], 173
    %v2861 = vld [vmem:[%s2860] ss:$8 sm:$0x7]
    %v2870 = vcombine.low %v2838, %v2839
    %v2871 = vcombine.low %v2840, %v2841
    %v2872 = vcombine.low %v2842, %v2843
    %v2873 = vcombine.low %v2844, %v2845
    %v2875 = vunpack.c.l.s4 1966171168
    %v2876 = vunpack.c.0.s8 %v2875
    %v2877 = vlaneseq
    %v2878 = vshrl.u32 %v2877, 7
    %v2879 = vsub.s32 %v2876, %v2878
    %v2880 = vrot.slane %v2870, %v2879
    %v2882 = vunpack.c.l.s4 1966171168
    %v2883 = vunpack.c.0.s8 %v2882
    %v2884 = vlaneseq
    %v2885 = vshrl.u32 %v2884, 7
    %v2886 = vsub.s32 %v2883, %v2885
    %v2887 = vrot.slane %v2871, %v2886
    %v2889 = vunpack.c.l.s4 1966171168
    %v2890 = vunpack.c.0.s8 %v2889
    %v2891 = vlaneseq
    %v2892 = vshrl.u32 %v2891, 7
    %v2893 = vsub.s32 %v2890, %v2892
    %v2894 = vrot.slane %v2872, %v2893
    %v2896 = vunpack.c.l.s4 1966171168
    %v2897 = vunpack.c.0.s8 %v2896
    %v2898 = vlaneseq
    %v2899 = vshrl.u32 %v2898, 7
    %v2900 = vsub.s32 %v2897, %v2899
    %v2901 = vrot.slane %v2873, %v2900
    %v2902 = vcombine.low %v2880, %v2887
    %v2903 = vcombine.low %v2894, %v2901
    %v2905 = vunpack.c.l.s4 1966171168
    %v2906 = vunpack.c.0.s8 %v2905
    %v2907 = vlaneseq
    %v2908 = vshrl.u32 %v2907, 7
    %v2909 = vsub.s32 %v2906, %v2908
    %v2910 = vrot.slane %v2902, %v2909
    %v2912 = vunpack.c.l.s4 1966171168
    %v2913 = vunpack.c.0.s8 %v2912
    %v2914 = vlaneseq
    %v2915 = vshrl.u32 %v2914, 7
    %v2916 = vsub.s32 %v2913, %v2915
    %v2917 = vrot.slane %v2903, %v2916
    %v2918 = vcombine.low %v2910, %v2917
    %2920 = vmatprep.subr.mxu0 %v381
    %2921 = vmatpush1.msra.mxu0 %v380
    %2922 = vmatprep.subr.mxu0 %v384
    %2923 = vmatpush1.msra.mxu0 %v383
    %2924 = vmatprep.subr.mxu0 %v387
    %2925 = vmatpush1.msra.mxu0 %v386
    %2926 = vmatprep.subr.mxu0 %v390
    %2927 = vmatpush1.msra.mxu0 %v389
    %2928 = vmatprep.subr.mxu0 %v393
    %2929 = vmatpush1.msra.mxu0 %v392
    %2930 = vmatprep.subr.mxu0 %v396
    %2931 = vmatpush1.msra.mxu0 %v395
    %2932 = vmatprep.subr.mxu0 %v399
    %2933 = vmatpush1.msra.mxu0 %v398
    %2934 = vmatprep.subr.mxu0 %v402
    %2935 = vmatpush1.msra.mxu0 %v401
    %2936 = vmatprep.subr.mxu0 %v405
    %2937 = vmatpush1.msra.mxu0 %v404
    %2938 = vmatprep.subr.mxu0 %v408
    %2939 = vmatpush1.msra.mxu0 %v407
    %2940 = vmatprep.subr.mxu0 %v411
    %2941 = vmatpush1.msra.mxu0 %v410
    %2942 = vmatprep.subr.mxu0 %v414
    %2943 = vmatpush1.msra.mxu0 %v413
    %2944 = vmatprep.subr.mxu0 %v417
    %2945 = vmatpush1.msra.mxu0 %v416
    %2946 = vmatprep.subr.mxu0 %v420
    %2947 = vmatpush1.msra.mxu0 %v419
    %2948 = vmatprep.subr.mxu0 %v423
    %2949 = vmatpush1.msra.mxu0 %v422
    %2950 = vmatprep.subr.mxu0 %v426
    %2951 = vmatpush1.msra.mxu0 %v425
    %2952 = vmatprep.subr.mxu0 0.0
    %2953 = vmatpush1.msra.mxu0 0.0
    %2954 = vmatprep.subr.mxu0 0.0
    %2955 = vmatpush1.msra.mxu0 0.0
    %2956 = vmatprep.subr.mxu0 0.0
    %2957 = vmatpush1.msra.mxu0 0.0
    %2958 = vmatprep.subr.mxu0 0.0
    %2959 = vmatpush1.msra.mxu0 0.0
    %2960 = vmatprep.subr.mxu0 0.0
    %2961 = vmatpush1.msra.mxu0 0.0
    %2962 = vmatprep.subr.mxu0 0.0
    %2963 = vmatpush1.msra.mxu0 0.0
    %2964 = vmatprep.subr.mxu0 0.0
    %2965 = vmatpush1.msra.mxu0 0.0
    %2966 = vmatprep.subr.mxu0 0.0
    %2967 = vmatpush1.msra.mxu0 0.0
    %2968 = vmatprep.subr.mxu0 0.0
    %2969 = vmatpush1.msra.mxu0 0.0
    %2970 = vmatprep.subr.mxu0 0.0
    %2971 = vmatpush1.msra.mxu0 0.0
    %2972 = vmatprep.subr.mxu0 0.0
    %2973 = vmatpush1.msra.mxu0 0.0
    %2974 = vmatprep.subr.mxu0 0.0
    %2975 = vmatpush1.msra.mxu0 0.0
    %2976 = vmatprep.subr.mxu0 0.0
    %2977 = vmatpush1.msra.mxu0 0.0
    %2978 = vmatprep.subr.mxu0 0.0
    %2979 = vmatpush1.msra.mxu0 0.0
    %2980 = vmatprep.subr.mxu0 0.0
    %2981 = vmatpush1.msra.mxu0 0.0
    %2982 = vmatprep.subr.mxu0 0.0
    %2983 = vmatpush1.msra.mxu0 0.0
    %2984 = vmatprep.mubr.f32.mxu0 0.0
    %2985 = vmatmul.mubr.f32.gmra.mrb[0].mxu0 %v2918
    %v2986 = vpop.f32.mrb[0].mxu0
    %v2987 = vadd.f32 0.0, %v2986
    %v2988 = vpop.f32.mrb[0].mxu0
    %v2989 = vadd.f32 0.0, %v2988
    %2990 = vdwg.mxu0
    %2991 = vmatprep.subr.mxu0 0.0
    %2992 = vmatpush1.msra.mxu0 %v382
    %2993 = vmatprep.subr.mxu0 0.0
    %2994 = vmatpush1.msra.mxu0 %v385
    %2995 = vmatprep.subr.mxu0 0.0
    %2996 = vmatpush1.msra.mxu0 %v388
    %2997 = vmatprep.subr.mxu0 0.0
    %2998 = vmatpush1.msra.mxu0 %v391
    %2999 = vmatprep.subr.mxu0 0.0
    %3000 = vmatpush1.msra.mxu0 %v394
    %3001 = vmatprep.subr.mxu0 0.0
    %3002 = vmatpush1.msra.mxu0 %v397
    %3003 = vmatprep.subr.mxu0 0.0
    %3004 = vmatpush1.msra.mxu0 %v400
    %3005 = vmatprep.subr.mxu0 0.0
    %3006 = vmatpush1.msra.mxu0 %v403
    %3007 = vmatprep.subr.mxu0 0.0
    %3008 = vmatpush1.msra.mxu0 %v406
    %3009 = vmatprep.subr.mxu0 0.0
    %3010 = vmatpush1.msra.mxu0 %v409
    %3011 = vmatprep.subr.mxu0 0.0
    %3012 = vmatpush1.msra.mxu0 %v412
    %3013 = vmatprep.subr.mxu0 0.0
    %3014 = vmatpush1.msra.mxu0 %v415
    %3015 = vmatprep.subr.mxu0 0.0
    %3016 = vmatpush1.msra.mxu0 %v418
    %3017 = vmatprep.subr.mxu0 0.0
    %3018 = vmatpush1.msra.mxu0 %v421
    %3019 = vmatprep.subr.mxu0 0.0
    %3020 = vmatpush1.msra.mxu0 %v424
    %3021 = vmatprep.subr.mxu0 0.0
    %3022 = vmatpush1.msra.mxu0 %v427
    %3023 = vmatprep.subr.mxu0 0.0
    %3024 = vmatpush1.msra.mxu0 0.0
    %3025 = vmatprep.subr.mxu0 0.0
    %3026 = vmatpush1.msra.mxu0 0.0
    %3027 = vmatprep.subr.mxu0 0.0
    %3028 = vmatpush1.msra.mxu0 0.0
    %3029 = vmatprep.subr.mxu0 0.0
    %3030 = vmatpush1.msra.mxu0 0.0
    %3031 = vmatprep.subr.mxu0 0.0
    %3032 = vmatpush1.msra.mxu0 0.0
    %3033 = vmatprep.subr.mxu0 0.0
    %3034 = vmatpush1.msra.mxu0 0.0
    %3035 = vmatprep.subr.mxu0 0.0
    %3036 = vmatpush1.msra.mxu0 0.0
    %3037 = vmatprep.subr.mxu0 0.0
    %3038 = vmatpush1.msra.mxu0 0.0
    %3039 = vmatprep.subr.mxu0 0.0
    %3040 = vmatpush1.msra.mxu0 0.0
    %3041 = vmatprep.subr.mxu0 0.0
    %3042 = vmatpush1.msra.mxu0 0.0
    %3043 = vmatprep.subr.mxu0 0.0
    %3044 = vmatpush1.msra.mxu0 0.0
    %3045 = vmatprep.subr.mxu0 0.0
    %3046 = vmatpush1.msra.mxu0 0.0
    %3047 = vmatprep.subr.mxu0 0.0
    %3048 = vmatpush1.msra.mxu0 0.0
    %3049 = vmatprep.subr.mxu0 0.0
    %3050 = vmatpush1.msra.mxu0 0.0
    %3051 = vmatprep.subr.mxu0 0.0
    %3052 = vmatpush1.msra.mxu0 0.0
    %3053 = vmatprep.subr.mxu0 0.0
    %3054 = vmatpush1.msra.mxu0 0.0
    %3055 = vmatprep.mubr.f32.mxu0 0.0
    %3056 = vmatmul.mubr.f32.gmra.mrb[0].mxu0 %v2918
    %v3057 = vpop.f32.mrb[0].mxu0
    %v3058 = vadd.f32 0.0, %v3057
    %v3059 = vpop.f32.mrb[0].mxu0
    %3060 = vdwg.mxu0
    %v3063 = vcombine.low %v2987, %v2989
    %v3064 = vcombine.high %v2987, %v2989
    %v3066 = vunpack.c.l.s4 1966171168
    %v3067 = vunpack.c.0.s8 %v3066
    %v3068 = vlaneseq
    %v3069 = vshrl.u32 %v3068, 7
    %v3070 = vsub.s32 %v3067, %v3069
    %v3071 = vrot.slane %v3063, %v3070
    %v3073 = vunpack.c.l.s4 1966171168
    %v3074 = vunpack.c.0.s8 %v3073
    %v3075 = vlaneseq
    %v3076 = vshrl.u32 %v3075, 7
    %v3077 = vsub.s32 %v3074, %v3076
    %v3078 = vrot.slane %v3064, %v3077
    %v3079 = vcombine.high %v3071, %v3071
    %v3080 = vcombine.high %v3078, %v3078
    %v3082 = vunpack.c.l.s4 1966171168
    %v3083 = vunpack.c.0.s8 %v3082
    %v3084 = vlaneseq
    %v3085 = vshrl.u32 %v3084, 7
    %v3086 = vsub.s32 %v3083, %v3085
    %v3087 = vrot.slane %v3071, %v3086
    %v3089 = vunpack.c.l.s4 1966171168
    %v3090 = vunpack.c.0.s8 %v3089
    %v3091 = vlaneseq
    %v3092 = vshrl.u32 %v3091, 7
    %v3093 = vsub.s32 %v3090, %v3092
    %v3094 = vrot.slane %v3078, %v3093
    %v3096 = vunpack.c.l.s4 1966171168
    %v3097 = vunpack.c.0.s8 %v3096
    %v3098 = vlaneseq
    %v3099 = vshrl.u32 %v3098, 7
    %v3100 = vsub.s32 %v3097, %v3099
    %v3101 = vrot.slane %v3079, %v3100
    %v3103 = vunpack.c.l.s4 1966171168
    %v3104 = vunpack.c.0.s8 %v3103
    %v3105 = vlaneseq
    %v3106 = vshrl.u32 %v3105, 7
    %v3107 = vsub.s32 %v3104, %v3106
    %v3108 = vrot.slane %v3080, %v3107
    %v3109 = vcombine.high %v3087, %v3087
    %v3110 = vcombine.high %v3094, %v3094
    %v3111 = vcombine.high %v3101, %v3101
    %v3112 = vcombine.high %v3108, %v3108
    %v3121 = vadd.f32 %v2847, %v3087
    %v3122 = vadd.f32 %v2849, %v3101
    %v3123 = vadd.f32 %v2851, %v3109
    %v3124 = vadd.f32 %v2853, %v3111
    %v3125 = vadd.f32 %v2855, %v3094
    %v3126 = vadd.f32 %v2857, %v3108
    %v3127 = vadd.f32 %v2859, %v3110
    %v3128 = vadd.f32 %v2861, %v3112
    %v3129 = vxor.u32 %v3121, 2147483648
    %v3130 = vxor.u32 %v3122, 2147483648
    %v3131 = vxor.u32 %v3123, 2147483648
    %v3132 = vxor.u32 %v3124, 2147483648
    %v3133 = vxor.u32 %v3125, 2147483648
    %v3134 = vxor.u32 %v3126, 2147483648
    %v3135 = vxor.u32 %v3127, 2147483648
    %v3136 = vxor.u32 %v3128, 2147483648
    %v3137 = vmul.f32 %v3129, 1.442695
    %v3138 = vpow.pop %v3137
    %v3139 = vmul.f32 %v3130, 1.442695
    %v3140 = vpow.pop %v3139
    %v3141 = vmul.f32 %v3131, 1.442695
    %v3142 = vpow.pop %v3141
    %v3143 = vmul.f32 %v3132, 1.442695
    %v3144 = vpow.pop %v3143
    %v3145 = vmul.f32 %v3133, 1.442695
    %v3146 = vpow.pop %v3145
    %v3147 = vmul.f32 %v3134, 1.442695
    %v3148 = vpow.pop %v3147
    %v3149 = vmul.f32 %v3135, 1.442695
    %v3150 = vpow.pop %v3149
    %v3151 = vmul.f32 %v3136, 1.442695
    %v3152 = vpow.pop %v3151
    %v3153 = vadd.f32 %v3138, 1.0
    %v3154 = vadd.f32 %v3140, 1.0
    %v3155 = vadd.f32 %v3142, 1.0
    %v3156 = vadd.f32 %v3144, 1.0
    %v3157 = vadd.f32 %v3146, 1.0
    %v3158 = vadd.f32 %v3148, 1.0
    %v3159 = vadd.f32 %v3150, 1.0
    %v3160 = vadd.f32 %v3152, 1.0
    %v3161 = vrcp.pop %v3153
    %v3162 = vmul.f32 1.0, %v3161
    %v3163 = vrcp.pop %v3154
    %v3164 = vmul.f32 1.0, %v3163
    %v3165 = vrcp.pop %v3155
    %v3166 = vmul.f32 1.0, %v3165
    %v3167 = vrcp.pop %v3156
    %v3168 = vmul.f32 1.0, %v3167
    %v3169 = vrcp.pop %v3157
    %v3170 = vmul.f32 1.0, %v3169
    %v3171 = vrcp.pop %v3158
    %v3172 = vmul.f32 1.0, %v3171
    %v3173 = vrcp.pop %v3159
    %v3174 = vmul.f32 1.0, %v3173
    %v3175 = vrcp.pop %v3160
    %v3176 = vmul.f32 1.0, %v3175
    %v3177 = vadd.f32 %v3058, %v433
    %v3179 = vcombine.high %v3177, %v3177
    %v3181 = vunpack.c.l.s4 1966171168
    %v3182 = vunpack.c.0.s8 %v3181
    %v3183 = vlaneseq
    %v3184 = vshrl.u32 %v3183, 7
    %v3185 = vsub.s32 %v3182, %v3184
    %v3186 = vrot.slane %v3177, %v3185
    %v3188 = vunpack.c.l.s4 1966171168
    %v3189 = vunpack.c.0.s8 %v3188
    %v3190 = vlaneseq
    %v3191 = vshrl.u32 %v3190, 7
    %v3192 = vsub.s32 %v3189, %v3191
    %v3193 = vrot.slane %v3179, %v3192
    %v3194 = vcombine.high %v3186, %v3186
    %v3195 = vcombine.high %v3193, %v3193
    %v3197 = vunpack.c.l.s4 1966171168
    %v3198 = vunpack.c.0.s8 %v3197
    %v3199 = vlaneseq
    %v3200 = vshrl.u32 %v3199, 7
    %v3201 = vsub.s32 %v3198, %v3200
    %v3202 = vrot.slane %v3186, %v3201
    %v3204 = vunpack.c.l.s4 1966171168
    %v3205 = vunpack.c.0.s8 %v3204
    %v3206 = vlaneseq
    %v3207 = vshrl.u32 %v3206, 7
    %v3208 = vsub.s32 %v3205, %v3207
    %v3209 = vrot.slane %v3193, %v3208
    %v3211 = vunpack.c.l.s4 1966171168
    %v3212 = vunpack.c.0.s8 %v3211
    %v3213 = vlaneseq
    %v3214 = vshrl.u32 %v3213, 7
    %v3215 = vsub.s32 %v3212, %v3214
    %v3216 = vrot.slane %v3194, %v3215
    %v3218 = vunpack.c.l.s4 1966171168
    %v3219 = vunpack.c.0.s8 %v3218
    %v3220 = vlaneseq
    %v3221 = vshrl.u32 %v3220, 7
    %v3222 = vsub.s32 %v3219, %v3221
    %v3223 = vrot.slane %v3195, %v3222
    %v3224 = vcombine.high %v3202, %v3202
    %v3225 = vcombine.high %v3209, %v3209
    %v3226 = vcombine.high %v3216, %v3216
    %v3227 = vcombine.high %v3223, %v3223
    %v3236 = vmul.f32 %v3162, %v3202
    %v3237 = vmul.f32 %v3164, %v3216
    %v3238 = vmul.f32 %v3166, %v3224
    %v3239 = vmul.f32 %v3168, %v3226
    %v3240 = vmul.f32 %v3170, %v3209
    %v3241 = vmul.f32 %v3172, %v3223
    %v3242 = vmul.f32 %v3174, %v3225
    %v3243 = vmul.f32 %v3176, %v3227
    %v3252 = vrot.slane %v2847, 2
    %v3253 = vrot.slane %v2849, 2
    %v3254 = vrot.slane %v2851, 2
    %v3255 = vrot.slane %v2853, 2
    %v3256 = vrot.slane %v2855, 2
    %v3257 = vrot.slane %v2857, 2
    %v3258 = vrot.slane %v2859, 2
    %v3259 = vrot.slane %v2861, 2
    %v3268 = vadd.f32 %v3252, %v3236
    %v3269 = vadd.f32 %v3253, %v3237
    %v3270 = vadd.f32 %v3254, %v3238
    %v3271 = vadd.f32 %v3255, %v3239
    %v3272 = vadd.f32 %v3256, %v3240
    %v3273 = vadd.f32 %v3257, %v3241
    %v3274 = vadd.f32 %v3258, %v3242
    %v3275 = vadd.f32 %v3259, %v3243
    %v3276 = vtanh.pop %v3268
    %v3277 = vtanh.pop %v3269
    %v3278 = vtanh.pop %v3270
    %v3279 = vtanh.pop %v3271
    %v3280 = vtanh.pop %v3272
    %v3281 = vtanh.pop %v3273
    %v3282 = vtanh.pop %v3274
    %v3283 = vtanh.pop %v3275
    %v3292 = vrot.slane %v3162, 1
    %v3293 = vrot.slane %v3164, 1
    %v3294 = vrot.slane %v3166, 1
    %v3295 = vrot.slane %v3168, 1
    %v3296 = vrot.slane %v3170, 1
    %v3297 = vrot.slane %v3172, 1
    %v3298 = vrot.slane %v3174, 1
    %v3299 = vrot.slane %v3176, 1
    %v3308 = vsub.f32 1.0, %v3292
    %v3309 = vsub.f32 1.0, %v3293
    %v3310 = vsub.f32 1.0, %v3294
    %v3311 = vsub.f32 1.0, %v3295
    %v3312 = vsub.f32 1.0, %v3296
    %v3313 = vsub.f32 1.0, %v3297
    %v3314 = vsub.f32 1.0, %v3298
    %v3315 = vsub.f32 1.0, %v3299
    %v3316 = vmul.f32 %v3308, %v3276
    %v3317 = vmul.f32 %v3309, %v3277
    %v3318 = vmul.f32 %v3310, %v3278
    %v3319 = vmul.f32 %v3311, %v3279
    %v3320 = vmul.f32 %v3312, %v3280
    %v3321 = vmul.f32 %v3313, %v3281
    %v3322 = vmul.f32 %v3314, %v3282
    %v3323 = vmul.f32 %v3315, %v3283
    %v3324 = vmul.f32 %v3292, %v2838
    %v3325 = vmul.f32 %v3293, %v2839
    %v3326 = vmul.f32 %v3294, %v2840
    %v3327 = vmul.f32 %v3295, %v2841
    %v3328 = vmul.f32 %v3296, %v2842
    %v3329 = vmul.f32 %v3297, %v2843
    %v3330 = vmul.f32 %v3298, %v2844
    %v3331 = vmul.f32 %v3299, %v2845
    %v3332 = vadd.f32 %v3316, %v3324
    %v3333 = vadd.f32 %v3317, %v3325
    %v3334 = vadd.f32 %v3318, %v3326
    %v3335 = vadd.f32 %v3319, %v3327
    %v3336 = vadd.f32 %v3320, %v3328
    %v3337 = vadd.f32 %v3321, %v3329
    %v3338 = vadd.f32 %v3322, %v3330
    %v3339 = vadd.f32 %v3323, %v3331
    %s3340 = scalar_lea.vmem [#allocation2], 6
    %v3341 = vld [vmem:[%s3340] ss:$8 sm:$0x7]
    %s3342 = scalar_lea.vmem [#allocation2], 30
    %v3343 = vld [vmem:[%s3342] ss:$8 sm:$0x7]
    %s3344 = scalar_lea.vmem [#allocation2], 54
    %v3345 = vld [vmem:[%s3344] ss:$8 sm:$0x7]
    %s3346 = scalar_lea.vmem [#allocation2], 78
    %v3347 = vld [vmem:[%s3346] ss:$8 sm:$0x7]
    %s3348 = scalar_lea.vmem [#allocation2], 102
    %v3349 = vld [vmem:[%s3348] ss:$8 sm:$0x7]
    %s3350 = scalar_lea.vmem [#allocation2], 126
    %v3351 = vld [vmem:[%s3350] ss:$8 sm:$0x7]
    %s3352 = scalar_lea.vmem [#allocation2], 150
    %v3353 = vld [vmem:[%s3352] ss:$8 sm:$0x7]
    %s3354 = scalar_lea.vmem [#allocation2], 174
    %v3355 = vld [vmem:[%s3354] ss:$8 sm:$0x7]
    %v3364 = vcombine.low %v3332, %v3333
    %v3365 = vcombine.low %v3334, %v3335
    %v3366 = vcombine.low %v3336, %v3337
    %v3367 = vcombine.low %v3338, %v3339
    %v3369 = vunpack.c.l.s4 1966171168
    %v3370 = vunpack.c.0.s8 %v3369
    %v3371 = vlaneseq
    %v3372 = vshrl.u32 %v3371, 7
    %v3373 = vsub.s32 %v3370, %v3372
    %v3374 = vrot.slane %v3364, %v3373
    %v3376 = vunpack.c.l.s4 1966171168
    %v3377 = vunpack.c.0.s8 %v3376
    %v3378 = vlaneseq
    %v3379 = vshrl.u32 %v3378, 7
    %v3380 = vsub.s32 %v3377, %v3379
    %v3381 = vrot.slane %v3365, %v3380
    %v3383 = vunpack.c.l.s4 1966171168
    %v3384 = vunpack.c.0.s8 %v3383
    %v3385 = vlaneseq
    %v3386 = vshrl.u32 %v3385, 7
    %v3387 = vsub.s32 %v3384, %v3386
    %v3388 = vrot.slane %v3366, %v3387
    %v3390 = vunpack.c.l.s4 1966171168
    %v3391 = vunpack.c.0.s8 %v3390
    %v3392 = vlaneseq
    %v3393 = vshrl.u32 %v3392, 7
    %v3394 = vsub.s32 %v3391, %v3393
    %v3395 = vrot.slane %v3367, %v3394
    %v3396 = vcombine.low %v3374, %v3381
    %v3397 = vcombine.low %v3388, %v3395
    %v3399 = vunpack.c.l.s4 1966171168
    %v3400 = vunpack.c.0.s8 %v3399
    %v3401 = vlaneseq
    %v3402 = vshrl.u32 %v3401, 7
    %v3403 = vsub.s32 %v3400, %v3402
    %v3404 = vrot.slane %v3396, %v3403
    %v3406 = vunpack.c.l.s4 1966171168
    %v3407 = vunpack.c.0.s8 %v3406
    %v3408 = vlaneseq
    %v3409 = vshrl.u32 %v3408, 7
    %v3410 = vsub.s32 %v3407, %v3409
    %v3411 = vrot.slane %v3397, %v3410
    %v3412 = vcombine.low %v3404, %v3411
    %3414 = vmatprep.subr.mxu0 %v381
    %3415 = vmatpush1.msra.mxu0 %v380
    %3416 = vmatprep.subr.mxu0 %v384
    %3417 = vmatpush1.msra.mxu0 %v383
    %3418 = vmatprep.subr.mxu0 %v387
    %3419 = vmatpush1.msra.mxu0 %v386
    %3420 = vmatprep.subr.mxu0 %v390
    %3421 = vmatpush1.msra.mxu0 %v389
    %3422 = vmatprep.subr.mxu0 %v393
    %3423 = vmatpush1.msra.mxu0 %v392
    %3424 = vmatprep.subr.mxu0 %v396
    %3425 = vmatpush1.msra.mxu0 %v395
    %3426 = vmatprep.subr.mxu0 %v399
    %3427 = vmatpush1.msra.mxu0 %v398
    %3428 = vmatprep.subr.mxu0 %v402
    %3429 = vmatpush1.msra.mxu0 %v401
    %3430 = vmatprep.subr.mxu0 %v405
    %3431 = vmatpush1.msra.mxu0 %v404
    %3432 = vmatprep.subr.mxu0 %v408
    %3433 = vmatpush1.msra.mxu0 %v407
    %3434 = vmatprep.subr.mxu0 %v411
    %3435 = vmatpush1.msra.mxu0 %v410
    %3436 = vmatprep.subr.mxu0 %v414
    %3437 = vmatpush1.msra.mxu0 %v413
    %3438 = vmatprep.subr.mxu0 %v417
    %3439 = vmatpush1.msra.mxu0 %v416
    %3440 = vmatprep.subr.mxu0 %v420
    %3441 = vmatpush1.msra.mxu0 %v419
    %3442 = vmatprep.subr.mxu0 %v423
    %3443 = vmatpush1.msra.mxu0 %v422
    %3444 = vmatprep.subr.mxu0 %v426
    %3445 = vmatpush1.msra.mxu0 %v425
    %3446 = vmatprep.subr.mxu0 0.0
    %3447 = vmatpush1.msra.mxu0 0.0
    %3448 = vmatprep.subr.mxu0 0.0
    %3449 = vmatpush1.msra.mxu0 0.0
    %3450 = vmatprep.subr.mxu0 0.0
    %3451 = vmatpush1.msra.mxu0 0.0
    %3452 = vmatprep.subr.mxu0 0.0
    %3453 = vmatpush1.msra.mxu0 0.0
    %3454 = vmatprep.subr.mxu0 0.0
    %3455 = vmatpush1.msra.mxu0 0.0
    %3456 = vmatprep.subr.mxu0 0.0
    %3457 = vmatpush1.msra.mxu0 0.0
    %3458 = vmatprep.subr.mxu0 0.0
    %3459 = vmatpush1.msra.mxu0 0.0
    %3460 = vmatprep.subr.mxu0 0.0
    %3461 = vmatpush1.msra.mxu0 0.0
    %3462 = vmatprep.subr.mxu0 0.0
    %3463 = vmatpush1.msra.mxu0 0.0
    %3464 = vmatprep.subr.mxu0 0.0
    %3465 = vmatpush1.msra.mxu0 0.0
    %3466 = vmatprep.subr.mxu0 0.0
    %3467 = vmatpush1.msra.mxu0 0.0
    %3468 = vmatprep.subr.mxu0 0.0
    %3469 = vmatpush1.msra.mxu0 0.0
    %3470 = vmatprep.subr.mxu0 0.0
    %3471 = vmatpush1.msra.mxu0 0.0
    %3472 = vmatprep.subr.mxu0 0.0
    %3473 = vmatpush1.msra.mxu0 0.0
    %3474 = vmatprep.subr.mxu0 0.0
    %3475 = vmatpush1.msra.mxu0 0.0
    %3476 = vmatprep.subr.mxu0 0.0
    %3477 = vmatpush1.msra.mxu0 0.0
    %3478 = vmatprep.mubr.f32.mxu0 0.0
    %3479 = vmatmul.mubr.f32.gmra.mrb[0].mxu0 %v3412
    %v3480 = vpop.f32.mrb[0].mxu0
    %v3481 = vadd.f32 0.0, %v3480
    %v3482 = vpop.f32.mrb[0].mxu0
    %v3483 = vadd.f32 0.0, %v3482
    %3484 = vdwg.mxu0
    %3485 = vmatprep.subr.mxu0 0.0
    %3486 = vmatpush1.msra.mxu0 %v382
    %3487 = vmatprep.subr.mxu0 0.0
    %3488 = vmatpush1.msra.mxu0 %v385
    %3489 = vmatprep.subr.mxu0 0.0
    %3490 = vmatpush1.msra.mxu0 %v388
    %3491 = vmatprep.subr.mxu0 0.0
    %3492 = vmatpush1.msra.mxu0 %v391
    %3493 = vmatprep.subr.mxu0 0.0
    %3494 = vmatpush1.msra.mxu0 %v394
    %3495 = vmatprep.subr.mxu0 0.0
    %3496 = vmatpush1.msra.mxu0 %v397
    %3497 = vmatprep.subr.mxu0 0.0
    %3498 = vmatpush1.msra.mxu0 %v400
    %3499 = vmatprep.subr.mxu0 0.0
    %3500 = vmatpush1.msra.mxu0 %v403
    %3501 = vmatprep.subr.mxu0 0.0
    %3502 = vmatpush1.msra.mxu0 %v406
    %3503 = vmatprep.subr.mxu0 0.0
    %3504 = vmatpush1.msra.mxu0 %v409
    %3505 = vmatprep.subr.mxu0 0.0
    %3506 = vmatpush1.msra.mxu0 %v412
    %3507 = vmatprep.subr.mxu0 0.0
    %3508 = vmatpush1.msra.mxu0 %v415
    %3509 = vmatprep.subr.mxu0 0.0
    %3510 = vmatpush1.msra.mxu0 %v418
    %3511 = vmatprep.subr.mxu0 0.0
    %3512 = vmatpush1.msra.mxu0 %v421
    %3513 = vmatprep.subr.mxu0 0.0
    %3514 = vmatpush1.msra.mxu0 %v424
    %3515 = vmatprep.subr.mxu0 0.0
    %3516 = vmatpush1.msra.mxu0 %v427
    %3517 = vmatprep.subr.mxu0 0.0
    %3518 = vmatpush1.msra.mxu0 0.0
    %3519 = vmatprep.subr.mxu0 0.0
    %3520 = vmatpush1.msra.mxu0 0.0
    %3521 = vmatprep.subr.mxu0 0.0
    %3522 = vmatpush1.msra.mxu0 0.0
    %3523 = vmatprep.subr.mxu0 0.0
    %3524 = vmatpush1.msra.mxu0 0.0
    %3525 = vmatprep.subr.mxu0 0.0
    %3526 = vmatpush1.msra.mxu0 0.0
    %3527 = vmatprep.subr.mxu0 0.0
    %3528 = vmatpush1.msra.mxu0 0.0
    %3529 = vmatprep.subr.mxu0 0.0
    %3530 = vmatpush1.msra.mxu0 0.0
    %3531 = vmatprep.subr.mxu0 0.0
    %3532 = vmatpush1.msra.mxu0 0.0
    %3533 = vmatprep.subr.mxu0 0.0
    %3534 = vmatpush1.msra.mxu0 0.0
    %3535 = vmatprep.subr.mxu0 0.0
    %3536 = vmatpush1.msra.mxu0 0.0
    %3537 = vmatprep.subr.mxu0 0.0
    %3538 = vmatpush1.msra.mxu0 0.0
    %3539 = vmatprep.subr.mxu0 0.0
    %3540 = vmatpush1.msra.mxu0 0.0
    %3541 = vmatprep.subr.mxu0 0.0
    %3542 = vmatpush1.msra.mxu0 0.0
    %3543 = vmatprep.subr.mxu0 0.0
    %3544 = vmatpush1.msra.mxu0 0.0
    %3545 = vmatprep.subr.mxu0 0.0
    %3546 = vmatpush1.msra.mxu0 0.0
    %3547 = vmatprep.subr.mxu0 0.0
    %3548 = vmatpush1.msra.mxu0 0.0
    %3549 = vmatprep.mubr.f32.mxu0 0.0
    %3550 = vmatmul.mubr.f32.gmra.mrb[0].mxu0 %v3412
    %v3551 = vpop.f32.mrb[0].mxu0
    %v3552 = vadd.f32 0.0, %v3551
    %v3553 = vpop.f32.mrb[0].mxu0
    %3554 = vdwg.mxu0
    %v3557 = vcombine.low %v3481, %v3483
    %v3558 = vcombine.high %v3481, %v3483
    %v3560 = vunpack.c.l.s4 1966171168
    %v3561 = vunpack.c.0.s8 %v3560
    %v3562 = vlaneseq
    %v3563 = vshrl.u32 %v3562, 7
    %v3564 = vsub.s32 %v3561, %v3563
    %v3565 = vrot.slane %v3557, %v3564
    %v3567 = vunpack.c.l.s4 1966171168
    %v3568 = vunpack.c.0.s8 %v3567
    %v3569 = vlaneseq
    %v3570 = vshrl.u32 %v3569, 7
    %v3571 = vsub.s32 %v3568, %v3570
    %v3572 = vrot.slane %v3558, %v3571
    %v3573 = vcombine.high %v3565, %v3565
    %v3574 = vcombine.high %v3572, %v3572
    %v3576 = vunpack.c.l.s4 1966171168
    %v3577 = vunpack.c.0.s8 %v3576
    %v3578 = vlaneseq
    %v3579 = vshrl.u32 %v3578, 7
    %v3580 = vsub.s32 %v3577, %v3579
    %v3581 = vrot.slane %v3565, %v3580
    %v3583 = vunpack.c.l.s4 1966171168
    %v3584 = vunpack.c.0.s8 %v3583
    %v3585 = vlaneseq
    %v3586 = vshrl.u32 %v3585, 7
    %v3587 = vsub.s32 %v3584, %v3586
    %v3588 = vrot.slane %v3572, %v3587
    %v3590 = vunpack.c.l.s4 1966171168
    %v3591 = vunpack.c.0.s8 %v3590
    %v3592 = vlaneseq
    %v3593 = vshrl.u32 %v3592, 7
    %v3594 = vsub.s32 %v3591, %v3593
    %v3595 = vrot.slane %v3573, %v3594
    %v3597 = vunpack.c.l.s4 1966171168
    %v3598 = vunpack.c.0.s8 %v3597
    %v3599 = vlaneseq
    %v3600 = vshrl.u32 %v3599, 7
    %v3601 = vsub.s32 %v3598, %v3600
    %v3602 = vrot.slane %v3574, %v3601
    %v3603 = vcombine.high %v3581, %v3581
    %v3604 = vcombine.high %v3588, %v3588
    %v3605 = vcombine.high %v3595, %v3595
    %v3606 = vcombine.high %v3602, %v3602
    %v3615 = vadd.f32 %v3341, %v3581
    %v3616 = vadd.f32 %v3343, %v3595
    %v3617 = vadd.f32 %v3345, %v3603
    %v3618 = vadd.f32 %v3347, %v3605
    %v3619 = vadd.f32 %v3349, %v3588
    %v3620 = vadd.f32 %v3351, %v3602
    %v3621 = vadd.f32 %v3353, %v3604
    %v3622 = vadd.f32 %v3355, %v3606
    %v3623 = vxor.u32 %v3615, 2147483648
    %v3624 = vxor.u32 %v3616, 2147483648
    %v3625 = vxor.u32 %v3617, 2147483648
    %v3626 = vxor.u32 %v3618, 2147483648
    %v3627 = vxor.u32 %v3619, 2147483648
    %v3628 = vxor.u32 %v3620, 2147483648
    %v3629 = vxor.u32 %v3621, 2147483648
    %v3630 = vxor.u32 %v3622, 2147483648
    %v3631 = vmul.f32 %v3623, 1.442695
    %v3632 = vpow.pop %v3631
    %v3633 = vmul.f32 %v3624, 1.442695
    %v3634 = vpow.pop %v3633
    %v3635 = vmul.f32 %v3625, 1.442695
    %v3636 = vpow.pop %v3635
    %v3637 = vmul.f32 %v3626, 1.442695
    %v3638 = vpow.pop %v3637
    %v3639 = vmul.f32 %v3627, 1.442695
    %v3640 = vpow.pop %v3639
    %v3641 = vmul.f32 %v3628, 1.442695
    %v3642 = vpow.pop %v3641
    %v3643 = vmul.f32 %v3629, 1.442695
    %v3644 = vpow.pop %v3643
    %v3645 = vmul.f32 %v3630, 1.442695
    %v3646 = vpow.pop %v3645
    %v3647 = vadd.f32 %v3632, 1.0
    %v3648 = vadd.f32 %v3634, 1.0
    %v3649 = vadd.f32 %v3636, 1.0
    %v3650 = vadd.f32 %v3638, 1.0
    %v3651 = vadd.f32 %v3640, 1.0
    %v3652 = vadd.f32 %v3642, 1.0
    %v3653 = vadd.f32 %v3644, 1.0
    %v3654 = vadd.f32 %v3646, 1.0
    %v3655 = vrcp.pop %v3647
    %v3656 = vmul.f32 1.0, %v3655
    %v3657 = vrcp.pop %v3648
    %v3658 = vmul.f32 1.0, %v3657
    %v3659 = vrcp.pop %v3649
    %v3660 = vmul.f32 1.0, %v3659
    %v3661 = vrcp.pop %v3650
    %v3662 = vmul.f32 1.0, %v3661
    %v3663 = vrcp.pop %v3651
    %v3664 = vmul.f32 1.0, %v3663
    %v3665 = vrcp.pop %v3652
    %v3666 = vmul.f32 1.0, %v3665
    %v3667 = vrcp.pop %v3653
    %v3668 = vmul.f32 1.0, %v3667
    %v3669 = vrcp.pop %v3654
    %v3670 = vmul.f32 1.0, %v3669
    %v3671 = vadd.f32 %v3552, %v433
    %v3673 = vcombine.high %v3671, %v3671
    %v3675 = vunpack.c.l.s4 1966171168
    %v3676 = vunpack.c.0.s8 %v3675
    %v3677 = vlaneseq
    %v3678 = vshrl.u32 %v3677, 7
    %v3679 = vsub.s32 %v3676, %v3678
    %v3680 = vrot.slane %v3671, %v3679
    %v3682 = vunpack.c.l.s4 1966171168
    %v3683 = vunpack.c.0.s8 %v3682
    %v3684 = vlaneseq
    %v3685 = vshrl.u32 %v3684, 7
    %v3686 = vsub.s32 %v3683, %v3685
    %v3687 = vrot.slane %v3673, %v3686
    %v3688 = vcombine.high %v3680, %v3680
    %v3689 = vcombine.high %v3687, %v3687
    %v3691 = vunpack.c.l.s4 1966171168
    %v3692 = vunpack.c.0.s8 %v3691
    %v3693 = vlaneseq
    %v3694 = vshrl.u32 %v3693, 7
    %v3695 = vsub.s32 %v3692, %v3694
    %v3696 = vrot.slane %v3680, %v3695
    %v3698 = vunpack.c.l.s4 1966171168
    %v3699 = vunpack.c.0.s8 %v3698
    %v3700 = vlaneseq
    %v3701 = vshrl.u32 %v3700, 7
    %v3702 = vsub.s32 %v3699, %v3701
    %v3703 = vrot.slane %v3687, %v3702
    %v3705 = vunpack.c.l.s4 1966171168
    %v3706 = vunpack.c.0.s8 %v3705
    %v3707 = vlaneseq
    %v3708 = vshrl.u32 %v3707, 7
    %v3709 = vsub.s32 %v3706, %v3708
    %v3710 = vrot.slane %v3688, %v3709
    %v3712 = vunpack.c.l.s4 1966171168
    %v3713 = vunpack.c.0.s8 %v3712
    %v3714 = vlaneseq
    %v3715 = vshrl.u32 %v3714, 7
    %v3716 = vsub.s32 %v3713, %v3715
    %v3717 = vrot.slane %v3689, %v3716
    %v3718 = vcombine.high %v3696, %v3696
    %v3719 = vcombine.high %v3703, %v3703
    %v3720 = vcombine.high %v3710, %v3710
    %v3721 = vcombine.high %v3717, %v3717
    %v3730 = vmul.f32 %v3656, %v3696
    %v3731 = vmul.f32 %v3658, %v3710
    %v3732 = vmul.f32 %v3660, %v3718
    %v3733 = vmul.f32 %v3662, %v3720
    %v3734 = vmul.f32 %v3664, %v3703
    %v3735 = vmul.f32 %v3666, %v3717
    %v3736 = vmul.f32 %v3668, %v3719
    %v3737 = vmul.f32 %v3670, %v3721
    %v3746 = vrot.slane %v3341, 2
    %v3747 = vrot.slane %v3343, 2
    %v3748 = vrot.slane %v3345, 2
    %v3749 = vrot.slane %v3347, 2
    %v3750 = vrot.slane %v3349, 2
    %v3751 = vrot.slane %v3351, 2
    %v3752 = vrot.slane %v3353, 2
    %v3753 = vrot.slane %v3355, 2
    %v3762 = vadd.f32 %v3746, %v3730
    %v3763 = vadd.f32 %v3747, %v3731
    %v3764 = vadd.f32 %v3748, %v3732
    %v3765 = vadd.f32 %v3749, %v3733
    %v3766 = vadd.f32 %v3750, %v3734
    %v3767 = vadd.f32 %v3751, %v3735
    %v3768 = vadd.f32 %v3752, %v3736
    %v3769 = vadd.f32 %v3753, %v3737
    %v3770 = vtanh.pop %v3762
    %v3771 = vtanh.pop %v3763
    %v3772 = vtanh.pop %v3764
    %v3773 = vtanh.pop %v3765
    %v3774 = vtanh.pop %v3766
    %v3775 = vtanh.pop %v3767
    %v3776 = vtanh.pop %v3768
    %v3777 = vtanh.pop %v3769
    %v3786 = vrot.slane %v3656, 1
    %v3787 = vrot.slane %v3658, 1
    %v3788 = vrot.slane %v3660, 1
    %v3789 = vrot.slane %v3662, 1
    %v3790 = vrot.slane %v3664, 1
    %v3791 = vrot.slane %v3666, 1
    %v3792 = vrot.slane %v3668, 1
    %v3793 = vrot.slane %v3670, 1
    %v3802 = vsub.f32 1.0, %v3786
    %v3803 = vsub.f32 1.0, %v3787
    %v3804 = vsub.f32 1.0, %v3788
    %v3805 = vsub.f32 1.0, %v3789
    %v3806 = vsub.f32 1.0, %v3790
    %v3807 = vsub.f32 1.0, %v3791
    %v3808 = vsub.f32 1.0, %v3792
    %v3809 = vsub.f32 1.0, %v3793
    %v3810 = vmul.f32 %v3802, %v3770
    %v3811 = vmul.f32 %v3803, %v3771
    %v3812 = vmul.f32 %v3804, %v3772
    %v3813 = vmul.f32 %v3805, %v3773
    %v3814 = vmul.f32 %v3806, %v3774
    %v3815 = vmul.f32 %v3807, %v3775
    %v3816 = vmul.f32 %v3808, %v3776
    %v3817 = vmul.f32 %v3809, %v3777
    %v3818 = vmul.f32 %v3786, %v3332
    %v3819 = vmul.f32 %v3787, %v3333
    %v3820 = vmul.f32 %v3788, %v3334
    %v3821 = vmul.f32 %v3789, %v3335
    %v3822 = vmul.f32 %v3790, %v3336
    %v3823 = vmul.f32 %v3791, %v3337
    %v3824 = vmul.f32 %v3792, %v3338
    %v3825 = vmul.f32 %v3793, %v3339
    %v3826 = vadd.f32 %v3810, %v3818
    %v3827 = vadd.f32 %v3811, %v3819
    %v3828 = vadd.f32 %v3812, %v3820
    %v3829 = vadd.f32 %v3813, %v3821
    %v3830 = vadd.f32 %v3814, %v3822
    %v3831 = vadd.f32 %v3815, %v3823
    %v3832 = vadd.f32 %v3816, %v3824
    %v3833 = vadd.f32 %v3817, %v3825
    %s3834 = scalar_lea.vmem [#allocation2], 7
    %v3835 = vld [vmem:[%s3834] ss:$8 sm:$0x7]
    %s3836 = scalar_lea.vmem [#allocation2], 31
    %v3837 = vld [vmem:[%s3836] ss:$8 sm:$0x7]
    %s3838 = scalar_lea.vmem [#allocation2], 55
    %v3839 = vld [vmem:[%s3838] ss:$8 sm:$0x7]
    %s3840 = scalar_lea.vmem [#allocation2], 79
    %v3841 = vld [vmem:[%s3840] ss:$8 sm:$0x7]
    %s3842 = scalar_lea.vmem [#allocation2], 103
    %v3843 = vld [vmem:[%s3842] ss:$8 sm:$0x7]
    %s3844 = scalar_lea.vmem [#allocation2], 127
    %v3845 = vld [vmem:[%s3844] ss:$8 sm:$0x7]
    %s3846 = scalar_lea.vmem [#allocation2], 151
    %v3847 = vld [vmem:[%s3846] ss:$8 sm:$0x7]
    %s3848 = scalar_lea.vmem [#allocation2], 175
    %v3849 = vld [vmem:[%s3848] ss:$8 sm:$0x7]
    %v3858 = vcombine.low %v3826, %v3827
    %v3859 = vcombine.low %v3828, %v3829
    %v3860 = vcombine.low %v3830, %v3831
    %v3861 = vcombine.low %v3832, %v3833
    %v3863 = vunpack.c.l.s4 1966171168
    %v3864 = vunpack.c.0.s8 %v3863
    %v3865 = vlaneseq
    %v3866 = vshrl.u32 %v3865, 7
    %v3867 = vsub.s32 %v3864, %v3866
    %v3868 = vrot.slane %v3858, %v3867
    %v3870 = vunpack.c.l.s4 1966171168
    %v3871 = vunpack.c.0.s8 %v3870
    %v3872 = vlaneseq
    %v3873 = vshrl.u32 %v3872, 7
    %v3874 = vsub.s32 %v3871, %v3873
    %v3875 = vrot.slane %v3859, %v3874
    %v3877 = vunpack.c.l.s4 1966171168
    %v3878 = vunpack.c.0.s8 %v3877
    %v3879 = vlaneseq
    %v3880 = vshrl.u32 %v3879, 7
    %v3881 = vsub.s32 %v3878, %v3880
    %v3882 = vrot.slane %v3860, %v3881
    %v3884 = vunpack.c.l.s4 1966171168
    %v3885 = vunpack.c.0.s8 %v3884
    %v3886 = vlaneseq
    %v3887 = vshrl.u32 %v3886, 7
    %v3888 = vsub.s32 %v3885, %v3887
    %v3889 = vrot.slane %v3861, %v3888
    %v3890 = vcombine.low %v3868, %v3875
    %v3891 = vcombine.low %v3882, %v3889
    %v3893 = vunpack.c.l.s4 1966171168
    %v3894 = vunpack.c.0.s8 %v3893
    %v3895 = vlaneseq
    %v3896 = vshrl.u32 %v3895, 7
    %v3897 = vsub.s32 %v3894, %v3896
    %v3898 = vrot.slane %v3890, %v3897
    %v3900 = vunpack.c.l.s4 1966171168
    %v3901 = vunpack.c.0.s8 %v3900
    %v3902 = vlaneseq
    %v3903 = vshrl.u32 %v3902, 7
    %v3904 = vsub.s32 %v3901, %v3903
    %v3905 = vrot.slane %v3891, %v3904
    %v3906 = vcombine.low %v3898, %v3905
    %3908 = vmatprep.subr.mxu0 %v381
    %3909 = vmatpush1.msra.mxu0 %v380
    %3910 = vmatprep.subr.mxu0 %v384
    %3911 = vmatpush1.msra.mxu0 %v383
    %3912 = vmatprep.subr.mxu0 %v387
    %3913 = vmatpush1.msra.mxu0 %v386
    %3914 = vmatprep.subr.mxu0 %v390
    %3915 = vmatpush1.msra.mxu0 %v389
    %3916 = vmatprep.subr.mxu0 %v393
    %3917 = vmatpush1.msra.mxu0 %v392
    %3918 = vmatprep.subr.mxu0 %v396
    %3919 = vmatpush1.msra.mxu0 %v395
    %3920 = vmatprep.subr.mxu0 %v399
    %3921 = vmatpush1.msra.mxu0 %v398
    %3922 = vmatprep.subr.mxu0 %v402
    %3923 = vmatpush1.msra.mxu0 %v401
    %3924 = vmatprep.subr.mxu0 %v405
    %3925 = vmatpush1.msra.mxu0 %v404
    %3926 = vmatprep.subr.mxu0 %v408
    %3927 = vmatpush1.msra.mxu0 %v407
    %3928 = vmatprep.subr.mxu0 %v411
    %3929 = vmatpush1.msra.mxu0 %v410
    %3930 = vmatprep.subr.mxu0 %v414
    %3931 = vmatpush1.msra.mxu0 %v413
    %3932 = vmatprep.subr.mxu0 %v417
    %3933 = vmatpush1.msra.mxu0 %v416
    %3934 = vmatprep.subr.mxu0 %v420
    %3935 = vmatpush1.msra.mxu0 %v419
    %3936 = vmatprep.subr.mxu0 %v423
    %3937 = vmatpush1.msra.mxu0 %v422
    %3938 = vmatprep.subr.mxu0 %v426
    %3939 = vmatpush1.msra.mxu0 %v425
    %3940 = vmatprep.subr.mxu0 0.0
    %3941 = vmatpush1.msra.mxu0 0.0
    %3942 = vmatprep.subr.mxu0 0.0
    %3943 = vmatpush1.msra.mxu0 0.0
    %3944 = vmatprep.subr.mxu0 0.0
    %3945 = vmatpush1.msra.mxu0 0.0
    %3946 = vmatprep.subr.mxu0 0.0
    %3947 = vmatpush1.msra.mxu0 0.0
    %3948 = vmatprep.subr.mxu0 0.0
    %3949 = vmatpush1.msra.mxu0 0.0
    %3950 = vmatprep.subr.mxu0 0.0
    %3951 = vmatpush1.msra.mxu0 0.0
    %3952 = vmatprep.subr.mxu0 0.0
    %3953 = vmatpush1.msra.mxu0 0.0
    %3954 = vmatprep.subr.mxu0 0.0
    %3955 = vmatpush1.msra.mxu0 0.0
    %3956 = vmatprep.subr.mxu0 0.0
    %3957 = vmatpush1.msra.mxu0 0.0
    %3958 = vmatprep.subr.mxu0 0.0
    %3959 = vmatpush1.msra.mxu0 0.0
    %3960 = vmatprep.subr.mxu0 0.0
    %3961 = vmatpush1.msra.mxu0 0.0
    %3962 = vmatprep.subr.mxu0 0.0
    %3963 = vmatpush1.msra.mxu0 0.0
    %3964 = vmatprep.subr.mxu0 0.0
    %3965 = vmatpush1.msra.mxu0 0.0
    %3966 = vmatprep.subr.mxu0 0.0
    %3967 = vmatpush1.msra.mxu0 0.0
    %3968 = vmatprep.subr.mxu0 0.0
    %3969 = vmatpush1.msra.mxu0 0.0
    %3970 = vmatprep.subr.mxu0 0.0
    %3971 = vmatpush1.msra.mxu0 0.0
    %3972 = vmatprep.mubr.f32.mxu0 0.0
    %3973 = vmatmul.mubr.f32.gmra.mrb[0].mxu0 %v3906
    %v3974 = vpop.f32.mrb[0].mxu0
    %v3975 = vadd.f32 0.0, %v3974
    %v3976 = vpop.f32.mrb[0].mxu0
    %v3977 = vadd.f32 0.0, %v3976
    %3978 = vdwg.mxu0
    %3979 = vmatprep.subr.mxu0 0.0
    %3980 = vmatpush1.msra.mxu0 %v382
    %3981 = vmatprep.subr.mxu0 0.0
    %3982 = vmatpush1.msra.mxu0 %v385
    %3983 = vmatprep.subr.mxu0 0.0
    %3984 = vmatpush1.msra.mxu0 %v388
    %3985 = vmatprep.subr.mxu0 0.0
    %3986 = vmatpush1.msra.mxu0 %v391
    %3987 = vmatprep.subr.mxu0 0.0
    %3988 = vmatpush1.msra.mxu0 %v394
    %3989 = vmatprep.subr.mxu0 0.0
    %3990 = vmatpush1.msra.mxu0 %v397
    %3991 = vmatprep.subr.mxu0 0.0
    %3992 = vmatpush1.msra.mxu0 %v400
    %3993 = vmatprep.subr.mxu0 0.0
    %3994 = vmatpush1.msra.mxu0 %v403
    %3995 = vmatprep.subr.mxu0 0.0
    %3996 = vmatpush1.msra.mxu0 %v406
    %3997 = vmatprep.subr.mxu0 0.0
    %3998 = vmatpush1.msra.mxu0 %v409
    %3999 = vmatprep.subr.mxu0 0.0
    %4000 = vmatpush1.msra.mxu0 %v412
    %4001 = vmatprep.subr.mxu0 0.0
    %4002 = vmatpush1.msra.mxu0 %v415
    %4003 = vmatprep.subr.mxu0 0.0
    %4004 = vmatpush1.msra.mxu0 %v418
    %4005 = vmatprep.subr.mxu0 0.0
    %4006 = vmatpush1.msra.mxu0 %v421
    %4007 = vmatprep.subr.mxu0 0.0
    %4008 = vmatpush1.msra.mxu0 %v424
    %4009 = vmatprep.subr.mxu0 0.0
    %4010 = vmatpush1.msra.mxu0 %v427
    %4011 = vmatprep.subr.mxu0 0.0
    %4012 = vmatpush1.msra.mxu0 0.0
    %4013 = vmatprep.subr.mxu0 0.0
    %4014 = vmatpush1.msra.mxu0 0.0
    %4015 = vmatprep.subr.mxu0 0.0
    %4016 = vmatpush1.msra.mxu0 0.0
    %4017 = vmatprep.subr.mxu0 0.0
    %4018 = vmatpush1.msra.mxu0 0.0
    %4019 = vmatprep.subr.mxu0 0.0
    %4020 = vmatpush1.msra.mxu0 0.0
    %4021 = vmatprep.subr.mxu0 0.0
    %4022 = vmatpush1.msra.mxu0 0.0
    %4023 = vmatprep.subr.mxu0 0.0
    %4024 = vmatpush1.msra.mxu0 0.0
    %4025 = vmatprep.subr.mxu0 0.0
    %4026 = vmatpush1.msra.mxu0 0.0
    %4027 = vmatprep.subr.mxu0 0.0
    %4028 = vmatpush1.msra.mxu0 0.0
    %4029 = vmatprep.subr.mxu0 0.0
    %4030 = vmatpush1.msra.mxu0 0.0
    %4031 = vmatprep.subr.mxu0 0.0
    %4032 = vmatpush1.msra.mxu0 0.0
    %4033 = vmatprep.subr.mxu0 0.0
    %4034 = vmatpush1.msra.mxu0 0.0
    %4035 = vmatprep.subr.mxu0 0.0
    %4036 = vmatpush1.msra.mxu0 0.0
    %4037 = vmatprep.subr.mxu0 0.0
    %4038 = vmatpush1.msra.mxu0 0.0
    %4039 = vmatprep.subr.mxu0 0.0
    %4040 = vmatpush1.msra.mxu0 0.0
    %4041 = vmatprep.subr.mxu0 0.0
    %4042 = vmatpush1.msra.mxu0 0.0
    %4043 = vmatprep.mubr.f32.mxu0 0.0
    %4044 = vmatmul.mubr.f32.gmra.mrb[0].mxu0 %v3906
    %v4045 = vpop.f32.mrb[0].mxu0
    %v4046 = vadd.f32 0.0, %v4045
    %v4047 = vpop.f32.mrb[0].mxu0
    %4048 = vdwg.mxu0
    %v4051 = vcombine.low %v3975, %v3977
    %v4052 = vcombine.high %v3975, %v3977
    %v4054 = vunpack.c.l.s4 1966171168
    %v4055 = vunpack.c.0.s8 %v4054
    %v4056 = vlaneseq
    %v4057 = vshrl.u32 %v4056, 7
    %v4058 = vsub.s32 %v4055, %v4057
    %v4059 = vrot.slane %v4051, %v4058
    %v4061 = vunpack.c.l.s4 1966171168
    %v4062 = vunpack.c.0.s8 %v4061
    %v4063 = vlaneseq
    %v4064 = vshrl.u32 %v4063, 7
    %v4065 = vsub.s32 %v4062, %v4064
    %v4066 = vrot.slane %v4052, %v4065
    %v4067 = vcombine.high %v4059, %v4059
    %v4068 = vcombine.high %v4066, %v4066
    %v4070 = vunpack.c.l.s4 1966171168
    %v4071 = vunpack.c.0.s8 %v4070
    %v4072 = vlaneseq
    %v4073 = vshrl.u32 %v4072, 7
    %v4074 = vsub.s32 %v4071, %v4073
    %v4075 = vrot.slane %v4059, %v4074
    %v4077 = vunpack.c.l.s4 1966171168
    %v4078 = vunpack.c.0.s8 %v4077
    %v4079 = vlaneseq
    %v4080 = vshrl.u32 %v4079, 7
    %v4081 = vsub.s32 %v4078, %v4080
    %v4082 = vrot.slane %v4066, %v4081
    %v4084 = vunpack.c.l.s4 1966171168
    %v4085 = vunpack.c.0.s8 %v4084
    %v4086 = vlaneseq
    %v4087 = vshrl.u32 %v4086, 7
    %v4088 = vsub.s32 %v4085, %v4087
    %v4089 = vrot.slane %v4067, %v4088
    %v4091 = vunpack.c.l.s4 1966171168
    %v4092 = vunpack.c.0.s8 %v4091
    %v4093 = vlaneseq
    %v4094 = vshrl.u32 %v4093, 7
    %v4095 = vsub.s32 %v4092, %v4094
    %v4096 = vrot.slane %v4068, %v4095
    %v4097 = vcombine.high %v4075, %v4075
    %v4098 = vcombine.high %v4082, %v4082
    %v4099 = vcombine.high %v4089, %v4089
    %v4100 = vcombine.high %v4096, %v4096
    %v4109 = vadd.f32 %v3835, %v4075
    %v4110 = vadd.f32 %v3837, %v4089
    %v4111 = vadd.f32 %v3839, %v4097
    %v4112 = vadd.f32 %v3841, %v4099
    %v4113 = vadd.f32 %v3843, %v4082
    %v4114 = vadd.f32 %v3845, %v4096
    %v4115 = vadd.f32 %v3847, %v4098
    %v4116 = vadd.f32 %v3849, %v4100
    %v4117 = vxor.u32 %v4109, 2147483648
    %v4118 = vxor.u32 %v4110, 2147483648
    %v4119 = vxor.u32 %v4111, 2147483648
    %v4120 = vxor.u32 %v4112, 2147483648
    %v4121 = vxor.u32 %v4113, 2147483648
    %v4122 = vxor.u32 %v4114, 2147483648
    %v4123 = vxor.u32 %v4115, 2147483648
    %v4124 = vxor.u32 %v4116, 2147483648
    %v4125 = vmul.f32 %v4117, 1.442695
    %v4126 = vpow.pop %v4125
    %v4127 = vmul.f32 %v4118, 1.442695
    %v4128 = vpow.pop %v4127
    %v4129 = vmul.f32 %v4119, 1.442695
    %v4130 = vpow.pop %v4129
    %v4131 = vmul.f32 %v4120, 1.442695
    %v4132 = vpow.pop %v4131
    %v4133 = vmul.f32 %v4121, 1.442695
    %v4134 = vpow.pop %v4133
    %v4135 = vmul.f32 %v4122, 1.442695
    %v4136 = vpow.pop %v4135
    %v4137 = vmul.f32 %v4123, 1.442695
    %v4138 = vpow.pop %v4137
    %v4139 = vmul.f32 %v4124, 1.442695
    %v4140 = vpow.pop %v4139
    %v4141 = vadd.f32 %v4126, 1.0
    %v4142 = vadd.f32 %v4128, 1.0
    %v4143 = vadd.f32 %v4130, 1.0
    %v4144 = vadd.f32 %v4132, 1.0
    %v4145 = vadd.f32 %v4134, 1.0
    %v4146 = vadd.f32 %v4136, 1.0
    %v4147 = vadd.f32 %v4138, 1.0
    %v4148 = vadd.f32 %v4140, 1.0
    %v4149 = vrcp.pop %v4141
    %v4150 = vmul.f32 1.0, %v4149
    %v4151 = vrcp.pop %v4142
    %v4152 = vmul.f32 1.0, %v4151
    %v4153 = vrcp.pop %v4143
    %v4154 = vmul.f32 1.0, %v4153
    %v4155 = vrcp.pop %v4144
    %v4156 = vmul.f32 1.0, %v4155
    %v4157 = vrcp.pop %v4145
    %v4158 = vmul.f32 1.0, %v4157
    %v4159 = vrcp.pop %v4146
    %v4160 = vmul.f32 1.0, %v4159
    %v4161 = vrcp.pop %v4147
    %v4162 = vmul.f32 1.0, %v4161
    %v4163 = vrcp.pop %v4148
    %v4164 = vmul.f32 1.0, %v4163
    %v4165 = vadd.f32 %v4046, %v433
    %v4167 = vcombine.high %v4165, %v4165
    %v4169 = vunpack.c.l.s4 1966171168
    %v4170 = vunpack.c.0.s8 %v4169
    %v4171 = vlaneseq
    %v4172 = vshrl.u32 %v4171, 7
    %v4173 = vsub.s32 %v4170, %v4172
    %v4174 = vrot.slane %v4165, %v4173
    %v4176 = vunpack.c.l.s4 1966171168
    %v4177 = vunpack.c.0.s8 %v4176
    %v4178 = vlaneseq
    %v4179 = vshrl.u32 %v4178, 7
    %v4180 = vsub.s32 %v4177, %v4179
    %v4181 = vrot.slane %v4167, %v4180
    %v4182 = vcombine.high %v4174, %v4174
    %v4183 = vcombine.high %v4181, %v4181
    %v4185 = vunpack.c.l.s4 1966171168
    %v4186 = vunpack.c.0.s8 %v4185
    %v4187 = vlaneseq
    %v4188 = vshrl.u32 %v4187, 7
    %v4189 = vsub.s32 %v4186, %v4188
    %v4190 = vrot.slane %v4174, %v4189
    %v4192 = vunpack.c.l.s4 1966171168
    %v4193 = vunpack.c.0.s8 %v4192
    %v4194 = vlaneseq
    %v4195 = vshrl.u32 %v4194, 7
    %v4196 = vsub.s32 %v4193, %v4195
    %v4197 = vrot.slane %v4181, %v4196
    %v4199 = vunpack.c.l.s4 1966171168
    %v4200 = vunpack.c.0.s8 %v4199
    %v4201 = vlaneseq
    %v4202 = vshrl.u32 %v4201, 7
    %v4203 = vsub.s32 %v4200, %v4202
    %v4204 = vrot.slane %v4182, %v4203
    %v4206 = vunpack.c.l.s4 1966171168
    %v4207 = vunpack.c.0.s8 %v4206
    %v4208 = vlaneseq
    %v4209 = vshrl.u32 %v4208, 7
    %v4210 = vsub.s32 %v4207, %v4209
    %v4211 = vrot.slane %v4183, %v4210
    %v4212 = vcombine.high %v4190, %v4190
    %v4213 = vcombine.high %v4197, %v4197
    %v4214 = vcombine.high %v4204, %v4204
    %v4215 = vcombine.high %v4211, %v4211
    %v4224 = vmul.f32 %v4150, %v4190
    %v4225 = vmul.f32 %v4152, %v4204
    %v4226 = vmul.f32 %v4154, %v4212
    %v4227 = vmul.f32 %v4156, %v4214
    %v4228 = vmul.f32 %v4158, %v4197
    %v4229 = vmul.f32 %v4160, %v4211
    %v4230 = vmul.f32 %v4162, %v4213
    %v4231 = vmul.f32 %v4164, %v4215
    %v4240 = vrot.slane %v3835, 2
    %v4241 = vrot.slane %v3837, 2
    %v4242 = vrot.slane %v3839, 2
    %v4243 = vrot.slane %v3841, 2
    %v4244 = vrot.slane %v3843, 2
    %v4245 = vrot.slane %v3845, 2
    %v4246 = vrot.slane %v3847, 2
    %v4247 = vrot.slane %v3849, 2
    %v4256 = vadd.f32 %v4240, %v4224
    %v4257 = vadd.f32 %v4241, %v4225
    %v4258 = vadd.f32 %v4242, %v4226
    %v4259 = vadd.f32 %v4243, %v4227
    %v4260 = vadd.f32 %v4244, %v4228
    %v4261 = vadd.f32 %v4245, %v4229
    %v4262 = vadd.f32 %v4246, %v4230
    %v4263 = vadd.f32 %v4247, %v4231
    %v4264 = vtanh.pop %v4256
    %v4265 = vtanh.pop %v4257
    %v4266 = vtanh.pop %v4258
    %v4267 = vtanh.pop %v4259
    %v4268 = vtanh.pop %v4260
    %v4269 = vtanh.pop %v4261
    %v4270 = vtanh.pop %v4262
    %v4271 = vtanh.pop %v4263
    %v4280 = vrot.slane %v4150, 1
    %v4281 = vrot.slane %v4152, 1
    %v4282 = vrot.slane %v4154, 1
    %v4283 = vrot.slane %v4156, 1
    %v4284 = vrot.slane %v4158, 1
    %v4285 = vrot.slane %v4160, 1
    %v4286 = vrot.slane %v4162, 1
    %v4287 = vrot.slane %v4164, 1
    %v4296 = vsub.f32 1.0, %v4280
    %v4297 = vsub.f32 1.0, %v4281
    %v4298 = vsub.f32 1.0, %v4282
    %v4299 = vsub.f32 1.0, %v4283
    %v4300 = vsub.f32 1.0, %v4284
    %v4301 = vsub.f32 1.0, %v4285
    %v4302 = vsub.f32 1.0, %v4286
    %v4303 = vsub.f32 1.0, %v4287
    %v4304 = vmul.f32 %v4296, %v4264
    %v4305 = vmul.f32 %v4297, %v4265
    %v4306 = vmul.f32 %v4298, %v4266
    %v4307 = vmul.f32 %v4299, %v4267
    %v4308 = vmul.f32 %v4300, %v4268
    %v4309 = vmul.f32 %v4301, %v4269
    %v4310 = vmul.f32 %v4302, %v4270
    %v4311 = vmul.f32 %v4303, %v4271
    %v4312 = vmul.f32 %v4280, %v3826
    %v4313 = vmul.f32 %v4281, %v3827
    %v4314 = vmul.f32 %v4282, %v3828
    %v4315 = vmul.f32 %v4283, %v3829
    %v4316 = vmul.f32 %v4284, %v3830
    %v4317 = vmul.f32 %v4285, %v3831
    %v4318 = vmul.f32 %v4286, %v3832
    %v4319 = vmul.f32 %v4287, %v3833
    %v4320 = vadd.f32 %v4304, %v4312
    %v4321 = vadd.f32 %v4305, %v4313
    %v4322 = vadd.f32 %v4306, %v4314
    %v4323 = vadd.f32 %v4307, %v4315
    %v4324 = vadd.f32 %v4308, %v4316
    %v4325 = vadd.f32 %v4309, %v4317
    %v4326 = vadd.f32 %v4310, %v4318
    %v4327 = vadd.f32 %v4311, %v4319
    %v4328 = vld [vmem:[#allocation9] sm:$0xff]
    %v4329 = vld [vmem:[#allocation9 + $0x8] sm:$0xff]
    %v4330 = vld [vmem:[#allocation9 + $0x10] sm:$0xff]
    %v4331 = vld [vmem:[#allocation9 + $0x18] sm:$0xff]
    %v4332 = vld [vmem:[#allocation9 + $0x20] sm:$0xff]
    %v4333 = vld [vmem:[#allocation9 + $0x28] sm:$0xff]
    %v4334 = vld [vmem:[#allocation9 + $0x30] sm:$0xff]
    %v4335 = vld [vmem:[#allocation9 + $0x38] sm:$0xff]
    %v4336 = vld [vmem:[#allocation9 + $0x40] sm:$0xff]
    %v4337 = vld [vmem:[#allocation9 + $0x48] sm:$0xff]
    %v4338 = vld [vmem:[#allocation9 + $0x50] sm:$0xff]
    %v4339 = vld [vmem:[#allocation9 + $0x58] sm:$0xff]
    %v4340 = vld [vmem:[#allocation9 + $0x60] sm:$0xff]
    %v4341 = vld [vmem:[#allocation9 + $0x68] sm:$0xff]
    %v4342 = vld [vmem:[#allocation9 + $0x70] sm:$0xff]
    %v4343 = vld [vmem:[#allocation9 + $0x78] sm:$0xff]
    %v4344 = vld [vmem:[%s6] sm:$0x1]
    %v4346 = vlaneseq
    %v4347 = vshrl.u32 %v4346, 7
    %v4348 = vsub.s32 0, %v4347
    %v4349 = vrot.slane %v4344, %v4348
    %v4359 = vcombine.low %v4320, %v4321
    %v4360 = vcombine.low %v4322, %v4323
    %v4361 = vcombine.low %v4324, %v4325
    %v4362 = vcombine.low %v4326, %v4327
    %v4364 = vunpack.c.l.s4 1966171168
    %v4365 = vunpack.c.0.s8 %v4364
    %v4366 = vlaneseq
    %v4367 = vshrl.u32 %v4366, 7
    %v4368 = vsub.s32 %v4365, %v4367
    %v4369 = vrot.slane %v4359, %v4368
    %v4371 = vunpack.c.l.s4 1966171168
    %v4372 = vunpack.c.0.s8 %v4371
    %v4373 = vlaneseq
    %v4374 = vshrl.u32 %v4373, 7
    %v4375 = vsub.s32 %v4372, %v4374
    %v4376 = vrot.slane %v4360, %v4375
    %v4378 = vunpack.c.l.s4 1966171168
    %v4379 = vunpack.c.0.s8 %v4378
    %v4380 = vlaneseq
    %v4381 = vshrl.u32 %v4380, 7
    %v4382 = vsub.s32 %v4379, %v4381
    %v4383 = vrot.slane %v4361, %v4382
    %v4385 = vunpack.c.l.s4 1966171168
    %v4386 = vunpack.c.0.s8 %v4385
    %v4387 = vlaneseq
    %v4388 = vshrl.u32 %v4387, 7
    %v4389 = vsub.s32 %v4386, %v4388
    %v4390 = vrot.slane %v4362, %v4389
    %v4391 = vcombine.low %v4369, %v4376
    %v4392 = vcombine.low %v4383, %v4390
    %v4394 = vunpack.c.l.s4 1966171168
    %v4395 = vunpack.c.0.s8 %v4394
    %v4396 = vlaneseq
    %v4397 = vshrl.u32 %v4396, 7
    %v4398 = vsub.s32 %v4395, %v4397
    %v4399 = vrot.slane %v4391, %v4398
    %v4401 = vunpack.c.l.s4 1966171168
    %v4402 = vunpack.c.0.s8 %v4401
    %v4403 = vlaneseq
    %v4404 = vshrl.u32 %v4403, 7
    %v4405 = vsub.s32 %v4402, %v4404
    %v4406 = vrot.slane %v4392, %v4405
    %v4407 = vcombine.low %v4399, %v4406
    %4409 = vmatprep.subr.mxu0 0.0
    %4410 = vmatpush1.msra.mxu0 %v4328
    %4411 = vmatprep.subr.mxu0 0.0
    %4412 = vmatpush1.msra.mxu0 %v4329
    %4413 = vmatprep.subr.mxu0 0.0
    %4414 = vmatpush1.msra.mxu0 %v4330
    %4415 = vmatprep.subr.mxu0 0.0
    %4416 = vmatpush1.msra.mxu0 %v4331
    %4417 = vmatprep.subr.mxu0 0.0
    %4418 = vmatpush1.msra.mxu0 %v4332
    %4419 = vmatprep.subr.mxu0 0.0
    %4420 = vmatpush1.msra.mxu0 %v4333
    %4421 = vmatprep.subr.mxu0 0.0
    %4422 = vmatpush1.msra.mxu0 %v4334
    %4423 = vmatprep.subr.mxu0 0.0
    %4424 = vmatpush1.msra.mxu0 %v4335
    %4425 = vmatprep.subr.mxu0 0.0
    %4426 = vmatpush1.msra.mxu0 %v4336
    %4427 = vmatprep.subr.mxu0 0.0
    %4428 = vmatpush1.msra.mxu0 %v4337
    %4429 = vmatprep.subr.mxu0 0.0
    %4430 = vmatpush1.msra.mxu0 %v4338
    %4431 = vmatprep.subr.mxu0 0.0
    %4432 = vmatpush1.msra.mxu0 %v4339
    %4433 = vmatprep.subr.mxu0 0.0
    %4434 = vmatpush1.msra.mxu0 %v4340
    %4435 = vmatprep.subr.mxu0 0.0
    %4436 = vmatpush1.msra.mxu0 %v4341
    %4437 = vmatprep.subr.mxu0 0.0
    %4438 = vmatpush1.msra.mxu0 %v4342
    %4439 = vmatprep.subr.mxu0 0.0
    %4440 = vmatpush1.msra.mxu0 %v4343
    %4441 = vmatprep.subr.mxu0 0.0
    %4442 = vmatpush1.msra.mxu0 0.0
    %4443 = vmatprep.subr.mxu0 0.0
    %4444 = vmatpush1.msra.mxu0 0.0
    %4445 = vmatprep.subr.mxu0 0.0
    %4446 = vmatpush1.msra.mxu0 0.0
    %4447 = vmatprep.subr.mxu0 0.0
    %4448 = vmatpush1.msra.mxu0 0.0
    %4449 = vmatprep.subr.mxu0 0.0
    %4450 = vmatpush1.msra.mxu0 0.0
    %4451 = vmatprep.subr.mxu0 0.0
    %4452 = vmatpush1.msra.mxu0 0.0
    %4453 = vmatprep.subr.mxu0 0.0
    %4454 = vmatpush1.msra.mxu0 0.0
    %4455 = vmatprep.subr.mxu0 0.0
    %4456 = vmatpush1.msra.mxu0 0.0
    %4457 = vmatprep.subr.mxu0 0.0
    %4458 = vmatpush1.msra.mxu0 0.0
    %4459 = vmatprep.subr.mxu0 0.0
    %4460 = vmatpush1.msra.mxu0 0.0
    %4461 = vmatprep.subr.mxu0 0.0
    %4462 = vmatpush1.msra.mxu0 0.0
    %4463 = vmatprep.subr.mxu0 0.0
    %4464 = vmatpush1.msra.mxu0 0.0
    %4465 = vmatprep.subr.mxu0 0.0
    %4466 = vmatpush1.msra.mxu0 0.0
    %4467 = vmatprep.subr.mxu0 0.0
    %4468 = vmatpush1.msra.mxu0 0.0
    %4469 = vmatprep.subr.mxu0 0.0
    %4470 = vmatpush1.msra.mxu0 0.0
    %4471 = vmatprep.subr.mxu0 0.0
    %4472 = vmatpush1.msra.mxu0 0.0
    %4473 = vmatprep.mubr.f32.mxu0 0.0
    %4474 = vmatmul.mubr.f32.gmra.mrb[0].mxu0 %v4407
    %v4475 = vpop.f32.mrb[0].mxu0
    %v4476 = vadd.f32 %v4349, %v4475
    %v4477 = vpop.f32.mrb[0].mxu0
    %4478 = vdwg.mxu0
    %v4479 = vmax.f32 %v4476, 0.0
    %4480 = vst [vmem:[#allocation11] sm:$0xff] %v4479
    // Predicated region
    $region46: #{tpu_custom_call.1} parent=1 // pred_check
      _
    $region47: #{tpu_custom_call.1} parent=1 // pred_check_branch
      %4482 = sbr.rel (0) target = $region49
    $region48: #{tpu_custom_call.1} parent=1 // pred_region
      %s4484 = ssub.s32 128, 32
      %4485 = vsyncadd [#allocation5], %s4484
      %s4486 = sshll.u32 [#allocation11], 4
      %s4487 = int_to_ptr.vmem [resolvable:$true] %s4486
      %4492 = dma.vmem_to_hbm [thread:$0]  %s4487, 32, %s7, [#allocation5], 32, 32, 2
    $region49: #{tpu_custom_call.1} parent=1 // pred_fallthru
      _
    // Predicated region
    $region50: #{tpu_custom_call.1} parent=1 // pred_check
      _
    $region51: #{tpu_custom_call.1} parent=1 // pred_check_branch
      %4494 = sbr.rel (0) target = $region53
    $region52: #{tpu_custom_call.1} parent=1 // pred_region
      %4495 = dma.done [#allocation5], 128
    $region53: #{tpu_custom_call.1} parent=1 // pred_fallthru
      _
    %4496 = vsyncpa [#allocation4], 1
    %4497 = vsyncpa [#allocation7], 1
    %4498 = vsyncpa [#allocation10], 1
    %4499 = vsyncpa [#allocation5], 1

</llo_original>
